<compile_context>
chip_gen: v7x
topology: tpu7x:2x2x1
jax: 0.10.0
libtpu: 0.0.40
codegen_flags: <defaults>
</compile_context>

<pallas_src>
import functools

import jax
import jax.numpy as jnp
import numpy as np
from jax.experimental import pallas as pl
from jax.experimental.pallas import tpu as pltpu


_NEG_INF = -1e9
_SUBLANE = 8


def _window_attention_kernel(*refs, num_heads, scale, nW, has_mask):
    """One grid step processes BW windows at once (x block is (BW, N, C))."""
    if has_mask:
        mask_ref, x_ref, wqkv_ref, bqkv_ref, wproj_ref, bproj_ref, o_ref = refs
    else:
        x_ref, wqkv_ref, bqkv_ref, wproj_ref, bproj_ref, o_ref = refs

    BW, N, C = x_ref.shape
    D = C // num_heads
    M = BW * N
    # MXU operand dtype: bf16 activations stay bf16 (fast MXU path); f32 stays
    # f32. Accumulation is always f32 via preferred_element_type.
    mxu_dtype = x_ref.dtype

    # (BW, N, C) -> (BW*N, C): leading-dim collapse only (lane dim untouched).
    x2 = x_ref[...].reshape(M, C)

    # Fused qkv projection for all BW windows at once: (M, 3C), f32 accumulation.
    qkv = jnp.dot(x2, wqkv_ref[...],
                  preferred_element_type=jnp.float32) + bqkv_ref[0]

    if has_mask:
        # Hoisted out of the head loop (JAX does not CSE broadcast_in_dim).
        # Window index of window j in this step is j % nW (BW % nW == 0).
        # Mask stays f32 (small, resident, single-buffered).
        mask_full = jnp.broadcast_to(
            mask_ref[...][None], (BW // nW, nW, N, N)).reshape(BW, N, N)

    head_outs = []
    for h in range(num_heads):                            # static, fully unrolled
        # Scale q once (M*D mults) instead of scaling the (N, N) scores, and
        # cast MXU operands back to the model dtype after the f32 qkv matmul.
        # TODO(synk): head slices start at D-aligned (not 128-aligned) lane
        # offsets; for large C a host-side column permutation of wqkv (and the
        # matching concat layout) would make them lane-aligned.
        q = (qkv[:, h * D:(h + 1) * D] * scale).astype(mxu_dtype)
        k = qkv[:, C + h * D:C + (h + 1) * D].astype(mxu_dtype)
        v = qkv[:, 2 * C + h * D:2 * C + (h + 1) * D].astype(mxu_dtype)
        qb = q.reshape(BW, N, D)                          # leading-dim split only
        kb = k.reshape(BW, N, D)
        vb = v.reshape(BW, N, D)

        # Batched over BW windows, contracting the head dim — no transpose.
        attn = jnp.einsum("bnd,bmd->bnm", qb, kb,
                          preferred_element_type=jnp.float32)     # (BW, N, N) f32
        if has_mask:
            attn = attn + mask_full
        attn = attn - jnp.max(attn, axis=-1, keepdims=True)
        p = jnp.exp(attn)
        # Exact reciprocal: off the MXU critical path, keeps cascade numerics tight.
        p = p * pl.reciprocal(jnp.sum(p, axis=-1, keepdims=True), approx=False)

        ob = jnp.einsum("bnm,bmd->bnd", p.astype(mxu_dtype), vb,
                        preferred_element_type=jnp.float32)       # (BW, N, D)
        head_outs.append(ob.reshape(M, D).astype(mxu_dtype))

    # Concatenate heads once (H cheap lane-offset stores, hides under MXU) and
    # run a SINGLE K=C projection matmul instead of H narrow K=D folds.
    concat = jnp.concatenate(head_outs, axis=-1)                  # (M, C)
    out = jnp.dot(concat, wproj_ref[...],
                  preferred_element_type=jnp.float32) + bproj_ref[0]
    o_ref[...] = out.reshape(BW, N, C).astype(o_ref.dtype)


def _vmem_budget_bytes():
    """Generation-aware usable VMEM budget (leaves compiler headroom)."""
    cap = None
    try:
        cap = getattr(pltpu.get_tpu_info(), "vmem_capacity_bytes", None)
    except Exception:
        cap = None
    if cap is None:
        cap = 128 * 2 ** 20            # v5e / v6e physical; conservative default
    # ~70% of physical (so ~44 MiB on v7x's 64 MiB), hard-capped at 100 MiB.
    return int(min(int(0.70 * cap), 100 * 2 ** 20))


def _choose_block_windows(B, N, nW, max_rows, target_rows=512, min_steps=2):
    """BW: divisor of B, multiple of nW, >=min_steps grid steps if possible,
    BW*N <= max_rows (VMEM fit), targeting BW*N >= target_rows."""
    cands = [bw for bw in range(nW, B + 1, nW) if B % bw == 0]
    fit = [bw for bw in cands if bw * N <= max_rows] or [min(cands)]
    multi = [bw for bw in fit if B // bw >= min_steps]
    pool = multi or fit
    good = sorted(bw for bw in pool if bw * N >= target_rows)
    return good[0] if good else max(pool)


def _resident_spec(shape, index_map):
    """Single-buffered BlockSpec for grid-invariant (resident) operands."""
    buffered = getattr(pl, "Buffered", None)
    if buffered is not None:
        try:
            return pl.BlockSpec(shape, index_map, pipeline_mode=buffered(1))
        except TypeError:
            pass
    return pl.BlockSpec(shape, index_map)


def window_attention(x, wqkv, bqkv, wproj, bproj, num_heads, mask=None,
                     block_windows=None):
    """Pallas implementation of WindowAttention.forward.

    x:     (B, N, C)
    wqkv:  (C, 3C)   bqkv: (3C,)
    wproj: (C, C)    bproj: (C,)
    mask:  optional (nW, N, N) additive mask; B must be divisible by nW.
    """
    B, N, C = x.shape
    if C % num_heads != 0:
        raise ValueError(f"C ({C}) must be divisible by num_heads ({num_heads}).")
    D = C // num_heads
    scale = float(D ** (-0.5))

    has_mask = mask is not None
    nW = int(mask.shape[0]) if has_mask else 1
    if has_mask and B % nW != 0:
        raise ValueError("B must be divisible by nW")

    # Pad N to a sublane-friendly multiple (Swin 7x7 -> N=49 pads to 56) so the
    # in-kernel reshapes / (BW,N,N) attention tiles stay relayout-free. Padded
    # key columns get -1e9 in the additive mask; padded query rows are sliced
    # away after the kernel.
    Np = ((N + _SUBLANE - 1) // _SUBLANE) * _SUBLANE
    pad = Np - N
    if pad > 0:
        x_in = jnp.pad(x, ((0, 0), (0, pad), (0, 0)))
        base = jnp.zeros((nW, Np, Np), jnp.float32)
        if has_mask:
            base = base.at[:, :N, :N].set(mask.astype(jnp.float32))
        mask_arr = base.at[:, :, N:].set(_NEG_INF)
        has_mask = True
    else:
        x_in = x
        mask_arr = mask.astype(jnp.float32) if has_mask else None   # keep f32

    itm = jnp.dtype(x.dtype).itemsize
    budget = _vmem_budget_bytes()
    weights_bytes = (C * 3 * C + C * C + 4 * C) * itm
    if has_mask:
        weights_bytes += nW * Np * Np * 4
    # Per-row bytes: x + out blocks (double-buffered) + f32 qkv / concat+proj /
    # attention intermediates.
    bytes_per_row = 4 * C * itm + 4 * (3 * C + 2 * C) + 4 * 3 * Np
    max_rows = max(Np, int((0.6 * budget - weights_bytes) // bytes_per_row))

    if block_windows is None:
        BW = _choose_block_windows(B, Np, nW, max_rows)
    else:
        BW = int(block_windows)
        if B % BW != 0 or BW % nW != 0:
            raise ValueError("block_windows must divide B and be a multiple of nW")

    bqkv2 = bqkv.reshape(1, 3 * C)
    bproj2 = bproj.reshape(1, C)

    kernel = functools.partial(_window_attention_kernel, num_heads=num_heads,
                               scale=scale, nW=nW, has_mask=has_mask)

    # VMEM limit derived from the actual block size (weights single-buffered).
    est = weights_bytes
    est += 2 * 2 * BW * Np * C * itm                                 # x + out blocks
    est += 4 * (BW * Np * 3 * C + 2 * BW * Np * C + 3 * BW * Np * Np)  # f32 interm.
    vmem_limit = int(min(budget, max(16 * 2 ** 20, 2 * est)))

    in_specs = []
    args = []
    if has_mask:
        in_specs.append(_resident_spec((nW, Np, Np), lambda g: (0, 0, 0)))
        args.append(mask_arr)
    in_specs += [
        pl.BlockSpec((BW, Np, C), lambda g: (g, 0, 0)),       # x, BW windows/step
        _resident_spec((C, 3 * C), lambda g: (0, 0)),          # qkv weight (resident)
        _resident_spec((1, 3 * C), lambda g: (0, 0)),          # qkv bias
        _resident_spec((C, C), lambda g: (0, 0)),              # proj weight
        _resident_spec((1, C), lambda g: (0, 0)),              # proj bias
    ]
    args += [x_in, wqkv, bqkv2, wproj, bproj2]

    out = pl.pallas_call(
        kernel,
        out_shape=jax.ShapeDtypeStruct((B, Np, C), x.dtype),
        grid_spec=pltpu.PrefetchScalarGridSpec(
            num_scalar_prefetch=0,
            grid=(B // BW,),
            in_specs=in_specs,
            out_specs=pl.BlockSpec((BW, Np, C), lambda g: (g, 0, 0)),
        ),
        compiler_params=pltpu.CompilerParams(
            dimension_semantics=("parallel",),
            vmem_limit_bytes=vmem_limit),
    )(*args)
    return out[:, :N, :] if pad > 0 else out


def window_attention_ref(x, wqkv, bqkv, wproj, bproj, num_heads, mask=None):
    """Pure-JAX reference mirroring the PyTorch forward."""
    B, N, C = x.shape
    D = C // num_heads
    scale = (C // num_heads) ** (-0.5)
    qkv = (x @ wqkv + bqkv).reshape(B, N, 3, num_heads, D).transpose(2, 0, 3, 1, 4)
    q, k, v = qkv[0], qkv[1], qkv[2]                     # (B, H, N, D)
    attn = jnp.einsum("bhnd,bhmd->bhnm", q, k) * scale
    if mask is not None:
        nW = mask.shape[0]
        attn = attn.reshape(B // nW, nW, num_heads, N, N) + mask[None, :, None]
        attn = attn.reshape(B, num_heads, N, N)
    attn = jax.nn.softmax(attn, axis=-1)
    out = jnp.einsum("bhnm,bhmd->bhnd", attn, v).transpose(0, 2, 1, 3).reshape(B, N, C)
    return out @ wproj + bproj


if __name__ == "__main__":
    # Small deterministic config: dim C=32, num_heads=4, window of N=8 tokens,
    # B=16 windows, nW=2 distinct shift masks.
    B, N, C, H = 16, 8, 32, 4
    nW = 2

    key = jax.random.PRNGKey(0)
    kx, kw1, kb1, kw2, kb2, km, kx2, km2 = jax.random.split(key, 8)

    x = jax.random.normal(kx, (B, N, C), dtype=jnp.float32)
    wqkv = jax.random.normal(kw1, (C, 3 * C), dtype=jnp.float32) * 0.05
    bqkv = jax.random.normal(kb1, (3 * C,), dtype=jnp.float32) * 0.05
    wproj = jax.random.normal(kw2, (C, C), dtype=jnp.float32) * 0.05
    bproj = jax.random.normal(kb2, (C,), dtype=jnp.float32) * 0.05
    mask = jax.random.normal(km, (nW, N, N), dtype=jnp.float32)

    tol_f32 = dict(rtol=2e-3, atol=2e-3)   # XLA default-precision f32 matmul in ref

    # 1) No-mask path (dedicated kernel variant, no zero-mask DMA).
    out0 = window_attention(x, wqkv, bqkv, wproj, bproj, H, mask=None)
    jax.block_until_ready(out0)
    ref0 = window_attention_ref(x, wqkv, bqkv, wproj, bproj, H, mask=None)
    np.testing.assert_allclose(np.asarray(out0), np.asarray(ref0), **tol_f32)

    # 2) Masked path, auto window batching (BW clamped so the grid has >=2 steps).
    out1 = window_attention(x, wqkv, bqkv, wproj, bproj, H, mask=mask)
    jax.block_until_ready(out1)
    ref1 = window_attention_ref(x, wqkv, bqkv, wproj, bproj, H, mask=mask)
    np.testing.assert_allclose(np.asarray(out1), np.asarray(ref1), **tol_f32)

    # 3) Masked path with an explicit smaller block (multi-step grid, BW=4).
    out2 = window_attention(x, wqkv, bqkv, wproj, bproj, H, mask=mask,
                            block_windows=4)
    jax.block_until_ready(out2)
    np.testing.assert_allclose(np.asarray(out2), np.asarray(ref1), **tol_f32)

    # 4) bf16 activations/weights: MXU operands stay bf16 (f32 accumulation only);
    #    the mask stays f32 inside the kernel.
    xb = x.astype(jnp.bfloat16)
    wqkvb, bqkvb = wqkv.astype(jnp.bfloat16), bqkv.astype(jnp.bfloat16)
    wprojb, bprojb = wproj.astype(jnp.bfloat16), bproj.astype(jnp.bfloat16)
    out3 = window_attention(xb, wqkvb, bqkvb, wprojb, bprojb, H, mask=mask)
    jax.block_until_ready(out3)
    ref3 = window_attention_ref(xb, wqkvb, bqkvb, wprojb, bprojb, H, mask=mask)
    np.testing.assert_allclose(np.asarray(out3.astype(jnp.float32)),
                               np.asarray(ref3.astype(jnp.float32)),
                               rtol=5e-2, atol=5e-2)

    # 5) Swin 7x7 windows: N=49 is padded to 56 inside the wrapper (padding
    #    folded into the additive mask) and sliced back out.
    B2, N2 = 8, 49
    x2 = jax.random.normal(kx2, (B2, N2, C), dtype=jnp.float32)
    mask2 = jax.random.normal(km2, (nW, N2, N2), dtype=jnp.float32)
    out4 = window_attention(x2, wqkv, bqkv, wproj, bproj, H, mask=mask2)
    jax.block_until_ready(out4)
    ref4 = window_attention_ref(x2, wqkv, bqkv, wproj, bproj, H, mask=mask2)
    np.testing.assert_allclose(np.asarray(out4), np.asarray(ref4), **tol_f32)

    print("KERNEL_OK")
</pallas_src>

<mosaic_0001>
module attributes {stable_mosaic.version = 11 : i64} {
  func.func @_window_attention_kernel(%arg0: i32, %arg1: memref<8x8x32xf32, #tpu.memory_space<vmem>>, %arg2: memref<32x96xf32, #tpu.memory_space<vmem>>, %arg3: memref<1x96xf32, #tpu.memory_space<vmem>>, %arg4: memref<32x32xf32, #tpu.memory_space<vmem>>, %arg5: memref<1x32xf32, #tpu.memory_space<vmem>>, %arg6: memref<8x8x32xf32, #tpu.memory_space<vmem>>) attributes {dimension_semantics = [#tpu.dimension_semantics<parallel>], iteration_bounds = array<i64: 2>, scalar_prefetch = 0 : i64, scratch_operands = 0 : i64, tpu.core_type = #tpu.core_type<tc>, window_params = [{transform_indices = @transform_0, window_bounds = array<i64: 8, 8, 32>}, {pipeline_mode = #tpu.pipeline_mode<synchronous>, transform_indices = @transform_1, window_bounds = array<i64: 32, 96>}, {pipeline_mode = #tpu.pipeline_mode<synchronous>, transform_indices = @transform_2, window_bounds = array<i64: 1, 96>}, {pipeline_mode = #tpu.pipeline_mode<synchronous>, transform_indices = @transform_3, window_bounds = array<i64: 32, 32>}, {pipeline_mode = #tpu.pipeline_mode<synchronous>, transform_indices = @transform_4, window_bounds = array<i64: 1, 32>}, {transform_indices = @transform_5, window_bounds = array<i64: 8, 8, 32>}]} {
    %c0 = arith.constant 0 : index
    %c0_0 = arith.constant 0 : index
    %c0_1 = arith.constant 0 : index
    %0 = vector.load %arg1[%c0, %c0_0, %c0_1] : memref<8x8x32xf32, #tpu.memory_space<vmem>>, vector<8x8x32xf32>
    %1 = vector.shape_cast %0 : vector<8x8x32xf32> to vector<64x32xf32>
    %c0_2 = arith.constant 0 : index
    %c0_3 = arith.constant 0 : index
    %2 = vector.load %arg2[%c0_2, %c0_3] : memref<32x96xf32, #tpu.memory_space<vmem>>, vector<32x96xf32>
    %cst = arith.constant dense<0.000000e+00> : vector<64x96xf32>
    %3 = tpu.matmul %1, %2, %cst {dimension_numbers = #tpu.dot_dimension_numbers<[1], [0], [0], [1], [0, 0, 1, 1], [], []>} : vector<64x32xf32>, vector<32x96xf32>, vector<64x96xf32> -> vector<64x96xf32>
    %c0_4 = arith.constant 0 : index
    %c0_5 = arith.constant 0 : index
    %4 = vector.load %arg3[%c0_4, %c0_5] : memref<1x96xf32, #tpu.memory_space<vmem>>, vector<1x96xf32>
    %5 = vector.shape_cast %4 : vector<1x96xf32> to vector<96xf32>
    %6 = vector.shape_cast %5 : vector<96xf32> to vector<1x96xf32>
    %7 = vector.broadcast %6 : vector<1x96xf32> to vector<64x96xf32>
    %8 = arith.addf %3, %7 : vector<64x96xf32>
    %9 = vector.extract_strided_slice %8 {offsets = [0, 0], sizes = [64, 8], strides = [1, 1]} : vector<64x96xf32> to vector<64x8xf32>
    %cst_6 = arith.constant 0.353553385 : f32
    %10 = vector.broadcast %cst_6 : f32 to vector<64x8xf32>
    %11 = arith.mulf %9, %10 : vector<64x8xf32>
    %12 = vector.extract_strided_slice %8 {offsets = [0, 32], sizes = [64, 8], strides = [1, 1]} : vector<64x96xf32> to vector<64x8xf32>
    %13 = vector.extract_strided_slice %8 {offsets = [0, 64], sizes = [64, 8], strides = [1, 1]} : vector<64x96xf32> to vector<64x8xf32>
    %14 = vector.shape_cast %11 : vector<64x8xf32> to vector<8x8x8xf32>
    %15 = vector.shape_cast %12 : vector<64x8xf32> to vector<8x8x8xf32>
    %16 = vector.shape_cast %13 : vector<64x8xf32> to vector<8x8x8xf32>
    "tpu.trace_start"() <{level = 10 : i32, message = "bnd,bmd->bnm"}> : () -> ()
    %cst_7 = arith.constant dense<0.000000e+00> : vector<8x8x8xf32>
    %17 = tpu.matmul %14, %15, %cst_7 {dimension_numbers = #tpu.dot_dimension_numbers<[2], [2], [1], [1], [0, 0, 0, 1, 1, 1], [0], [0]>} : vector<8x8x8xf32>, vector<8x8x8xf32>, vector<8x8x8xf32> -> vector<8x8x8xf32>
    "tpu.trace_stop"() : () -> ()
    %cst_8 = arith.constant dense<0xFF800000> : vector<8x8xf32>
    %18 = vector.multi_reduction <maximumf>, %17, %cst_8 [2] : vector<8x8x8xf32> to vector<8x8xf32>
    %19 = vector.shape_cast %18 : vector<8x8xf32> to vector<8x8x1xf32>
    %20 = vector.broadcast %19 : vector<8x8x1xf32> to vector<8x8x8xf32>
    %21 = arith.subf %17, %20 : vector<8x8x8xf32>
    %22 = math.exp %21 : vector<8x8x8xf32>
    %cst_9 = arith.constant dense<0.000000e+00> : vector<8x8xf32>
    %23 = vector.multi_reduction <add>, %22, %cst_9 [2] : vector<8x8x8xf32> to vector<8x8xf32>
    %24 = vector.shape_cast %23 : vector<8x8xf32> to vector<8x8x1xf32>
    %25 = tpu.reciprocal %24 : vector<8x8x1xf32> -> vector<8x8x1xf32>
    %26 = vector.broadcast %25 : vector<8x8x1xf32> to vector<8x8x8xf32>
    %27 = arith.mulf %22, %26 : vector<8x8x8xf32>
    "tpu.trace_start"() <{level = 10 : i32, message = "bnm,bmd->bnd"}> : () -> ()
    %cst_10 = arith.constant dense<0.000000e+00> : vector<8x8x8xf32>
    %28 = tpu.matmul %27, %16, %cst_10 {dimension_numbers = #tpu.dot_dimension_numbers<[2], [1], [1], [2], [0, 0, 0, 1, 1, 2], [0], [0]>} : vector<8x8x8xf32>, vector<8x8x8xf32>, vector<8x8x8xf32> -> vector<8x8x8xf32>
    "tpu.trace_stop"() : () -> ()
    %29 = vector.shape_cast %28 : vector<8x8x8xf32> to vector<64x8xf32>
    %30 = vector.extract_strided_slice %8 {offsets = [0, 8], sizes = [64, 8], strides = [1, 1]} : vector<64x96xf32> to vector<64x8xf32>
    %cst_11 = arith.constant 0.353553385 : f32
    %31 = vector.broadcast %cst_11 : f32 to vector<64x8xf32>
    %32 = arith.mulf %30, %31 : vector<64x8xf32>
    %33 = vector.extract_strided_slice %8 {offsets = [0, 40], sizes = [64, 8], strides = [1, 1]} : vector<64x96xf32> to vector<64x8xf32>
    %34 = vector.extract_strided_slice %8 {offsets = [0, 72], sizes = [64, 8], strides = [1, 1]} : vector<64x96xf32> to vector<64x8xf32>
    %35 = vector.shape_cast %32 : vector<64x8xf32> to vector<8x8x8xf32>
    %36 = vector.shape_cast %33 : vector<64x8xf32> to vector<8x8x8xf32>
    %37 = vector.shape_cast %34 : vector<64x8xf32> to vector<8x8x8xf32>
    "tpu.trace_start"() <{level = 10 : i32, message = "bnd,bmd->bnm"}> : () -> ()
    %cst_12 = arith.constant dense<0.000000e+00> : vector<8x8x8xf32>
    %38 = tpu.matmul %35, %36, %cst_12 {dimension_numbers = #tpu.dot_dimension_numbers<[2], [2], [1], [1], [0, 0, 0, 1, 1, 1], [0], [0]>} : vector<8x8x8xf32>, vector<8x8x8xf32>, vector<8x8x8xf32> -> vector<8x8x8xf32>
    "tpu.trace_stop"() : () -> ()
    %cst_13 = arith.constant dense<0xFF800000> : vector<8x8xf32>
    %39 = vector.multi_reduction <maximumf>, %38, %cst_13 [2] : vector<8x8x8xf32> to vector<8x8xf32>
    %40 = vector.shape_cast %39 : vector<8x8xf32> to vector<8x8x1xf32>
    %41 = vector.broadcast %40 : vector<8x8x1xf32> to vector<8x8x8xf32>
    %42 = arith.subf %38, %41 : vector<8x8x8xf32>
    %43 = math.exp %42 : vector<8x8x8xf32>
    %cst_14 = arith.constant dense<0.000000e+00> : vector<8x8xf32>
    %44 = vector.multi_reduction <add>, %43, %cst_14 [2] : vector<8x8x8xf32> to vector<8x8xf32>
    %45 = vector.shape_cast %44 : vector<8x8xf32> to vector<8x8x1xf32>
    %46 = tpu.reciprocal %45 : vector<8x8x1xf32> -> vector<8x8x1xf32>
    %47 = vector.broadcast %46 : vector<8x8x1xf32> to vector<8x8x8xf32>
    %48 = arith.mulf %43, %47 : vector<8x8x8xf32>
    "tpu.trace_start"() <{level = 10 : i32, message = "bnm,bmd->bnd"}> : () -> ()
    %cst_15 = arith.constant dense<0.000000e+00> : vector<8x8x8xf32>
    %49 = tpu.matmul %48, %37, %cst_15 {dimension_numbers = #tpu.dot_dimension_numbers<[2], [1], [1], [2], [0, 0, 0, 1, 1, 2], [0], [0]>} : vector<8x8x8xf32>, vector<8x8x8xf32>, vector<8x8x8xf32> -> vector<8x8x8xf32>
    "tpu.trace_stop"() : () -> ()
    %50 = vector.shape_cast %49 : vector<8x8x8xf32> to vector<64x8xf32>
    %51 = vector.extract_strided_slice %8 {offsets = [0, 16], sizes = [64, 8], strides = [1, 1]} : vector<64x96xf32> to vector<64x8xf32>
    %cst_16 = arith.constant 0.353553385 : f32
    %52 = vector.broadcast %cst_16 : f32 to vector<64x8xf32>
    %53 = arith.mulf %51, %52 : vector<64x8xf32>
    %54 = vector.extract_strided_slice %8 {offsets = [0, 48], sizes = [64, 8], strides = [1, 1]} : vector<64x96xf32> to vector<64x8xf32>
    %55 = vector.extract_strided_slice %8 {offsets = [0, 80], sizes = [64, 8], strides = [1, 1]} : vector<64x96xf32> to vector<64x8xf32>
    %56 = vector.shape_cast %53 : vector<64x8xf32> to vector<8x8x8xf32>
    %57 = vector.shape_cast %54 : vector<64x8xf32> to vector<8x8x8xf32>
    %58 = vector.shape_cast %55 : vector<64x8xf32> to vector<8x8x8xf32>
    "tpu.trace_start"() <{level = 10 : i32, message = "bnd,bmd->bnm"}> : () -> ()
    %cst_17 = arith.constant dense<0.000000e+00> : vector<8x8x8xf32>
    %59 = tpu.matmul %56, %57, %cst_17 {dimension_numbers = #tpu.dot_dimension_numbers<[2], [2], [1], [1], [0, 0, 0, 1, 1, 1], [0], [0]>} : vector<8x8x8xf32>, vector<8x8x8xf32>, vector<8x8x8xf32> -> vector<8x8x8xf32>
    "tpu.trace_stop"() : () -> ()
    %cst_18 = arith.constant dense<0xFF800000> : vector<8x8xf32>
    %60 = vector.multi_reduction <maximumf>, %59, %cst_18 [2] : vector<8x8x8xf32> to vector<8x8xf32>
    %61 = vector.shape_cast %60 : vector<8x8xf32> to vector<8x8x1xf32>
    %62 = vector.broadcast %61 : vector<8x8x1xf32> to vector<8x8x8xf32>
    %63 = arith.subf %59, %62 : vector<8x8x8xf32>
    %64 = math.exp %63 : vector<8x8x8xf32>
    %cst_19 = arith.constant dense<0.000000e+00> : vector<8x8xf32>
    %65 = vector.multi_reduction <add>, %64, %cst_19 [2] : vector<8x8x8xf32> to vector<8x8xf32>
    %66 = vector.shape_cast %65 : vector<8x8xf32> to vector<8x8x1xf32>
    %67 = tpu.reciprocal %66 : vector<8x8x1xf32> -> vector<8x8x1xf32>
    %68 = vector.broadcast %67 : vector<8x8x1xf32> to vector<8x8x8xf32>
    %69 = arith.mulf %64, %68 : vector<8x8x8xf32>
    "tpu.trace_start"() <{level = 10 : i32, message = "bnm,bmd->bnd"}> : () -> ()
    %cst_20 = arith.constant dense<0.000000e+00> : vector<8x8x8xf32>
    %70 = tpu.matmul %69, %58, %cst_20 {dimension_numbers = #tpu.dot_dimension_numbers<[2], [1], [1], [2], [0, 0, 0, 1, 1, 2], [0], [0]>} : vector<8x8x8xf32>, vector<8x8x8xf32>, vector<8x8x8xf32> -> vector<8x8x8xf32>
    "tpu.trace_stop"() : () -> ()
    %71 = vector.shape_cast %70 : vector<8x8x8xf32> to vector<64x8xf32>
    %72 = vector.extract_strided_slice %8 {offsets = [0, 24], sizes = [64, 8], strides = [1, 1]} : vector<64x96xf32> to vector<64x8xf32>
    %cst_21 = arith.constant 0.353553385 : f32
    %73 = vector.broadcast %cst_21 : f32 to vector<64x8xf32>
    %74 = arith.mulf %72, %73 : vector<64x8xf32>
    %75 = vector.extract_strided_slice %8 {offsets = [0, 56], sizes = [64, 8], strides = [1, 1]} : vector<64x96xf32> to vector<64x8xf32>
    %76 = vector.extract_strided_slice %8 {offsets = [0, 88], sizes = [64, 8], strides = [1, 1]} : vector<64x96xf32> to vector<64x8xf32>
    %77 = vector.shape_cast %74 : vector<64x8xf32> to vector<8x8x8xf32>
    %78 = vector.shape_cast %75 : vector<64x8xf32> to vector<8x8x8xf32>
    %79 = vector.shape_cast %76 : vector<64x8xf32> to vector<8x8x8xf32>
    "tpu.trace_start"() <{level = 10 : i32, message = "bnd,bmd->bnm"}> : () -> ()
    %cst_22 = arith.constant dense<0.000000e+00> : vector<8x8x8xf32>
    %80 = tpu.matmul %77, %78, %cst_22 {dimension_numbers = #tpu.dot_dimension_numbers<[2], [2], [1], [1], [0, 0, 0, 1, 1, 1], [0], [0]>} : vector<8x8x8xf32>, vector<8x8x8xf32>, vector<8x8x8xf32> -> vector<8x8x8xf32>
    "tpu.trace_stop"() : () -> ()
    %cst_23 = arith.constant dense<0xFF800000> : vector<8x8xf32>
    %81 = vector.multi_reduction <maximumf>, %80, %cst_23 [2] : vector<8x8x8xf32> to vector<8x8xf32>
    %82 = vector.shape_cast %81 : vector<8x8xf32> to vector<8x8x1xf32>
    %83 = vector.broadcast %82 : vector<8x8x1xf32> to vector<8x8x8xf32>
    %84 = arith.subf %80, %83 : vector<8x8x8xf32>
    %85 = math.exp %84 : vector<8x8x8xf32>
    %cst_24 = arith.constant dense<0.000000e+00> : vector<8x8xf32>
    %86 = vector.multi_reduction <add>, %85, %cst_24 [2] : vector<8x8x8xf32> to vector<8x8xf32>
    %87 = vector.shape_cast %86 : vector<8x8xf32> to vector<8x8x1xf32>
    %88 = tpu.reciprocal %87 : vector<8x8x1xf32> -> vector<8x8x1xf32>
    %89 = vector.broadcast %88 : vector<8x8x1xf32> to vector<8x8x8xf32>
    %90 = arith.mulf %85, %89 : vector<8x8x8xf32>
    "tpu.trace_start"() <{level = 10 : i32, message = "bnm,bmd->bnd"}> : () -> ()
    %cst_25 = arith.constant dense<0.000000e+00> : vector<8x8x8xf32>
    %91 = tpu.matmul %90, %79, %cst_25 {dimension_numbers = #tpu.dot_dimension_numbers<[2], [1], [1], [2], [0, 0, 0, 1, 1, 2], [0], [0]>} : vector<8x8x8xf32>, vector<8x8x8xf32>, vector<8x8x8xf32> -> vector<8x8x8xf32>
    "tpu.trace_stop"() : () -> ()
    %92 = vector.shape_cast %91 : vector<8x8x8xf32> to vector<64x8xf32>
    %93 = tpu.concatenate %29, %50, %71, %92 in 1 : vector<64x8xf32>, vector<64x8xf32>, vector<64x8xf32>, vector<64x8xf32> -> vector<64x32xf32>
    %c0_26 = arith.constant 0 : index
    %c0_27 = arith.constant 0 : index
    %94 = vector.load %arg4[%c0_26, %c0_27] : memref<32x32xf32, #tpu.memory_space<vmem>>, vector<32x32xf32>
    %cst_28 = arith.constant dense<0.000000e+00> : vector<64x32xf32>
    %95 = tpu.matmul %93, %94, %cst_28 {dimension_numbers = #tpu.dot_dimension_numbers<[1], [0], [0], [1], [0, 0, 1, 1], [], []>} : vector<64x32xf32>, vector<32x32xf32>, vector<64x32xf32> -> vector<64x32xf32>
    %c0_29 = arith.constant 0 : index
    %c0_30 = arith.constant 0 : index
    %96 = vector.load %arg5[%c0_29, %c0_30] : memref<1x32xf32, #tpu.memory_space<vmem>>, vector<1x32xf32>
    %97 = vector.shape_cast %96 : vector<1x32xf32> to vector<32xf32>
    %98 = vector.shape_cast %97 : vector<32xf32> to vector<1x32xf32>
    %99 = vector.broadcast %98 : vector<1x32xf32> to vector<64x32xf32>
    %100 = arith.addf %95, %99 : vector<64x32xf32>
    %101 = vector.shape_cast %100 : vector<64x32xf32> to vector<8x8x32xf32>
    %c0_31 = arith.constant 0 : index
    %c0_32 = arith.constant 0 : index
    %c0_33 = arith.constant 0 : index
    %102 = vector.load %arg6[%c0_31, %c0_32, %c0_33] : memref<8x8x32xf32, #tpu.memory_space<vmem>>, vector<8x8x32xf32>
    tpu.vector_store %arg6[%c0_31, %c0_32, %c0_33], %101 {strides = array<i32>} : memref<8x8x32xf32, #tpu.memory_space<vmem>>, vector<8x8x32xf32>,
    return
  }
  func.func @transform_0(%arg0: i32) -> (i32, i32, i32) {
    %c0_i32 = arith.constant 0 : i32
    %c0_i32_0 = arith.constant 0 : i32
    %c0_i32_1 = arith.constant 0 : i32
    return %arg0, %c0_i32, %c0_i32_0 : i32, i32, i32
  }
  func.func @transform_1(%arg0: i32) -> (i32, i32) {
    %c0_i32 = arith.constant 0 : i32
    %c0_i32_0 = arith.constant 0 : i32
    %c0_i32_1 = arith.constant 0 : i32
    return %c0_i32, %c0_i32_0 : i32, i32
  }
  func.func @transform_2(%arg0: i32) -> (i32, i32) {
    %c0_i32 = arith.constant 0 : i32
    %c0_i32_0 = arith.constant 0 : i32
    %c0_i32_1 = arith.constant 0 : i32
    return %c0_i32, %c0_i32_0 : i32, i32
  }
  func.func @transform_3(%arg0: i32) -> (i32, i32) {
    %c0_i32 = arith.constant 0 : i32
    %c0_i32_0 = arith.constant 0 : i32
    %c0_i32_1 = arith.constant 0 : i32
    return %c0_i32, %c0_i32_0 : i32, i32
  }
  func.func @transform_4(%arg0: i32) -> (i32, i32) {
    %c0_i32 = arith.constant 0 : i32
    %c0_i32_0 = arith.constant 0 : i32
    %c0_i32_1 = arith.constant 0 : i32
    return %c0_i32, %c0_i32_0 : i32, i32
  }
  func.func @transform_5(%arg0: i32) -> (i32, i32, i32) {
    %c0_i32 = arith.constant 0 : i32
    %c0_i32_0 = arith.constant 0 : i32
    %c0_i32_1 = arith.constant 0 : i32
    return %arg0, %c0_i32, %c0_i32_0 : i32, i32, i32
  }
}

</mosaic_0001>

<llo_original>
// kernel: tpu_custom_call.1
$region0: #{tpu_custom_call.1}
  #allocation0 [shape = 'u32[]', space=smem, size = 0x4, offset = 0x4, fixed_abs, tag = 'smem constant byte address 0x4 - core index']
  #allocation1 [shape = 'u32[144,128]{1,0:T(1,128)}', space=vmem, size = 0x12000, scoped, tag = 'internal scratch']
  %s0 = inlined_call_operand.hbm [shape: f32[16,8,32], index: 0, kind: input, shape index: {}]
  %s1 = inlined_call_operand.hbm [shape: f32[32,96], index: 1, kind: input, shape index: {}]
  %s2 = inlined_call_operand.vmem [shape: f32[1,96], index: 2, kind: input, shape index: {}]
  %s3 = inlined_call_operand.hbm [shape: f32[32,32], index: 3, kind: input, shape index: {}]
  %s4 = inlined_call_operand.vmem [shape: f32[1,32], index: 4, kind: input, shape index: {}]
  %s5 = inlined_call_operand.hbm [shape: f32[16,8,32], index: 5, kind: output, shape index: {}]
  %s6 = sld [smem:[#allocation0]]
  $region65: #{tpu_custom_call.1} parent=0
    _
  %s8 = ssub.s32 1, %s6
  %s9 = scalar_select 0, %s8, %s6
  $region1: #{tpu_custom_call.1} parent=0
    #allocation2 [shape = 'u8[65536]{0}', space=vmem, size = 0x10000, scoped, tag = 'input window, operand 0']
    #allocation3 [shape = 's32[2]{0}', space=sflag, size = 0x8, scoped, tag = 'scoped memory for tpu_custom_call.1']
    #allocation4 [shape = 's32[2]{0}', space=sflag, size = 0x8, scoped, tag = 'scoped memory for tpu_custom_call.1']
    #allocation5 [shape = 'u8[16384]{0}', space=vmem, size = 0x4000, scoped, tag = 'input window, operand 1, single buffered']
    #allocation6 [shape = 's32[1]{0}', space=sflag, size = 0x4, scoped, tag = 'scoped memory for tpu_custom_call.1']
    #allocation7 [shape = 'u8[16384]{0}', space=vmem, size = 0x4000, scoped, tag = 'input window, operand 3, single buffered']
    #allocation8 [shape = 'u8[65536]{0}', space=vmem, size = 0x10000, scoped, tag = 'output window, operand 0']
    %10 = vsyncpa [#allocation3], 0
    %s11 = scalar_lea.sflag [#allocation3], 1
    %12 = vsyncpa %s11, 0
    %13 = vsyncpa [#allocation6], 0
    %14 = vsyncpa [#allocation4], 0
    %s15 = scalar_lea.sflag [#allocation4], 1
    %16 = vsyncpa %s15, 0
    loop: start=0, step=1, limit=4
    $region2: #{tpu_custom_call.1} parent=1 // loop_pre_header
      _
    $region3: #{tpu_custom_call.1} parent=1 // loop_header
      %s18 = sphi 0, %s22
      %p19 = scmp.ge.s32.totalorder %s18, 4
      %s28 = sphi 0, %s30
      %s31 = sphi 0, %s28
      %s32 = sphi 0, %s31
      %s48 = sphi 0, %s32
      %s52 = sphi 0, %s52
      %s54 = sphi 0, %s52
      %s55 = sphi 0, %s54
      %s69 = sphi 0, %s55
      %s73 = sphi 0, %s73
      %s75 = sphi 0, %s73
      %s76 = sphi 0, %s75
      %s90 = sphi 0, %s76
      %s94 = sphi 0, %s94
      %s96 = sphi 0, %s94
      %s97 = sphi 0, %s96
      %s111 = sphi 0, %s97
      %s115 = sphi 0, %s115
      %s117 = sphi 0, %s115
      %s118 = sphi 0, %s117
      %s132 = sphi 0, %s118
      %s138 = sphi 0, %s140
      %s141 = sphi 0, %s138
      %s142 = sphi 0, %s141
      %s158 = sphi 0, %s142
    $region4: #{tpu_custom_call.1} parent=1 // loop_header_branch
      %21 = sbr.rel (%p19) target = $region8
    $region5: #{tpu_custom_call.1} parent=1 // loop_body
      %s23 = ssub.s32 %s18, 1
      %s24 = ssub.s32 %s18, 2
      %s25 = sadd.s32 %s18, 1
      %s26 = ssub.s32 %s18, %s25
      %p27 = scmp.eq.s32.totalorder %s26, 0
      %s29 = sadd.s32 %s28, 1
      %s30 = scalar_select %p27, %s28, %s29
      %p33 = pneg %p27
      %p34 = scmp.eq.s32.totalorder %s18, 1
      %p35 = por %p33, %p34
      %p36 = scmp.ne.s32.totalorder %s28, %s31
      %p37 = scmp.eq.s32.totalorder %s18, 0
      %p38 = por %p36, %p37
      %p39 = scmp.ne.s32.totalorder %s28, %s31
      %p40 = scmp.eq.s32.totalorder %s23, 1
      %p41 = por %p39, %p40
      %p42 = scmp.ne.s32.totalorder %s31, %s32
      %p43 = scmp.eq.s32.totalorder %s23, 0
      %p44 = por %p42, %p43
      %p45 = scmp.ne.s32.totalorder %s31, %s32
      %p46 = scmp.eq.s32.totalorder %s24, 1
      %p47 = por %p45, %p46
      %p49 = scmp.ne.s32.totalorder %s32, %s48
      %p50 = scmp.eq.s32.totalorder %s24, 0
      %p51 = por %p49, %p50
      %s53 = sadd.s32 %s52, 1
      %p56 = scmp.eq.s32.totalorder %s18, 1
      %p57 = scmp.ne.s32.totalorder %s52, %s54
      %p58 = scmp.eq.s32.totalorder %s18, 0
      %p59 = por %p57, %p58
      %p60 = scmp.ne.s32.totalorder %s52, %s54
      %p61 = scmp.eq.s32.totalorder %s23, 1
      %p62 = por %p60, %p61
      %p63 = scmp.ne.s32.totalorder %s54, %s55
      %p64 = scmp.eq.s32.totalorder %s23, 0
      %p65 = por %p63, %p64
      %p66 = scmp.ne.s32.totalorder %s54, %s55
      %p67 = scmp.eq.s32.totalorder %s24, 1
      %p68 = por %p66, %p67
      %p70 = scmp.ne.s32.totalorder %s55, %s69
      %p71 = scmp.eq.s32.totalorder %s24, 0
      %p72 = por %p70, %p71
      %s74 = sadd.s32 %s73, 1
      %p77 = scmp.eq.s32.totalorder %s18, 1
      %p78 = scmp.ne.s32.totalorder %s73, %s75
      %p79 = scmp.eq.s32.totalorder %s18, 0
      %p80 = por %p78, %p79
      %p81 = scmp.ne.s32.totalorder %s73, %s75
      %p82 = scmp.eq.s32.totalorder %s23, 1
      %p83 = por %p81, %p82
      %p84 = scmp.ne.s32.totalorder %s75, %s76
      %p85 = scmp.eq.s32.totalorder %s23, 0
      %p86 = por %p84, %p85
      %p87 = scmp.ne.s32.totalorder %s75, %s76
      %p88 = scmp.eq.s32.totalorder %s24, 1
      %p89 = por %p87, %p88
      %p91 = scmp.ne.s32.totalorder %s76, %s90
      %p92 = scmp.eq.s32.totalorder %s24, 0
      %p93 = por %p91, %p92
      %s95 = sadd.s32 %s94, 1
      %p98 = scmp.eq.s32.totalorder %s18, 1
      %p99 = scmp.ne.s32.totalorder %s94, %s96
      %p100 = scmp.eq.s32.totalorder %s18, 0
      %p101 = por %p99, %p100
      %p102 = scmp.ne.s32.totalorder %s94, %s96
      %p103 = scmp.eq.s32.totalorder %s23, 1
      %p104 = por %p102, %p103
      %p105 = scmp.ne.s32.totalorder %s96, %s97
      %p106 = scmp.eq.s32.totalorder %s23, 0
      %p107 = por %p105, %p106
      %p108 = scmp.ne.s32.totalorder %s96, %s97
      %p109 = scmp.eq.s32.totalorder %s24, 1
      %p110 = por %p108, %p109
      %p112 = scmp.ne.s32.totalorder %s97, %s111
      %p113 = scmp.eq.s32.totalorder %s24, 0
      %p114 = por %p112, %p113
      %s116 = sadd.s32 %s115, 1
      %p119 = scmp.eq.s32.totalorder %s18, 1
      %p120 = scmp.ne.s32.totalorder %s115, %s117
      %p121 = scmp.eq.s32.totalorder %s18, 0
      %p122 = por %p120, %p121
      %p123 = scmp.ne.s32.totalorder %s115, %s117
      %p124 = scmp.eq.s32.totalorder %s23, 1
      %p125 = por %p123, %p124
      %p126 = scmp.ne.s32.totalorder %s117, %s118
      %p127 = scmp.eq.s32.totalorder %s23, 0
      %p128 = por %p126, %p127
      %p129 = scmp.ne.s32.totalorder %s117, %s118
      %p130 = scmp.eq.s32.totalorder %s24, 1
      %p131 = por %p129, %p130
      %p133 = scmp.ne.s32.totalorder %s118, %s132
      %p134 = scmp.eq.s32.totalorder %s24, 0
      %p135 = por %p133, %p134
      %s136 = ssub.s32 %s18, %s25
      %p137 = scmp.eq.s32.totalorder %s136, 0
      %s139 = sadd.s32 %s138, 1
      %s140 = scalar_select %p137, %s138, %s139
      %p143 = pneg %p137
      %p144 = scmp.eq.s32.totalorder %s18, 1
      %p145 = por %p143, %p144
      %p146 = scmp.ne.s32.totalorder %s138, %s141
      %p147 = scmp.eq.s32.totalorder %s18, 0
      %p148 = por %p146, %p147
      %p149 = scmp.ne.s32.totalorder %s138, %s141
      %p150 = scmp.eq.s32.totalorder %s23, 1
      %p151 = por %p149, %p150
      %p152 = scmp.ne.s32.totalorder %s141, %s142
      %p153 = scmp.eq.s32.totalorder %s23, 0
      %p154 = por %p152, %p153
      %p155 = scmp.ne.s32.totalorder %s141, %s142
      %p156 = scmp.eq.s32.totalorder %s24, 1
      %p157 = por %p155, %p156
      %p159 = scmp.ne.s32.totalorder %s142, %s158
      %p160 = scmp.eq.s32.totalorder %s24, 0
      %p161 = por %p159, %p160
      %p162 = scmp.le.s32.totalorder 1, %s18
      %p163 = scmp.lt.s32.totalorder %s18, 3
      %p164 = pnand %p162, %p163
      %p165 = pneg %p164
      // Predicated region
      $region9: #{tpu_custom_call.1} parent=5 // pred_check
        _
      $region10: #{tpu_custom_call.1} parent=5 // pred_check_branch
        %167 = sbr.rel (%p164) target = $region12
      $region11: #{tpu_custom_call.1} parent=5 // pred_region
        %s168 = ssub.s32 %s18, 1
        // Predicated region
        $region13: #{tpu_custom_call.1} parent=11 // pred_check
          %p169 = pneg %p65
        $region14: #{tpu_custom_call.1} parent=11 // pred_check_branch
          %171 = sbr.rel (%p169) target = $region16
        $region15: #{tpu_custom_call.1} parent=11 // pred_region
          %s173 = ssub.s32 512, 512
          %174 = vsyncadd [#allocation6], %s173
          %s175 = sshll.u32 [#allocation5], 4
          %s176 = int_to_ptr.vmem [resolvable:$true] %s175
          %181 = dma.hbm_to_vmem [thread:$0]  %s1, 512, %s176, [#allocation6], 128, 128, 8
        $region16: #{tpu_custom_call.1} parent=11 // pred_fallthru
          _
        // Predicated region
        $region17: #{tpu_custom_call.1} parent=11 // pred_check
          %p182 = pneg %p86
        $region18: #{tpu_custom_call.1} parent=11 // pred_check_branch
          %184 = sbr.rel (%p182) target = $region20
        $region19: #{tpu_custom_call.1} parent=11 // pred_region
          _
        $region20: #{tpu_custom_call.1} parent=11 // pred_fallthru
          _
        // Predicated region
        $region21: #{tpu_custom_call.1} parent=11 // pred_check
          %p185 = pneg %p107
        $region22: #{tpu_custom_call.1} parent=11 // pred_check_branch
          %187 = sbr.rel (%p185) target = $region24
        $region23: #{tpu_custom_call.1} parent=11 // pred_region
          %s189 = ssub.s32 512, 512
          %190 = vsyncadd [#allocation6], %s189
          %s191 = sshll.u32 [#allocation7], 4
          %s192 = int_to_ptr.vmem [resolvable:$true] %s191
          %197 = dma.hbm_to_vmem [thread:$0]  %s3, 512, %s192, [#allocation6], 128, 128, 8
        $region24: #{tpu_custom_call.1} parent=11 // pred_fallthru
          _
        // Predicated region
        $region25: #{tpu_custom_call.1} parent=11 // pred_check
          %p198 = pneg %p128
        $region26: #{tpu_custom_call.1} parent=11 // pred_check_branch
          %200 = sbr.rel (%p198) target = $region28
        $region27: #{tpu_custom_call.1} parent=11 // pred_region
          _
        $region28: #{tpu_custom_call.1} parent=11 // pred_fallthru
          _
      $region12: #{tpu_custom_call.1} parent=5 // pred_fallthru
        _
      %p201 = scmp.lt.s32.totalorder %s18, 2
      // Predicated region
      $region29: #{tpu_custom_call.1} parent=5 // pred_check
        %p202 = pneg %p201
      $region30: #{tpu_custom_call.1} parent=5 // pred_check_branch
        %204 = sbr.rel (%p202) target = $region32
      $region31: #{tpu_custom_call.1} parent=5 // pred_region
        // Predicated region
        $region33: #{tpu_custom_call.1} parent=31 // pred_check
          %p205 = pneg %p38
        $region34: #{tpu_custom_call.1} parent=31 // pred_check_branch
          %207 = sbr.rel (%p205) target = $region36
        $region35: #{tpu_custom_call.1} parent=31 // pred_region
          %s208 = sand.u32 %s28, 1
          %s209 = scalar_lea.sflag [#allocation3], %s208
          %s210 = sand.u32 %s28, 1
          %s211 = smul.addr %s210, 64
          %s212 = scalar_lea.vmem [#allocation2], %s211
          %s213 = smul.u32 8, %s18
          %s215 = ssub.s32 1024, 1024
          %216 = vsyncadd %s209, %s215
          %s217 = smul.addr %s213, 128
          %s218 = scalar_lea.hbm %s0, %s217
          %s219 = sshll.u32 %s212, 4
          %s220 = int_to_ptr.vmem [resolvable:$true] %s219
          %225 = dma.hbm_to_vmem [thread:$0]  %s218, 1024, %s220, %s209, 128, 128, 8
        $region36: #{tpu_custom_call.1} parent=31 // pred_fallthru
          _
      $region32: #{tpu_custom_call.1} parent=5 // pred_fallthru
        _
      %p226 = scmp.le.s32.totalorder 1, %s18
      %p227 = scmp.lt.s32.totalorder %s18, 3
      %p228 = pnand %p226, %p227
      %p229 = pneg %p228
      // Predicated region
      $region37: #{tpu_custom_call.1} parent=5 // pred_check
        _
      $region38: #{tpu_custom_call.1} parent=5 // pred_check_branch
        %231 = sbr.rel (%p228) target = $region40
      $region39: #{tpu_custom_call.1} parent=5 // pred_region
        %s232 = ssub.s32 %s18, 1
        %s233 = sand.u32 %s31, 1
        %s234 = scalar_lea.sflag [#allocation3], %s233
        %s235 = sand.u32 %s31, 1
        %s236 = smul.addr %s235, 64
        %s237 = scalar_lea.vmem [#allocation2], %s236
        // Predicated region
        $region41: #{tpu_custom_call.1} parent=39 // pred_check
          %p238 = pneg %p44
        $region42: #{tpu_custom_call.1} parent=39 // pred_check_branch
          %240 = sbr.rel (%p238) target = $region44
        $region43: #{tpu_custom_call.1} parent=39 // pred_region
          %241 = dma.done %s234, 1024
        $region44: #{tpu_custom_call.1} parent=39 // pred_fallthru
          _
        // Predicated region
        $region45: #{tpu_custom_call.1} parent=39 // pred_check
          %p242 = pneg %p65
        $region46: #{tpu_custom_call.1} parent=39 // pred_check_branch
          %244 = sbr.rel (%p242) target = $region48
        $region47: #{tpu_custom_call.1} parent=39 // pred_region
          %245 = dma.done [#allocation6], 512
        $region48: #{tpu_custom_call.1} parent=39 // pred_fallthru
          _
        // Predicated region
        $region49: #{tpu_custom_call.1} parent=39 // pred_check
          %p246 = pneg %p107
        $region50: #{tpu_custom_call.1} parent=39 // pred_check_branch
          %248 = sbr.rel (%p246) target = $region52
        $region51: #{tpu_custom_call.1} parent=39 // pred_region
          %249 = dma.done [#allocation6], 512
        $region52: #{tpu_custom_call.1} parent=39 // pred_fallthru
          _
        %s250 = sand.u32 %s31, 1
        %s251 = scalar_lea.sflag [#allocation3], %s250
        %s252 = sand.u32 %s31, 1
        %s253 = smul.addr %s252, 64
        %s254 = scalar_lea.vmem [#allocation2], %s253
        %p255 = pneg %p44
        %p256 = pneg %p41
        %p257 = pneg %p65
        %p258 = pneg %p62
        %p259 = pneg %p86
        %p260 = pneg %p83
        %p261 = pneg %p107
        %p262 = pneg %p104
        %p263 = pneg %p128
        %p264 = pneg %p125
        %p265 = pneg %p154
        %p266 = pneg %p151
        %s267 = sand.u32 %s141, 1
        %s268 = scalar_lea.sflag [#allocation4], %s267
        %s269 = sand.u32 %s141, 1
        %s270 = smul.addr %s269, 64
        %s271 = scalar_lea.vmem [#allocation8], %s270
        %s272 = smul.u32 8, %s23
        %s273 = smul.u32 8, %s23
        %v274 = vld [vmem:[%s237] sm:$0xff]
        %v275 = vld [vmem:[%s237 + $0x8] sm:$0xff]
        %v276 = vld [vmem:[%s237 + $0x10] sm:$0xff]
        %v277 = vld [vmem:[%s237 + $0x18] sm:$0xff]
        %v278 = vld [vmem:[%s237 + $0x20] sm:$0xff]
        %v279 = vld [vmem:[%s237 + $0x28] sm:$0xff]
        %v280 = vld [vmem:[%s237 + $0x30] sm:$0xff]
        %v281 = vld [vmem:[%s237 + $0x38] sm:$0xff]
        %v282 = vld [vmem:[#allocation5] sm:$0xff]
        %v283 = vld [vmem:[#allocation5 + $0x8] sm:$0xff]
        %v284 = vld [vmem:[#allocation5 + $0x10] sm:$0xff]
        %v285 = vld [vmem:[#allocation5 + $0x18] sm:$0xff]
        %v286 = vld [vmem:[%s2] sm:$0x1]
        %v288 = vlaneseq
        %v289 = vshrl.u32 %v288, 7
        %v290 = vsub.s32 0, %v289
        %v291 = vrot.slane %v286, %v290
        %vm293 = vcmask 261120
        %v295 = vsel %vm293, %v274, 0
        %v298 = vsel %vm293, %v275, 0
        %v301 = vsel %vm293, %v276, 0
        %v304 = vsel %vm293, %v277, 0
        %v307 = vsel %vm293, %v278, 0
        %v310 = vsel %vm293, %v279, 0
        %v313 = vsel %vm293, %v280, 0
        %v316 = vsel %vm293, %v281, 0
        %318 = vmatprep.subr.mxu0 0.0
        %319 = vmatpush1.msra.mxu0 %v282
        %320 = vmatprep.subr.mxu0 0.0
        %321 = vmatpush1.msra.mxu0 %v283
        %322 = vmatprep.subr.mxu0 0.0
        %323 = vmatpush1.msra.mxu0 %v284
        %324 = vmatprep.subr.mxu0 0.0
        %325 = vmatpush1.msra.mxu0 %v285
        %326 = vmatprep.subr.mxu0 0.0
        %327 = vmatpush1.msra.mxu0 0.0
        %328 = vmatprep.subr.mxu0 0.0
        %329 = vmatpush1.msra.mxu0 0.0
        %330 = vmatprep.subr.mxu0 0.0
        %331 = vmatpush1.msra.mxu0 0.0
        %332 = vmatprep.subr.mxu0 0.0
        %333 = vmatpush1.msra.mxu0 0.0
        %334 = vmatprep.subr.mxu0 0.0
        %335 = vmatpush1.msra.mxu0 0.0
        %336 = vmatprep.subr.mxu0 0.0
        %337 = vmatpush1.msra.mxu0 0.0
        %338 = vmatprep.subr.mxu0 0.0
        %339 = vmatpush1.msra.mxu0 0.0
        %340 = vmatprep.subr.mxu0 0.0
        %341 = vmatpush1.msra.mxu0 0.0
        %342 = vmatprep.subr.mxu0 0.0
        %343 = vmatpush1.msra.mxu0 0.0
        %344 = vmatprep.subr.mxu0 0.0
        %345 = vmatpush1.msra.mxu0 0.0
        %346 = vmatprep.subr.mxu0 0.0
        %347 = vmatpush1.msra.mxu0 0.0
        %348 = vmatprep.subr.mxu0 0.0
        %349 = vmatpush1.msra.mxu0 0.0
        %350 = vmatprep.subr.mxu0 0.0
        %351 = vmatpush1.msra.mxu0 0.0
        %352 = vmatprep.subr.mxu0 0.0
        %353 = vmatpush1.msra.mxu0 0.0
        %354 = vmatprep.subr.mxu0 0.0
        %355 = vmatpush1.msra.mxu0 0.0
        %356 = vmatprep.subr.mxu0 0.0
        %357 = vmatpush1.msra.mxu0 0.0
        %358 = vmatprep.subr.mxu0 0.0
        %359 = vmatpush1.msra.mxu0 0.0
        %360 = vmatprep.subr.mxu0 0.0
        %361 = vmatpush1.msra.mxu0 0.0
        %362 = vmatprep.subr.mxu0 0.0
        %363 = vmatpush1.msra.mxu0 0.0
        %364 = vmatprep.subr.mxu0 0.0
        %365 = vmatpush1.msra.mxu0 0.0
        %366 = vmatprep.subr.mxu0 0.0
        %367 = vmatpush1.msra.mxu0 0.0
        %368 = vmatprep.subr.mxu0 0.0
        %369 = vmatpush1.msra.mxu0 0.0
        %370 = vmatprep.subr.mxu0 0.0
        %371 = vmatpush1.msra.mxu0 0.0
        %372 = vmatprep.subr.mxu0 0.0
        %373 = vmatpush1.msra.mxu0 0.0
        %374 = vmatprep.subr.mxu0 0.0
        %375 = vmatpush1.msra.mxu0 0.0
        %376 = vmatprep.subr.mxu0 0.0
        %377 = vmatpush1.msra.mxu0 0.0
        %378 = vmatprep.subr.mxu0 0.0
        %379 = vmatpush1.msra.mxu0 0.0
        %380 = vmatprep.subr.mxu0 0.0
        %381 = vmatpush1.msra.mxu0 0.0
        %382 = vmatprep.mubr.f32.mxu0 0.0
        %383 = vmatmul.mubr.f32.gmra.mrb[0].mxu0 %v295
        %v384 = vpop.f32.mrb[0].mxu0
        %v385 = vadd.f32 %v291, %v384
        %v386 = vpop.f32.mrb[0].mxu0
        %387 = vmatprep.mubr.f32.mxu0 0.0
        %388 = vmatmul.mubr.f32.gmra.mrb[0].mxu0 %v298
        %v389 = vpop.f32.mrb[0].mxu0
        %v390 = vadd.f32 %v291, %v389
        %v391 = vpop.f32.mrb[0].mxu0
        %392 = vmatprep.mubr.f32.mxu0 0.0
        %393 = vmatmul.mubr.f32.gmra.mrb[0].mxu0 %v301
        %v394 = vpop.f32.mrb[0].mxu0
        %v395 = vadd.f32 %v291, %v394
        %v396 = vpop.f32.mrb[0].mxu0
        %397 = vmatprep.mubr.f32.mxu0 0.0
        %398 = vmatmul.mubr.f32.gmra.mrb[0].mxu0 %v304
        %v399 = vpop.f32.mrb[0].mxu0
        %v400 = vadd.f32 %v291, %v399
        %v401 = vpop.f32.mrb[0].mxu0
        %402 = vmatprep.mubr.f32.mxu0 0.0
        %403 = vmatmul.mubr.f32.gmra.mrb[0].mxu0 %v307
        %v404 = vpop.f32.mrb[0].mxu0
        %v405 = vadd.f32 %v291, %v404
        %v406 = vpop.f32.mrb[0].mxu0
        %407 = vmatprep.mubr.f32.mxu0 0.0
        %408 = vmatmul.mubr.f32.gmra.mrb[0].mxu0 %v310
        %v409 = vpop.f32.mrb[0].mxu0
        %v410 = vadd.f32 %v291, %v409
        %v411 = vpop.f32.mrb[0].mxu0
        %412 = vmatprep.mubr.f32.mxu0 0.0
        %413 = vmatmul.mubr.f32.gmra.mrb[0].mxu0 %v313
        %v414 = vpop.f32.mrb[0].mxu0
        %v415 = vadd.f32 %v291, %v414
        %v416 = vpop.f32.mrb[0].mxu0
        %417 = vmatprep.mubr.f32.mxu0 0.0
        %418 = vmatmul.mubr.f32.gmra.mrb[0].mxu0 %v316
        %v419 = vpop.f32.mrb[0].mxu0
        %v420 = vadd.f32 %v291, %v419
        %v421 = vpop.f32.mrb[0].mxu0
        %422 = vdwg.mxu0
        %v423 = vmul.f32 %v385, 0.35355338
        %v424 = vmul.f32 %v390, 0.35355338
        %v425 = vmul.f32 %v395, 0.35355338
        %v426 = vmul.f32 %v400, 0.35355338
        %v427 = vmul.f32 %v405, 0.35355338
        %v428 = vmul.f32 %v410, 0.35355338
        %v429 = vmul.f32 %v415, 0.35355338
        %v430 = vmul.f32 %v420, 0.35355338
        %432 = vrot.lane.b32.xlu0 %v385, 96
        %v433 = vpop.permute.xlu0 %432
        %vm434 = vcmask 64512
        %v436 = vsel %vm434, %v423, 0
        %v438 = vsel %vm434, %v433, 0
        %440 = vmatprep.subr.mxu0 0.0
        %441 = vmatpush1.xpose.msra.mxu0 %v438
        %442 = vmatprep.subr.mxu0 0.0
        %443 = vmatpush1.xpose.msra.mxu0 0.0
        %444 = vmatprep.subr.mxu0 0.0
        %445 = vmatpush1.xpose.msra.mxu0 0.0
        %446 = vmatprep.subr.mxu0 0.0
        %447 = vmatpush1.xpose.msra.mxu0 0.0
        %448 = vmatprep.subr.mxu0 0.0
        %449 = vmatpush1.xpose.msra.mxu0 0.0
        %450 = vmatprep.subr.mxu0 0.0
        %451 = vmatpush1.xpose.msra.mxu0 0.0
        %452 = vmatprep.subr.mxu0 0.0
        %453 = vmatpush1.xpose.msra.mxu0 0.0
        %454 = vmatprep.subr.mxu0 0.0
        %455 = vmatpush1.xpose.msra.mxu0 0.0
        %456 = vmatprep.subr.mxu0 0.0
        %457 = vmatpush1.xpose.msra.mxu0 0.0
        %458 = vmatprep.subr.mxu0 0.0
        %459 = vmatpush1.xpose.msra.mxu0 0.0
        %460 = vmatprep.subr.mxu0 0.0
        %461 = vmatpush1.xpose.msra.mxu0 0.0
        %462 = vmatprep.subr.mxu0 0.0
        %463 = vmatpush1.xpose.msra.mxu0 0.0
        %464 = vmatprep.subr.mxu0 0.0
        %465 = vmatpush1.xpose.msra.mxu0 0.0
        %466 = vmatprep.subr.mxu0 0.0
        %467 = vmatpush1.xpose.msra.mxu0 0.0
        %468 = vmatprep.subr.mxu0 0.0
        %469 = vmatpush1.xpose.msra.mxu0 0.0
        %470 = vmatprep.subr.mxu0 0.0
        %471 = vmatpush1.xpose.msra.mxu0 0.0
        %472 = vmatprep.subr.mxu0 0.0
        %473 = vmatpush1.xpose.msra.mxu0 0.0
        %474 = vmatprep.subr.mxu0 0.0
        %475 = vmatpush1.xpose.msra.mxu0 0.0
        %476 = vmatprep.subr.mxu0 0.0
        %477 = vmatpush1.xpose.msra.mxu0 0.0
        %478 = vmatprep.subr.mxu0 0.0
        %479 = vmatpush1.xpose.msra.mxu0 0.0
        %480 = vmatprep.subr.mxu0 0.0
        %481 = vmatpush1.xpose.msra.mxu0 0.0
        %482 = vmatprep.subr.mxu0 0.0
        %483 = vmatpush1.xpose.msra.mxu0 0.0
        %484 = vmatprep.subr.mxu0 0.0
        %485 = vmatpush1.xpose.msra.mxu0 0.0
        %486 = vmatprep.subr.mxu0 0.0
        %487 = vmatpush1.xpose.msra.mxu0 0.0
        %488 = vmatprep.subr.mxu0 0.0
        %489 = vmatpush1.xpose.msra.mxu0 0.0
        %490 = vmatprep.subr.mxu0 0.0
        %491 = vmatpush1.xpose.msra.mxu0 0.0
        %492 = vmatprep.subr.mxu0 0.0
        %493 = vmatpush1.xpose.msra.mxu0 0.0
        %494 = vmatprep.subr.mxu0 0.0
        %495 = vmatpush1.xpose.msra.mxu0 0.0
        %496 = vmatprep.subr.mxu0 0.0
        %497 = vmatpush1.xpose.msra.mxu0 0.0
        %498 = vmatprep.subr.mxu0 0.0
        %499 = vmatpush1.xpose.msra.mxu0 0.0
        %500 = vmatprep.subr.mxu0 0.0
        %501 = vmatpush1.xpose.msra.mxu0 0.0
        %502 = vmatprep.subr.mxu0 0.0
        %503 = vmatpush1.xpose.msra.mxu0 0.0
        %504 = vmatprep.mubr.f32.mxu0 0.0
        %505 = vmatmul.mubr.f32.gmra.mrb[0].mxu0 %v436
        %v506 = vpop.f32.mrb[0].mxu0
        %v507 = vadd.f32 0.0, %v506
        %v508 = vpop.f32.mrb[0].mxu0
        %509 = vdwg.mxu0
        %511 = vrot.lane.b32.xlu0 %v390, 96
        %v512 = vpop.permute.xlu0 %511
        %v514 = vsel %vm434, %v424, 0
        %v516 = vsel %vm434, %v512, 0
        %518 = vmatprep.subr.mxu0 0.0
        %519 = vmatpush1.xpose.msra.mxu0 %v516
        %520 = vmatprep.subr.mxu0 0.0
        %521 = vmatpush1.xpose.msra.mxu0 0.0
        %522 = vmatprep.subr.mxu0 0.0
        %523 = vmatpush1.xpose.msra.mxu0 0.0
        %524 = vmatprep.subr.mxu0 0.0
        %525 = vmatpush1.xpose.msra.mxu0 0.0
        %526 = vmatprep.subr.mxu0 0.0
        %527 = vmatpush1.xpose.msra.mxu0 0.0
        %528 = vmatprep.subr.mxu0 0.0
        %529 = vmatpush1.xpose.msra.mxu0 0.0
        %530 = vmatprep.subr.mxu0 0.0
        %531 = vmatpush1.xpose.msra.mxu0 0.0
        %532 = vmatprep.subr.mxu0 0.0
        %533 = vmatpush1.xpose.msra.mxu0 0.0
        %534 = vmatprep.subr.mxu0 0.0
        %535 = vmatpush1.xpose.msra.mxu0 0.0
        %536 = vmatprep.subr.mxu0 0.0
        %537 = vmatpush1.xpose.msra.mxu0 0.0
        %538 = vmatprep.subr.mxu0 0.0
        %539 = vmatpush1.xpose.msra.mxu0 0.0
        %540 = vmatprep.subr.mxu0 0.0
        %541 = vmatpush1.xpose.msra.mxu0 0.0
        %542 = vmatprep.subr.mxu0 0.0
        %543 = vmatpush1.xpose.msra.mxu0 0.0
        %544 = vmatprep.subr.mxu0 0.0
        %545 = vmatpush1.xpose.msra.mxu0 0.0
        %546 = vmatprep.subr.mxu0 0.0
        %547 = vmatpush1.xpose.msra.mxu0 0.0
        %548 = vmatprep.subr.mxu0 0.0
        %549 = vmatpush1.xpose.msra.mxu0 0.0
        %550 = vmatprep.subr.mxu0 0.0
        %551 = vmatpush1.xpose.msra.mxu0 0.0
        %552 = vmatprep.subr.mxu0 0.0
        %553 = vmatpush1.xpose.msra.mxu0 0.0
        %554 = vmatprep.subr.mxu0 0.0
        %555 = vmatpush1.xpose.msra.mxu0 0.0
        %556 = vmatprep.subr.mxu0 0.0
        %557 = vmatpush1.xpose.msra.mxu0 0.0
        %558 = vmatprep.subr.mxu0 0.0
        %559 = vmatpush1.xpose.msra.mxu0 0.0
        %560 = vmatprep.subr.mxu0 0.0
        %561 = vmatpush1.xpose.msra.mxu0 0.0
        %562 = vmatprep.subr.mxu0 0.0
        %563 = vmatpush1.xpose.msra.mxu0 0.0
        %564 = vmatprep.subr.mxu0 0.0
        %565 = vmatpush1.xpose.msra.mxu0 0.0
        %566 = vmatprep.subr.mxu0 0.0
        %567 = vmatpush1.xpose.msra.mxu0 0.0
        %568 = vmatprep.subr.mxu0 0.0
        %569 = vmatpush1.xpose.msra.mxu0 0.0
        %570 = vmatprep.subr.mxu0 0.0
        %571 = vmatpush1.xpose.msra.mxu0 0.0
        %572 = vmatprep.subr.mxu0 0.0
        %573 = vmatpush1.xpose.msra.mxu0 0.0
        %574 = vmatprep.subr.mxu0 0.0
        %575 = vmatpush1.xpose.msra.mxu0 0.0
        %576 = vmatprep.subr.mxu0 0.0
        %577 = vmatpush1.xpose.msra.mxu0 0.0
        %578 = vmatprep.subr.mxu0 0.0
        %579 = vmatpush1.xpose.msra.mxu0 0.0
        %580 = vmatprep.subr.mxu0 0.0
        %581 = vmatpush1.xpose.msra.mxu0 0.0
        %582 = vmatprep.mubr.f32.mxu0 0.0
        %583 = vmatmul.mubr.f32.gmra.mrb[0].mxu0 %v514
        %v584 = vpop.f32.mrb[0].mxu0
        %v585 = vadd.f32 0.0, %v584
        %v586 = vpop.f32.mrb[0].mxu0
        %587 = vdwg.mxu0
        %589 = vrot.lane.b32.xlu0 %v395, 96
        %v590 = vpop.permute.xlu0 %589
        %v592 = vsel %vm434, %v425, 0
        %v594 = vsel %vm434, %v590, 0
        %596 = vmatprep.subr.mxu0 0.0
        %597 = vmatpush1.xpose.msra.mxu0 %v594
        %598 = vmatprep.subr.mxu0 0.0
        %599 = vmatpush1.xpose.msra.mxu0 0.0
        %600 = vmatprep.subr.mxu0 0.0
        %601 = vmatpush1.xpose.msra.mxu0 0.0
        %602 = vmatprep.subr.mxu0 0.0
        %603 = vmatpush1.xpose.msra.mxu0 0.0
        %604 = vmatprep.subr.mxu0 0.0
        %605 = vmatpush1.xpose.msra.mxu0 0.0
        %606 = vmatprep.subr.mxu0 0.0
        %607 = vmatpush1.xpose.msra.mxu0 0.0
        %608 = vmatprep.subr.mxu0 0.0
        %609 = vmatpush1.xpose.msra.mxu0 0.0
        %610 = vmatprep.subr.mxu0 0.0
        %611 = vmatpush1.xpose.msra.mxu0 0.0
        %612 = vmatprep.subr.mxu0 0.0
        %613 = vmatpush1.xpose.msra.mxu0 0.0
        %614 = vmatprep.subr.mxu0 0.0
        %615 = vmatpush1.xpose.msra.mxu0 0.0
        %616 = vmatprep.subr.mxu0 0.0
        %617 = vmatpush1.xpose.msra.mxu0 0.0
        %618 = vmatprep.subr.mxu0 0.0
        %619 = vmatpush1.xpose.msra.mxu0 0.0
        %620 = vmatprep.subr.mxu0 0.0
        %621 = vmatpush1.xpose.msra.mxu0 0.0
        %622 = vmatprep.subr.mxu0 0.0
        %623 = vmatpush1.xpose.msra.mxu0 0.0
        %624 = vmatprep.subr.mxu0 0.0
        %625 = vmatpush1.xpose.msra.mxu0 0.0
        %626 = vmatprep.subr.mxu0 0.0
        %627 = vmatpush1.xpose.msra.mxu0 0.0
        %628 = vmatprep.subr.mxu0 0.0
        %629 = vmatpush1.xpose.msra.mxu0 0.0
        %630 = vmatprep.subr.mxu0 0.0
        %631 = vmatpush1.xpose.msra.mxu0 0.0
        %632 = vmatprep.subr.mxu0 0.0
        %633 = vmatpush1.xpose.msra.mxu0 0.0
        %634 = vmatprep.subr.mxu0 0.0
        %635 = vmatpush1.xpose.msra.mxu0 0.0
        %636 = vmatprep.subr.mxu0 0.0
        %637 = vmatpush1.xpose.msra.mxu0 0.0
        %638 = vmatprep.subr.mxu0 0.0
        %639 = vmatpush1.xpose.msra.mxu0 0.0
        %640 = vmatprep.subr.mxu0 0.0
        %641 = vmatpush1.xpose.msra.mxu0 0.0
        %642 = vmatprep.subr.mxu0 0.0
        %643 = vmatpush1.xpose.msra.mxu0 0.0
        %644 = vmatprep.subr.mxu0 0.0
        %645 = vmatpush1.xpose.msra.mxu0 0.0
        %646 = vmatprep.subr.mxu0 0.0
        %647 = vmatpush1.xpose.msra.mxu0 0.0
        %648 = vmatprep.subr.mxu0 0.0
        %649 = vmatpush1.xpose.msra.mxu0 0.0
        %650 = vmatprep.subr.mxu0 0.0
        %651 = vmatpush1.xpose.msra.mxu0 0.0
        %652 = vmatprep.subr.mxu0 0.0
        %653 = vmatpush1.xpose.msra.mxu0 0.0
        %654 = vmatprep.subr.mxu0 0.0
        %655 = vmatpush1.xpose.msra.mxu0 0.0
        %656 = vmatprep.subr.mxu0 0.0
        %657 = vmatpush1.xpose.msra.mxu0 0.0
        %658 = vmatprep.subr.mxu0 0.0
        %659 = vmatpush1.xpose.msra.mxu0 0.0
        %660 = vmatprep.mubr.f32.mxu0 0.0
        %661 = vmatmul.mubr.f32.gmra.mrb[0].mxu0 %v592
        %v662 = vpop.f32.mrb[0].mxu0
        %v663 = vadd.f32 0.0, %v662
        %v664 = vpop.f32.mrb[0].mxu0
        %665 = vdwg.mxu0
        %667 = vrot.lane.b32.xlu0 %v400, 96
        %v668 = vpop.permute.xlu0 %667
        %v670 = vsel %vm434, %v426, 0
        %v672 = vsel %vm434, %v668, 0
        %674 = vmatprep.subr.mxu0 0.0
        %675 = vmatpush1.xpose.msra.mxu0 %v672
        %676 = vmatprep.subr.mxu0 0.0
        %677 = vmatpush1.xpose.msra.mxu0 0.0
        %678 = vmatprep.subr.mxu0 0.0
        %679 = vmatpush1.xpose.msra.mxu0 0.0
        %680 = vmatprep.subr.mxu0 0.0
        %681 = vmatpush1.xpose.msra.mxu0 0.0
        %682 = vmatprep.subr.mxu0 0.0
        %683 = vmatpush1.xpose.msra.mxu0 0.0
        %684 = vmatprep.subr.mxu0 0.0
        %685 = vmatpush1.xpose.msra.mxu0 0.0
        %686 = vmatprep.subr.mxu0 0.0
        %687 = vmatpush1.xpose.msra.mxu0 0.0
        %688 = vmatprep.subr.mxu0 0.0
        %689 = vmatpush1.xpose.msra.mxu0 0.0
        %690 = vmatprep.subr.mxu0 0.0
        %691 = vmatpush1.xpose.msra.mxu0 0.0
        %692 = vmatprep.subr.mxu0 0.0
        %693 = vmatpush1.xpose.msra.mxu0 0.0
        %694 = vmatprep.subr.mxu0 0.0
        %695 = vmatpush1.xpose.msra.mxu0 0.0
        %696 = vmatprep.subr.mxu0 0.0
        %697 = vmatpush1.xpose.msra.mxu0 0.0
        %698 = vmatprep.subr.mxu0 0.0
        %699 = vmatpush1.xpose.msra.mxu0 0.0
        %700 = vmatprep.subr.mxu0 0.0
        %701 = vmatpush1.xpose.msra.mxu0 0.0
        %702 = vmatprep.subr.mxu0 0.0
        %703 = vmatpush1.xpose.msra.mxu0 0.0
        %704 = vmatprep.subr.mxu0 0.0
        %705 = vmatpush1.xpose.msra.mxu0 0.0
        %706 = vmatprep.subr.mxu0 0.0
        %707 = vmatpush1.xpose.msra.mxu0 0.0
        %708 = vmatprep.subr.mxu0 0.0
        %709 = vmatpush1.xpose.msra.mxu0 0.0
        %710 = vmatprep.subr.mxu0 0.0
        %711 = vmatpush1.xpose.msra.mxu0 0.0
        %712 = vmatprep.subr.mxu0 0.0
        %713 = vmatpush1.xpose.msra.mxu0 0.0
        %714 = vmatprep.subr.mxu0 0.0
        %715 = vmatpush1.xpose.msra.mxu0 0.0
        %716 = vmatprep.subr.mxu0 0.0
        %717 = vmatpush1.xpose.msra.mxu0 0.0
        %718 = vmatprep.subr.mxu0 0.0
        %719 = vmatpush1.xpose.msra.mxu0 0.0
        %720 = vmatprep.subr.mxu0 0.0
        %721 = vmatpush1.xpose.msra.mxu0 0.0
        %722 = vmatprep.subr.mxu0 0.0
        %723 = vmatpush1.xpose.msra.mxu0 0.0
        %724 = vmatprep.subr.mxu0 0.0
        %725 = vmatpush1.xpose.msra.mxu0 0.0
        %726 = vmatprep.subr.mxu0 0.0
        %727 = vmatpush1.xpose.msra.mxu0 0.0
        %728 = vmatprep.subr.mxu0 0.0
        %729 = vmatpush1.xpose.msra.mxu0 0.0
        %730 = vmatprep.subr.mxu0 0.0
        %731 = vmatpush1.xpose.msra.mxu0 0.0
        %732 = vmatprep.subr.mxu0 0.0
        %733 = vmatpush1.xpose.msra.mxu0 0.0
        %734 = vmatprep.subr.mxu0 0.0
        %735 = vmatpush1.xpose.msra.mxu0 0.0
        %736 = vmatprep.subr.mxu0 0.0
        %737 = vmatpush1.xpose.msra.mxu0 0.0
        %738 = vmatprep.mubr.f32.mxu0 0.0
        %739 = vmatmul.mubr.f32.gmra.mrb[0].mxu0 %v670
        %v740 = vpop.f32.mrb[0].mxu0
        %v741 = vadd.f32 0.0, %v740
        %v742 = vpop.f32.mrb[0].mxu0
        %743 = vdwg.mxu0
        %745 = vrot.lane.b32.xlu0 %v405, 96
        %v746 = vpop.permute.xlu0 %745
        %v748 = vsel %vm434, %v427, 0
        %v750 = vsel %vm434, %v746, 0
        %752 = vmatprep.subr.mxu0 0.0
        %753 = vmatpush1.xpose.msra.mxu0 %v750
        %754 = vmatprep.subr.mxu0 0.0
        %755 = vmatpush1.xpose.msra.mxu0 0.0
        %756 = vmatprep.subr.mxu0 0.0
        %757 = vmatpush1.xpose.msra.mxu0 0.0
        %758 = vmatprep.subr.mxu0 0.0
        %759 = vmatpush1.xpose.msra.mxu0 0.0
        %760 = vmatprep.subr.mxu0 0.0
        %761 = vmatpush1.xpose.msra.mxu0 0.0
        %762 = vmatprep.subr.mxu0 0.0
        %763 = vmatpush1.xpose.msra.mxu0 0.0
        %764 = vmatprep.subr.mxu0 0.0
        %765 = vmatpush1.xpose.msra.mxu0 0.0
        %766 = vmatprep.subr.mxu0 0.0
        %767 = vmatpush1.xpose.msra.mxu0 0.0
        %768 = vmatprep.subr.mxu0 0.0
        %769 = vmatpush1.xpose.msra.mxu0 0.0
        %770 = vmatprep.subr.mxu0 0.0
        %771 = vmatpush1.xpose.msra.mxu0 0.0
        %772 = vmatprep.subr.mxu0 0.0
        %773 = vmatpush1.xpose.msra.mxu0 0.0
        %774 = vmatprep.subr.mxu0 0.0
        %775 = vmatpush1.xpose.msra.mxu0 0.0
        %776 = vmatprep.subr.mxu0 0.0
        %777 = vmatpush1.xpose.msra.mxu0 0.0
        %778 = vmatprep.subr.mxu0 0.0
        %779 = vmatpush1.xpose.msra.mxu0 0.0
        %780 = vmatprep.subr.mxu0 0.0
        %781 = vmatpush1.xpose.msra.mxu0 0.0
        %782 = vmatprep.subr.mxu0 0.0
        %783 = vmatpush1.xpose.msra.mxu0 0.0
        %784 = vmatprep.subr.mxu0 0.0
        %785 = vmatpush1.xpose.msra.mxu0 0.0
        %786 = vmatprep.subr.mxu0 0.0
        %787 = vmatpush1.xpose.msra.mxu0 0.0
        %788 = vmatprep.subr.mxu0 0.0
        %789 = vmatpush1.xpose.msra.mxu0 0.0
        %790 = vmatprep.subr.mxu0 0.0
        %791 = vmatpush1.xpose.msra.mxu0 0.0
        %792 = vmatprep.subr.mxu0 0.0
        %793 = vmatpush1.xpose.msra.mxu0 0.0
        %794 = vmatprep.subr.mxu0 0.0
        %795 = vmatpush1.xpose.msra.mxu0 0.0
        %796 = vmatprep.subr.mxu0 0.0
        %797 = vmatpush1.xpose.msra.mxu0 0.0
        %798 = vmatprep.subr.mxu0 0.0
        %799 = vmatpush1.xpose.msra.mxu0 0.0
        %800 = vmatprep.subr.mxu0 0.0
        %801 = vmatpush1.xpose.msra.mxu0 0.0
        %802 = vmatprep.subr.mxu0 0.0
        %803 = vmatpush1.xpose.msra.mxu0 0.0
        %804 = vmatprep.subr.mxu0 0.0
        %805 = vmatpush1.xpose.msra.mxu0 0.0
        %806 = vmatprep.subr.mxu0 0.0
        %807 = vmatpush1.xpose.msra.mxu0 0.0
        %808 = vmatprep.subr.mxu0 0.0
        %809 = vmatpush1.xpose.msra.mxu0 0.0
        %810 = vmatprep.subr.mxu0 0.0
        %811 = vmatpush1.xpose.msra.mxu0 0.0
        %812 = vmatprep.subr.mxu0 0.0
        %813 = vmatpush1.xpose.msra.mxu0 0.0
        %814 = vmatprep.subr.mxu0 0.0
        %815 = vmatpush1.xpose.msra.mxu0 0.0
        %816 = vmatprep.mubr.f32.mxu0 0.0
        %817 = vmatmul.mubr.f32.gmra.mrb[0].mxu0 %v748
        %v818 = vpop.f32.mrb[0].mxu0
        %v819 = vadd.f32 0.0, %v818
        %v820 = vpop.f32.mrb[0].mxu0
        %821 = vdwg.mxu0
        %823 = vrot.lane.b32.xlu0 %v410, 96
        %v824 = vpop.permute.xlu0 %823
        %v826 = vsel %vm434, %v428, 0
        %v828 = vsel %vm434, %v824, 0
        %830 = vmatprep.subr.mxu0 0.0
        %831 = vmatpush1.xpose.msra.mxu0 %v828
        %832 = vmatprep.subr.mxu0 0.0
        %833 = vmatpush1.xpose.msra.mxu0 0.0
        %834 = vmatprep.subr.mxu0 0.0
        %835 = vmatpush1.xpose.msra.mxu0 0.0
        %836 = vmatprep.subr.mxu0 0.0
        %837 = vmatpush1.xpose.msra.mxu0 0.0
        %838 = vmatprep.subr.mxu0 0.0
        %839 = vmatpush1.xpose.msra.mxu0 0.0
        %840 = vmatprep.subr.mxu0 0.0
        %841 = vmatpush1.xpose.msra.mxu0 0.0
        %842 = vmatprep.subr.mxu0 0.0
        %843 = vmatpush1.xpose.msra.mxu0 0.0
        %844 = vmatprep.subr.mxu0 0.0
        %845 = vmatpush1.xpose.msra.mxu0 0.0
        %846 = vmatprep.subr.mxu0 0.0
        %847 = vmatpush1.xpose.msra.mxu0 0.0
        %848 = vmatprep.subr.mxu0 0.0
        %849 = vmatpush1.xpose.msra.mxu0 0.0
        %850 = vmatprep.subr.mxu0 0.0
        %851 = vmatpush1.xpose.msra.mxu0 0.0
        %852 = vmatprep.subr.mxu0 0.0
        %853 = vmatpush1.xpose.msra.mxu0 0.0
        %854 = vmatprep.subr.mxu0 0.0
        %855 = vmatpush1.xpose.msra.mxu0 0.0
        %856 = vmatprep.subr.mxu0 0.0
        %857 = vmatpush1.xpose.msra.mxu0 0.0
        %858 = vmatprep.subr.mxu0 0.0
        %859 = vmatpush1.xpose.msra.mxu0 0.0
        %860 = vmatprep.subr.mxu0 0.0
        %861 = vmatpush1.xpose.msra.mxu0 0.0
        %862 = vmatprep.subr.mxu0 0.0
        %863 = vmatpush1.xpose.msra.mxu0 0.0
        %864 = vmatprep.subr.mxu0 0.0
        %865 = vmatpush1.xpose.msra.mxu0 0.0
        %866 = vmatprep.subr.mxu0 0.0
        %867 = vmatpush1.xpose.msra.mxu0 0.0
        %868 = vmatprep.subr.mxu0 0.0
        %869 = vmatpush1.xpose.msra.mxu0 0.0
        %870 = vmatprep.subr.mxu0 0.0
        %871 = vmatpush1.xpose.msra.mxu0 0.0
        %872 = vmatprep.subr.mxu0 0.0
        %873 = vmatpush1.xpose.msra.mxu0 0.0
        %874 = vmatprep.subr.mxu0 0.0
        %875 = vmatpush1.xpose.msra.mxu0 0.0
        %876 = vmatprep.subr.mxu0 0.0
        %877 = vmatpush1.xpose.msra.mxu0 0.0
        %878 = vmatprep.subr.mxu0 0.0
        %879 = vmatpush1.xpose.msra.mxu0 0.0
        %880 = vmatprep.subr.mxu0 0.0
        %881 = vmatpush1.xpose.msra.mxu0 0.0
        %882 = vmatprep.subr.mxu0 0.0
        %883 = vmatpush1.xpose.msra.mxu0 0.0
        %884 = vmatprep.subr.mxu0 0.0
        %885 = vmatpush1.xpose.msra.mxu0 0.0
        %886 = vmatprep.subr.mxu0 0.0
        %887 = vmatpush1.xpose.msra.mxu0 0.0
        %888 = vmatprep.subr.mxu0 0.0
        %889 = vmatpush1.xpose.msra.mxu0 0.0
        %890 = vmatprep.subr.mxu0 0.0
        %891 = vmatpush1.xpose.msra.mxu0 0.0
        %892 = vmatprep.subr.mxu0 0.0
        %893 = vmatpush1.xpose.msra.mxu0 0.0
        %894 = vmatprep.mubr.f32.mxu0 0.0
        %895 = vmatmul.mubr.f32.gmra.mrb[0].mxu0 %v826
        %v896 = vpop.f32.mrb[0].mxu0
        %v897 = vadd.f32 0.0, %v896
        %v898 = vpop.f32.mrb[0].mxu0
        %899 = vdwg.mxu0
        %901 = vrot.lane.b32.xlu0 %v415, 96
        %v902 = vpop.permute.xlu0 %901
        %v904 = vsel %vm434, %v429, 0
        %v906 = vsel %vm434, %v902, 0
        %908 = vmatprep.subr.mxu0 0.0
        %909 = vmatpush1.xpose.msra.mxu0 %v906
        %910 = vmatprep.subr.mxu0 0.0
        %911 = vmatpush1.xpose.msra.mxu0 0.0
        %912 = vmatprep.subr.mxu0 0.0
        %913 = vmatpush1.xpose.msra.mxu0 0.0
        %914 = vmatprep.subr.mxu0 0.0
        %915 = vmatpush1.xpose.msra.mxu0 0.0
        %916 = vmatprep.subr.mxu0 0.0
        %917 = vmatpush1.xpose.msra.mxu0 0.0
        %918 = vmatprep.subr.mxu0 0.0
        %919 = vmatpush1.xpose.msra.mxu0 0.0
        %920 = vmatprep.subr.mxu0 0.0
        %921 = vmatpush1.xpose.msra.mxu0 0.0
        %922 = vmatprep.subr.mxu0 0.0
        %923 = vmatpush1.xpose.msra.mxu0 0.0
        %924 = vmatprep.subr.mxu0 0.0
        %925 = vmatpush1.xpose.msra.mxu0 0.0
        %926 = vmatprep.subr.mxu0 0.0
        %927 = vmatpush1.xpose.msra.mxu0 0.0
        %928 = vmatprep.subr.mxu0 0.0
        %929 = vmatpush1.xpose.msra.mxu0 0.0
        %930 = vmatprep.subr.mxu0 0.0
        %931 = vmatpush1.xpose.msra.mxu0 0.0
        %932 = vmatprep.subr.mxu0 0.0
        %933 = vmatpush1.xpose.msra.mxu0 0.0
        %934 = vmatprep.subr.mxu0 0.0
        %935 = vmatpush1.xpose.msra.mxu0 0.0
        %936 = vmatprep.subr.mxu0 0.0
        %937 = vmatpush1.xpose.msra.mxu0 0.0
        %938 = vmatprep.subr.mxu0 0.0
        %939 = vmatpush1.xpose.msra.mxu0 0.0
        %940 = vmatprep.subr.mxu0 0.0
        %941 = vmatpush1.xpose.msra.mxu0 0.0
        %942 = vmatprep.subr.mxu0 0.0
        %943 = vmatpush1.xpose.msra.mxu0 0.0
        %944 = vmatprep.subr.mxu0 0.0
        %945 = vmatpush1.xpose.msra.mxu0 0.0
        %946 = vmatprep.subr.mxu0 0.0
        %947 = vmatpush1.xpose.msra.mxu0 0.0
        %948 = vmatprep.subr.mxu0 0.0
        %949 = vmatpush1.xpose.msra.mxu0 0.0
        %950 = vmatprep.subr.mxu0 0.0
        %951 = vmatpush1.xpose.msra.mxu0 0.0
        %952 = vmatprep.subr.mxu0 0.0
        %953 = vmatpush1.xpose.msra.mxu0 0.0
        %954 = vmatprep.subr.mxu0 0.0
        %955 = vmatpush1.xpose.msra.mxu0 0.0
        %956 = vmatprep.subr.mxu0 0.0
        %957 = vmatpush1.xpose.msra.mxu0 0.0
        %958 = vmatprep.subr.mxu0 0.0
        %959 = vmatpush1.xpose.msra.mxu0 0.0
        %960 = vmatprep.subr.mxu0 0.0
        %961 = vmatpush1.xpose.msra.mxu0 0.0
        %962 = vmatprep.subr.mxu0 0.0
        %963 = vmatpush1.xpose.msra.mxu0 0.0
        %964 = vmatprep.subr.mxu0 0.0
        %965 = vmatpush1.xpose.msra.mxu0 0.0
        %966 = vmatprep.subr.mxu0 0.0
        %967 = vmatpush1.xpose.msra.mxu0 0.0
        %968 = vmatprep.subr.mxu0 0.0
        %969 = vmatpush1.xpose.msra.mxu0 0.0
        %970 = vmatprep.subr.mxu0 0.0
        %971 = vmatpush1.xpose.msra.mxu0 0.0
        %972 = vmatprep.mubr.f32.mxu0 0.0
        %973 = vmatmul.mubr.f32.gmra.mrb[0].mxu0 %v904
        %v974 = vpop.f32.mrb[0].mxu0
        %v975 = vadd.f32 0.0, %v974
        %v976 = vpop.f32.mrb[0].mxu0
        %977 = vdwg.mxu0
        %979 = vrot.lane.b32.xlu0 %v420, 96
        %v980 = vpop.permute.xlu0 %979
        %v982 = vsel %vm434, %v430, 0
        %v984 = vsel %vm434, %v980, 0
        %986 = vmatprep.subr.mxu0 0.0
        %987 = vmatpush1.xpose.msra.mxu0 %v984
        %988 = vmatprep.subr.mxu0 0.0
        %989 = vmatpush1.xpose.msra.mxu0 0.0
        %990 = vmatprep.subr.mxu0 0.0
        %991 = vmatpush1.xpose.msra.mxu0 0.0
        %992 = vmatprep.subr.mxu0 0.0
        %993 = vmatpush1.xpose.msra.mxu0 0.0
        %994 = vmatprep.subr.mxu0 0.0
        %995 = vmatpush1.xpose.msra.mxu0 0.0
        %996 = vmatprep.subr.mxu0 0.0
        %997 = vmatpush1.xpose.msra.mxu0 0.0
        %998 = vmatprep.subr.mxu0 0.0
        %999 = vmatpush1.xpose.msra.mxu0 0.0
        %1000 = vmatprep.subr.mxu0 0.0
        %1001 = vmatpush1.xpose.msra.mxu0 0.0
        %1002 = vmatprep.subr.mxu0 0.0
        %1003 = vmatpush1.xpose.msra.mxu0 0.0
        %1004 = vmatprep.subr.mxu0 0.0
        %1005 = vmatpush1.xpose.msra.mxu0 0.0
        %1006 = vmatprep.subr.mxu0 0.0
        %1007 = vmatpush1.xpose.msra.mxu0 0.0
        %1008 = vmatprep.subr.mxu0 0.0
        %1009 = vmatpush1.xpose.msra.mxu0 0.0
        %1010 = vmatprep.subr.mxu0 0.0
        %1011 = vmatpush1.xpose.msra.mxu0 0.0
        %1012 = vmatprep.subr.mxu0 0.0
        %1013 = vmatpush1.xpose.msra.mxu0 0.0
        %1014 = vmatprep.subr.mxu0 0.0
        %1015 = vmatpush1.xpose.msra.mxu0 0.0
        %1016 = vmatprep.subr.mxu0 0.0
        %1017 = vmatpush1.xpose.msra.mxu0 0.0
        %1018 = vmatprep.subr.mxu0 0.0
        %1019 = vmatpush1.xpose.msra.mxu0 0.0
        %1020 = vmatprep.subr.mxu0 0.0
        %1021 = vmatpush1.xpose.msra.mxu0 0.0
        %1022 = vmatprep.subr.mxu0 0.0
        %1023 = vmatpush1.xpose.msra.mxu0 0.0
        %1024 = vmatprep.subr.mxu0 0.0
        %1025 = vmatpush1.xpose.msra.mxu0 0.0
        %1026 = vmatprep.subr.mxu0 0.0
        %1027 = vmatpush1.xpose.msra.mxu0 0.0
        %1028 = vmatprep.subr.mxu0 0.0
        %1029 = vmatpush1.xpose.msra.mxu0 0.0
        %1030 = vmatprep.subr.mxu0 0.0
        %1031 = vmatpush1.xpose.msra.mxu0 0.0
        %1032 = vmatprep.subr.mxu0 0.0
        %1033 = vmatpush1.xpose.msra.mxu0 0.0
        %1034 = vmatprep.subr.mxu0 0.0
        %1035 = vmatpush1.xpose.msra.mxu0 0.0
        %1036 = vmatprep.subr.mxu0 0.0
        %1037 = vmatpush1.xpose.msra.mxu0 0.0
        %1038 = vmatprep.subr.mxu0 0.0
        %1039 = vmatpush1.xpose.msra.mxu0 0.0
        %1040 = vmatprep.subr.mxu0 0.0
        %1041 = vmatpush1.xpose.msra.mxu0 0.0
        %1042 = vmatprep.subr.mxu0 0.0
        %1043 = vmatpush1.xpose.msra.mxu0 0.0
        %1044 = vmatprep.subr.mxu0 0.0
        %1045 = vmatpush1.xpose.msra.mxu0 0.0
        %1046 = vmatprep.subr.mxu0 0.0
        %1047 = vmatpush1.xpose.msra.mxu0 0.0
        %1048 = vmatprep.subr.mxu0 0.0
        %1049 = vmatpush1.xpose.msra.mxu0 0.0
        %1050 = vmatprep.mubr.f32.mxu0 0.0
        %1051 = vmatmul.mubr.f32.gmra.mrb[0].mxu0 %v982
        %v1052 = vpop.f32.mrb[0].mxu0
        %v1053 = vadd.f32 0.0, %v1052
        %v1054 = vpop.f32.mrb[0].mxu0
        %1055 = vdwg.mxu0
        %v1056 = vsel %vm434, %v507, -inf
        %1057 = vmax.xlane.f32.xlu0 %v1056
        %v1058 = vpop.xlane.xlu0 %1057
        %v1059 = vsel %vm434, %v585, -inf
        %1060 = vmax.xlane.f32.xlu0 %v1059
        %v1061 = vpop.xlane.xlu0 %1060
        %v1062 = vsel %vm434, %v663, -inf
        %1063 = vmax.xlane.f32.xlu0 %v1062
        %v1064 = vpop.xlane.xlu0 %1063
        %v1065 = vsel %vm434, %v741, -inf
        %1066 = vmax.xlane.f32.xlu0 %v1065
        %v1067 = vpop.xlane.xlu0 %1066
        %v1068 = vsel %vm434, %v819, -inf
        %1069 = vmax.xlane.f32.xlu0 %v1068
        %v1070 = vpop.xlane.xlu0 %1069
        %v1071 = vsel %vm434, %v897, -inf
        %1072 = vmax.xlane.f32.xlu0 %v1071
        %v1073 = vpop.xlane.xlu0 %1072
        %v1074 = vsel %vm434, %v975, -inf
        %1075 = vmax.xlane.f32.xlu0 %v1074
        %v1076 = vpop.xlane.xlu0 %1075
        %v1077 = vsel %vm434, %v1053, -inf
        %1078 = vmax.xlane.f32.xlu0 %v1077
        %v1079 = vpop.xlane.xlu0 %1078
        %v1080 = vsub.f32 %v507, %v1058
        %v1081 = vsub.f32 %v585, %v1061
        %v1082 = vsub.f32 %v663, %v1064
        %v1083 = vsub.f32 %v741, %v1067
        %v1084 = vsub.f32 %v819, %v1070
        %v1085 = vsub.f32 %v897, %v1073
        %v1086 = vsub.f32 %v975, %v1076
        %v1087 = vsub.f32 %v1053, %v1079
        %v1088 = vmul.f32 %v1080, 1.442695
        %v1089 = vpow.pop %v1088
        %v1090 = vmul.f32 %v1081, 1.442695
        %v1091 = vpow.pop %v1090
        %v1092 = vmul.f32 %v1082, 1.442695
        %v1093 = vpow.pop %v1092
        %v1094 = vmul.f32 %v1083, 1.442695
        %v1095 = vpow.pop %v1094
        %v1096 = vmul.f32 %v1084, 1.442695
        %v1097 = vpow.pop %v1096
        %v1098 = vmul.f32 %v1085, 1.442695
        %v1099 = vpow.pop %v1098
        %v1100 = vmul.f32 %v1086, 1.442695
        %v1101 = vpow.pop %v1100
        %v1102 = vmul.f32 %v1087, 1.442695
        %v1103 = vpow.pop %v1102
        %v1104 = vsel %vm434, %v1089, 0.0
        %1105 = vadd.xlane.f32.xlu0 %v1104
        %v1106 = vpop.xlane.xlu0 %1105
        %v1107 = vsel %vm434, %v1091, 0.0
        %1108 = vadd.xlane.f32.xlu0 %v1107
        %v1109 = vpop.xlane.xlu0 %1108
        %v1110 = vsel %vm434, %v1093, 0.0
        %1111 = vadd.xlane.f32.xlu0 %v1110
        %v1112 = vpop.xlane.xlu0 %1111
        %v1113 = vsel %vm434, %v1095, 0.0
        %1114 = vadd.xlane.f32.xlu0 %v1113
        %v1115 = vpop.xlane.xlu0 %1114
        %v1116 = vsel %vm434, %v1097, 0.0
        %1117 = vadd.xlane.f32.xlu0 %v1116
        %v1118 = vpop.xlane.xlu0 %1117
        %v1119 = vsel %vm434, %v1099, 0.0
        %1120 = vadd.xlane.f32.xlu0 %v1119
        %v1121 = vpop.xlane.xlu0 %1120
        %v1122 = vsel %vm434, %v1101, 0.0
        %1123 = vadd.xlane.f32.xlu0 %v1122
        %v1124 = vpop.xlane.xlu0 %1123
        %v1125 = vsel %vm434, %v1103, 0.0
        %1126 = vadd.xlane.f32.xlu0 %v1125
        %v1127 = vpop.xlane.xlu0 %1126
        %v1128 = vrcp.pop %v1106
        %v1129 = vrcp.pop %v1109
        %v1130 = vrcp.pop %v1112
        %v1131 = vrcp.pop %v1115
        %v1132 = vrcp.pop %v1118
        %v1133 = vrcp.pop %v1121
        %v1134 = vrcp.pop %v1124
        %v1135 = vrcp.pop %v1127
        %v1136 = vmul.f32 %v1089, %v1128
        %v1137 = vmul.f32 %v1091, %v1129
        %v1138 = vmul.f32 %v1093, %v1130
        %v1139 = vmul.f32 %v1095, %v1131
        %v1140 = vmul.f32 %v1097, %v1132
        %v1141 = vmul.f32 %v1099, %v1133
        %v1142 = vmul.f32 %v1101, %v1134
        %v1143 = vmul.f32 %v1103, %v1135
        %1144 = vrot.lane.b32.xlu0 %v385, 64
        %v1145 = vpop.permute.xlu0 %1144
        %v1148 = vsel %vm434, %v1136, 0
        %1150 = vmatprep.subr.mxu0 0.0
        %1151 = vmatpush1.msra.mxu0 %v1145
        %1152 = vmatprep.subr.mxu0 0.0
        %1153 = vmatpush1.msra.mxu0 0.0
        %1154 = vmatprep.subr.mxu0 0.0
        %1155 = vmatpush1.msra.mxu0 0.0
        %1156 = vmatprep.subr.mxu0 0.0
        %1157 = vmatpush1.msra.mxu0 0.0
        %1158 = vmatprep.subr.mxu0 0.0
        %1159 = vmatpush1.msra.mxu0 0.0
        %1160 = vmatprep.subr.mxu0 0.0
        %1161 = vmatpush1.msra.mxu0 0.0
        %1162 = vmatprep.subr.mxu0 0.0
        %1163 = vmatpush1.msra.mxu0 0.0
        %1164 = vmatprep.subr.mxu0 0.0
        %1165 = vmatpush1.msra.mxu0 0.0
        %1166 = vmatprep.subr.mxu0 0.0
        %1167 = vmatpush1.msra.mxu0 0.0
        %1168 = vmatprep.subr.mxu0 0.0
        %1169 = vmatpush1.msra.mxu0 0.0
        %1170 = vmatprep.subr.mxu0 0.0
        %1171 = vmatpush1.msra.mxu0 0.0
        %1172 = vmatprep.subr.mxu0 0.0
        %1173 = vmatpush1.msra.mxu0 0.0
        %1174 = vmatprep.subr.mxu0 0.0
        %1175 = vmatpush1.msra.mxu0 0.0
        %1176 = vmatprep.subr.mxu0 0.0
        %1177 = vmatpush1.msra.mxu0 0.0
        %1178 = vmatprep.subr.mxu0 0.0
        %1179 = vmatpush1.msra.mxu0 0.0
        %1180 = vmatprep.subr.mxu0 0.0
        %1181 = vmatpush1.msra.mxu0 0.0
        %1182 = vmatprep.subr.mxu0 0.0
        %1183 = vmatpush1.msra.mxu0 0.0
        %1184 = vmatprep.subr.mxu0 0.0
        %1185 = vmatpush1.msra.mxu0 0.0
        %1186 = vmatprep.subr.mxu0 0.0
        %1187 = vmatpush1.msra.mxu0 0.0
        %1188 = vmatprep.subr.mxu0 0.0
        %1189 = vmatpush1.msra.mxu0 0.0
        %1190 = vmatprep.subr.mxu0 0.0
        %1191 = vmatpush1.msra.mxu0 0.0
        %1192 = vmatprep.subr.mxu0 0.0
        %1193 = vmatpush1.msra.mxu0 0.0
        %1194 = vmatprep.subr.mxu0 0.0
        %1195 = vmatpush1.msra.mxu0 0.0
        %1196 = vmatprep.subr.mxu0 0.0
        %1197 = vmatpush1.msra.mxu0 0.0
        %1198 = vmatprep.subr.mxu0 0.0
        %1199 = vmatpush1.msra.mxu0 0.0
        %1200 = vmatprep.subr.mxu0 0.0
        %1201 = vmatpush1.msra.mxu0 0.0
        %1202 = vmatprep.subr.mxu0 0.0
        %1203 = vmatpush1.msra.mxu0 0.0
        %1204 = vmatprep.subr.mxu0 0.0
        %1205 = vmatpush1.msra.mxu0 0.0
        %1206 = vmatprep.subr.mxu0 0.0
        %1207 = vmatpush1.msra.mxu0 0.0
        %1208 = vmatprep.subr.mxu0 0.0
        %1209 = vmatpush1.msra.mxu0 0.0
        %1210 = vmatprep.subr.mxu0 0.0
        %1211 = vmatpush1.msra.mxu0 0.0
        %1212 = vmatprep.subr.mxu0 0.0
        %1213 = vmatpush1.msra.mxu0 0.0
        %1214 = vmatprep.mubr.f32.mxu0 0.0
        %1215 = vmatmul.mubr.f32.gmra.mrb[0].mxu0 %v1148
        %v1216 = vpop.f32.mrb[0].mxu0
        %v1217 = vadd.f32 0.0, %v1216
        %v1218 = vpop.f32.mrb[0].mxu0
        %1219 = vdwg.mxu0
        %1220 = vrot.lane.b32.xlu0 %v390, 64
        %v1221 = vpop.permute.xlu0 %1220
        %v1224 = vsel %vm434, %v1137, 0
        %1226 = vmatprep.subr.mxu0 0.0
        %1227 = vmatpush1.msra.mxu0 %v1221
        %1228 = vmatprep.subr.mxu0 0.0
        %1229 = vmatpush1.msra.mxu0 0.0
        %1230 = vmatprep.subr.mxu0 0.0
        %1231 = vmatpush1.msra.mxu0 0.0
        %1232 = vmatprep.subr.mxu0 0.0
        %1233 = vmatpush1.msra.mxu0 0.0
        %1234 = vmatprep.subr.mxu0 0.0
        %1235 = vmatpush1.msra.mxu0 0.0
        %1236 = vmatprep.subr.mxu0 0.0
        %1237 = vmatpush1.msra.mxu0 0.0
        %1238 = vmatprep.subr.mxu0 0.0
        %1239 = vmatpush1.msra.mxu0 0.0
        %1240 = vmatprep.subr.mxu0 0.0
        %1241 = vmatpush1.msra.mxu0 0.0
        %1242 = vmatprep.subr.mxu0 0.0
        %1243 = vmatpush1.msra.mxu0 0.0
        %1244 = vmatprep.subr.mxu0 0.0
        %1245 = vmatpush1.msra.mxu0 0.0
        %1246 = vmatprep.subr.mxu0 0.0
        %1247 = vmatpush1.msra.mxu0 0.0
        %1248 = vmatprep.subr.mxu0 0.0
        %1249 = vmatpush1.msra.mxu0 0.0
        %1250 = vmatprep.subr.mxu0 0.0
        %1251 = vmatpush1.msra.mxu0 0.0
        %1252 = vmatprep.subr.mxu0 0.0
        %1253 = vmatpush1.msra.mxu0 0.0
        %1254 = vmatprep.subr.mxu0 0.0
        %1255 = vmatpush1.msra.mxu0 0.0
        %1256 = vmatprep.subr.mxu0 0.0
        %1257 = vmatpush1.msra.mxu0 0.0
        %1258 = vmatprep.subr.mxu0 0.0
        %1259 = vmatpush1.msra.mxu0 0.0
        %1260 = vmatprep.subr.mxu0 0.0
        %1261 = vmatpush1.msra.mxu0 0.0
        %1262 = vmatprep.subr.mxu0 0.0
        %1263 = vmatpush1.msra.mxu0 0.0
        %1264 = vmatprep.subr.mxu0 0.0
        %1265 = vmatpush1.msra.mxu0 0.0
        %1266 = vmatprep.subr.mxu0 0.0
        %1267 = vmatpush1.msra.mxu0 0.0
        %1268 = vmatprep.subr.mxu0 0.0
        %1269 = vmatpush1.msra.mxu0 0.0
        %1270 = vmatprep.subr.mxu0 0.0
        %1271 = vmatpush1.msra.mxu0 0.0
        %1272 = vmatprep.subr.mxu0 0.0
        %1273 = vmatpush1.msra.mxu0 0.0
        %1274 = vmatprep.subr.mxu0 0.0
        %1275 = vmatpush1.msra.mxu0 0.0
        %1276 = vmatprep.subr.mxu0 0.0
        %1277 = vmatpush1.msra.mxu0 0.0
        %1278 = vmatprep.subr.mxu0 0.0
        %1279 = vmatpush1.msra.mxu0 0.0
        %1280 = vmatprep.subr.mxu0 0.0
        %1281 = vmatpush1.msra.mxu0 0.0
        %1282 = vmatprep.subr.mxu0 0.0
        %1283 = vmatpush1.msra.mxu0 0.0
        %1284 = vmatprep.subr.mxu0 0.0
        %1285 = vmatpush1.msra.mxu0 0.0
        %1286 = vmatprep.subr.mxu0 0.0
        %1287 = vmatpush1.msra.mxu0 0.0
        %1288 = vmatprep.subr.mxu0 0.0
        %1289 = vmatpush1.msra.mxu0 0.0
        %1290 = vmatprep.mubr.f32.mxu0 0.0
        %1291 = vmatmul.mubr.f32.gmra.mrb[0].mxu0 %v1224
        %v1292 = vpop.f32.mrb[0].mxu0
        %v1293 = vadd.f32 0.0, %v1292
        %v1294 = vpop.f32.mrb[0].mxu0
        %1295 = vdwg.mxu0
        %1296 = vrot.lane.b32.xlu0 %v395, 64
        %v1297 = vpop.permute.xlu0 %1296
        %v1300 = vsel %vm434, %v1138, 0
        %1302 = vmatprep.subr.mxu0 0.0
        %1303 = vmatpush1.msra.mxu0 %v1297
        %1304 = vmatprep.subr.mxu0 0.0
        %1305 = vmatpush1.msra.mxu0 0.0
        %1306 = vmatprep.subr.mxu0 0.0
        %1307 = vmatpush1.msra.mxu0 0.0
        %1308 = vmatprep.subr.mxu0 0.0
        %1309 = vmatpush1.msra.mxu0 0.0
        %1310 = vmatprep.subr.mxu0 0.0
        %1311 = vmatpush1.msra.mxu0 0.0
        %1312 = vmatprep.subr.mxu0 0.0
        %1313 = vmatpush1.msra.mxu0 0.0
        %1314 = vmatprep.subr.mxu0 0.0
        %1315 = vmatpush1.msra.mxu0 0.0
        %1316 = vmatprep.subr.mxu0 0.0
        %1317 = vmatpush1.msra.mxu0 0.0
        %1318 = vmatprep.subr.mxu0 0.0
        %1319 = vmatpush1.msra.mxu0 0.0
        %1320 = vmatprep.subr.mxu0 0.0
        %1321 = vmatpush1.msra.mxu0 0.0
        %1322 = vmatprep.subr.mxu0 0.0
        %1323 = vmatpush1.msra.mxu0 0.0
        %1324 = vmatprep.subr.mxu0 0.0
        %1325 = vmatpush1.msra.mxu0 0.0
        %1326 = vmatprep.subr.mxu0 0.0
        %1327 = vmatpush1.msra.mxu0 0.0
        %1328 = vmatprep.subr.mxu0 0.0
        %1329 = vmatpush1.msra.mxu0 0.0
        %1330 = vmatprep.subr.mxu0 0.0
        %1331 = vmatpush1.msra.mxu0 0.0
        %1332 = vmatprep.subr.mxu0 0.0
        %1333 = vmatpush1.msra.mxu0 0.0
        %1334 = vmatprep.subr.mxu0 0.0
        %1335 = vmatpush1.msra.mxu0 0.0
        %1336 = vmatprep.subr.mxu0 0.0
        %1337 = vmatpush1.msra.mxu0 0.0
        %1338 = vmatprep.subr.mxu0 0.0
        %1339 = vmatpush1.msra.mxu0 0.0
        %1340 = vmatprep.subr.mxu0 0.0
        %1341 = vmatpush1.msra.mxu0 0.0
        %1342 = vmatprep.subr.mxu0 0.0
        %1343 = vmatpush1.msra.mxu0 0.0
        %1344 = vmatprep.subr.mxu0 0.0
        %1345 = vmatpush1.msra.mxu0 0.0
        %1346 = vmatprep.subr.mxu0 0.0
        %1347 = vmatpush1.msra.mxu0 0.0
        %1348 = vmatprep.subr.mxu0 0.0
        %1349 = vmatpush1.msra.mxu0 0.0
        %1350 = vmatprep.subr.mxu0 0.0
        %1351 = vmatpush1.msra.mxu0 0.0
        %1352 = vmatprep.subr.mxu0 0.0
        %1353 = vmatpush1.msra.mxu0 0.0
        %1354 = vmatprep.subr.mxu0 0.0
        %1355 = vmatpush1.msra.mxu0 0.0
        %1356 = vmatprep.subr.mxu0 0.0
        %1357 = vmatpush1.msra.mxu0 0.0
        %1358 = vmatprep.subr.mxu0 0.0
        %1359 = vmatpush1.msra.mxu0 0.0
        %1360 = vmatprep.subr.mxu0 0.0
        %1361 = vmatpush1.msra.mxu0 0.0
        %1362 = vmatprep.subr.mxu0 0.0
        %1363 = vmatpush1.msra.mxu0 0.0
        %1364 = vmatprep.subr.mxu0 0.0
        %1365 = vmatpush1.msra.mxu0 0.0
        %1366 = vmatprep.mubr.f32.mxu0 0.0
        %1367 = vmatmul.mubr.f32.gmra.mrb[0].mxu0 %v1300
        %v1368 = vpop.f32.mrb[0].mxu0
        %v1369 = vadd.f32 0.0, %v1368
        %v1370 = vpop.f32.mrb[0].mxu0
        %1371 = vdwg.mxu0
        %1372 = vrot.lane.b32.xlu0 %v400, 64
        %v1373 = vpop.permute.xlu0 %1372
        %v1376 = vsel %vm434, %v1139, 0
        %1378 = vmatprep.subr.mxu0 0.0
        %1379 = vmatpush1.msra.mxu0 %v1373
        %1380 = vmatprep.subr.mxu0 0.0
        %1381 = vmatpush1.msra.mxu0 0.0
        %1382 = vmatprep.subr.mxu0 0.0
        %1383 = vmatpush1.msra.mxu0 0.0
        %1384 = vmatprep.subr.mxu0 0.0
        %1385 = vmatpush1.msra.mxu0 0.0
        %1386 = vmatprep.subr.mxu0 0.0
        %1387 = vmatpush1.msra.mxu0 0.0
        %1388 = vmatprep.subr.mxu0 0.0
        %1389 = vmatpush1.msra.mxu0 0.0
        %1390 = vmatprep.subr.mxu0 0.0
        %1391 = vmatpush1.msra.mxu0 0.0
        %1392 = vmatprep.subr.mxu0 0.0
        %1393 = vmatpush1.msra.mxu0 0.0
        %1394 = vmatprep.subr.mxu0 0.0
        %1395 = vmatpush1.msra.mxu0 0.0
        %1396 = vmatprep.subr.mxu0 0.0
        %1397 = vmatpush1.msra.mxu0 0.0
        %1398 = vmatprep.subr.mxu0 0.0
        %1399 = vmatpush1.msra.mxu0 0.0
        %1400 = vmatprep.subr.mxu0 0.0
        %1401 = vmatpush1.msra.mxu0 0.0
        %1402 = vmatprep.subr.mxu0 0.0
        %1403 = vmatpush1.msra.mxu0 0.0
        %1404 = vmatprep.subr.mxu0 0.0
        %1405 = vmatpush1.msra.mxu0 0.0
        %1406 = vmatprep.subr.mxu0 0.0
        %1407 = vmatpush1.msra.mxu0 0.0
        %1408 = vmatprep.subr.mxu0 0.0
        %1409 = vmatpush1.msra.mxu0 0.0
        %1410 = vmatprep.subr.mxu0 0.0
        %1411 = vmatpush1.msra.mxu0 0.0
        %1412 = vmatprep.subr.mxu0 0.0
        %1413 = vmatpush1.msra.mxu0 0.0
        %1414 = vmatprep.subr.mxu0 0.0
        %1415 = vmatpush1.msra.mxu0 0.0
        %1416 = vmatprep.subr.mxu0 0.0
        %1417 = vmatpush1.msra.mxu0 0.0
        %1418 = vmatprep.subr.mxu0 0.0
        %1419 = vmatpush1.msra.mxu0 0.0
        %1420 = vmatprep.subr.mxu0 0.0
        %1421 = vmatpush1.msra.mxu0 0.0
        %1422 = vmatprep.subr.mxu0 0.0
        %1423 = vmatpush1.msra.mxu0 0.0
        %1424 = vmatprep.subr.mxu0 0.0
        %1425 = vmatpush1.msra.mxu0 0.0
        %1426 = vmatprep.subr.mxu0 0.0
        %1427 = vmatpush1.msra.mxu0 0.0
        %1428 = vmatprep.subr.mxu0 0.0
        %1429 = vmatpush1.msra.mxu0 0.0
        %1430 = vmatprep.subr.mxu0 0.0
        %1431 = vmatpush1.msra.mxu0 0.0
        %1432 = vmatprep.subr.mxu0 0.0
        %1433 = vmatpush1.msra.mxu0 0.0
        %1434 = vmatprep.subr.mxu0 0.0
        %1435 = vmatpush1.msra.mxu0 0.0
        %1436 = vmatprep.subr.mxu0 0.0
        %1437 = vmatpush1.msra.mxu0 0.0
        %1438 = vmatprep.subr.mxu0 0.0
        %1439 = vmatpush1.msra.mxu0 0.0
        %1440 = vmatprep.subr.mxu0 0.0
        %1441 = vmatpush1.msra.mxu0 0.0
        %1442 = vmatprep.mubr.f32.mxu0 0.0
        %1443 = vmatmul.mubr.f32.gmra.mrb[0].mxu0 %v1376
        %v1444 = vpop.f32.mrb[0].mxu0
        %v1445 = vadd.f32 0.0, %v1444
        %v1446 = vpop.f32.mrb[0].mxu0
        %1447 = vdwg.mxu0
        %1448 = vrot.lane.b32.xlu0 %v405, 64
        %v1449 = vpop.permute.xlu0 %1448
        %v1452 = vsel %vm434, %v1140, 0
        %1454 = vmatprep.subr.mxu0 0.0
        %1455 = vmatpush1.msra.mxu0 %v1449
        %1456 = vmatprep.subr.mxu0 0.0
        %1457 = vmatpush1.msra.mxu0 0.0
        %1458 = vmatprep.subr.mxu0 0.0
        %1459 = vmatpush1.msra.mxu0 0.0
        %1460 = vmatprep.subr.mxu0 0.0
        %1461 = vmatpush1.msra.mxu0 0.0
        %1462 = vmatprep.subr.mxu0 0.0
        %1463 = vmatpush1.msra.mxu0 0.0
        %1464 = vmatprep.subr.mxu0 0.0
        %1465 = vmatpush1.msra.mxu0 0.0
        %1466 = vmatprep.subr.mxu0 0.0
        %1467 = vmatpush1.msra.mxu0 0.0
        %1468 = vmatprep.subr.mxu0 0.0
        %1469 = vmatpush1.msra.mxu0 0.0
        %1470 = vmatprep.subr.mxu0 0.0
        %1471 = vmatpush1.msra.mxu0 0.0
        %1472 = vmatprep.subr.mxu0 0.0
        %1473 = vmatpush1.msra.mxu0 0.0
        %1474 = vmatprep.subr.mxu0 0.0
        %1475 = vmatpush1.msra.mxu0 0.0
        %1476 = vmatprep.subr.mxu0 0.0
        %1477 = vmatpush1.msra.mxu0 0.0
        %1478 = vmatprep.subr.mxu0 0.0
        %1479 = vmatpush1.msra.mxu0 0.0
        %1480 = vmatprep.subr.mxu0 0.0
        %1481 = vmatpush1.msra.mxu0 0.0
        %1482 = vmatprep.subr.mxu0 0.0
        %1483 = vmatpush1.msra.mxu0 0.0
        %1484 = vmatprep.subr.mxu0 0.0
        %1485 = vmatpush1.msra.mxu0 0.0
        %1486 = vmatprep.subr.mxu0 0.0
        %1487 = vmatpush1.msra.mxu0 0.0
        %1488 = vmatprep.subr.mxu0 0.0
        %1489 = vmatpush1.msra.mxu0 0.0
        %1490 = vmatprep.subr.mxu0 0.0
        %1491 = vmatpush1.msra.mxu0 0.0
        %1492 = vmatprep.subr.mxu0 0.0
        %1493 = vmatpush1.msra.mxu0 0.0
        %1494 = vmatprep.subr.mxu0 0.0
        %1495 = vmatpush1.msra.mxu0 0.0
        %1496 = vmatprep.subr.mxu0 0.0
        %1497 = vmatpush1.msra.mxu0 0.0
        %1498 = vmatprep.subr.mxu0 0.0
        %1499 = vmatpush1.msra.mxu0 0.0
        %1500 = vmatprep.subr.mxu0 0.0
        %1501 = vmatpush1.msra.mxu0 0.0
        %1502 = vmatprep.subr.mxu0 0.0
        %1503 = vmatpush1.msra.mxu0 0.0
        %1504 = vmatprep.subr.mxu0 0.0
        %1505 = vmatpush1.msra.mxu0 0.0
        %1506 = vmatprep.subr.mxu0 0.0
        %1507 = vmatpush1.msra.mxu0 0.0
        %1508 = vmatprep.subr.mxu0 0.0
        %1509 = vmatpush1.msra.mxu0 0.0
        %1510 = vmatprep.subr.mxu0 0.0
        %1511 = vmatpush1.msra.mxu0 0.0
        %1512 = vmatprep.subr.mxu0 0.0
        %1513 = vmatpush1.msra.mxu0 0.0
        %1514 = vmatprep.subr.mxu0 0.0
        %1515 = vmatpush1.msra.mxu0 0.0
        %1516 = vmatprep.subr.mxu0 0.0
        %1517 = vmatpush1.msra.mxu0 0.0
        %1518 = vmatprep.mubr.f32.mxu0 0.0
        %1519 = vmatmul.mubr.f32.gmra.mrb[0].mxu0 %v1452
        %v1520 = vpop.f32.mrb[0].mxu0
        %v1521 = vadd.f32 0.0, %v1520
        %v1522 = vpop.f32.mrb[0].mxu0
        %1523 = vdwg.mxu0
        %1524 = vrot.lane.b32.xlu0 %v410, 64
        %v1525 = vpop.permute.xlu0 %1524
        %v1528 = vsel %vm434, %v1141, 0
        %1530 = vmatprep.subr.mxu0 0.0
        %1531 = vmatpush1.msra.mxu0 %v1525
        %1532 = vmatprep.subr.mxu0 0.0
        %1533 = vmatpush1.msra.mxu0 0.0
        %1534 = vmatprep.subr.mxu0 0.0
        %1535 = vmatpush1.msra.mxu0 0.0
        %1536 = vmatprep.subr.mxu0 0.0
        %1537 = vmatpush1.msra.mxu0 0.0
        %1538 = vmatprep.subr.mxu0 0.0
        %1539 = vmatpush1.msra.mxu0 0.0
        %1540 = vmatprep.subr.mxu0 0.0
        %1541 = vmatpush1.msra.mxu0 0.0
        %1542 = vmatprep.subr.mxu0 0.0
        %1543 = vmatpush1.msra.mxu0 0.0
        %1544 = vmatprep.subr.mxu0 0.0
        %1545 = vmatpush1.msra.mxu0 0.0
        %1546 = vmatprep.subr.mxu0 0.0
        %1547 = vmatpush1.msra.mxu0 0.0
        %1548 = vmatprep.subr.mxu0 0.0
        %1549 = vmatpush1.msra.mxu0 0.0
        %1550 = vmatprep.subr.mxu0 0.0
        %1551 = vmatpush1.msra.mxu0 0.0
        %1552 = vmatprep.subr.mxu0 0.0
        %1553 = vmatpush1.msra.mxu0 0.0
        %1554 = vmatprep.subr.mxu0 0.0
        %1555 = vmatpush1.msra.mxu0 0.0
        %1556 = vmatprep.subr.mxu0 0.0
        %1557 = vmatpush1.msra.mxu0 0.0
        %1558 = vmatprep.subr.mxu0 0.0
        %1559 = vmatpush1.msra.mxu0 0.0
        %1560 = vmatprep.subr.mxu0 0.0
        %1561 = vmatpush1.msra.mxu0 0.0
        %1562 = vmatprep.subr.mxu0 0.0
        %1563 = vmatpush1.msra.mxu0 0.0
        %1564 = vmatprep.subr.mxu0 0.0
        %1565 = vmatpush1.msra.mxu0 0.0
        %1566 = vmatprep.subr.mxu0 0.0
        %1567 = vmatpush1.msra.mxu0 0.0
        %1568 = vmatprep.subr.mxu0 0.0
        %1569 = vmatpush1.msra.mxu0 0.0
        %1570 = vmatprep.subr.mxu0 0.0
        %1571 = vmatpush1.msra.mxu0 0.0
        %1572 = vmatprep.subr.mxu0 0.0
        %1573 = vmatpush1.msra.mxu0 0.0
        %1574 = vmatprep.subr.mxu0 0.0
        %1575 = vmatpush1.msra.mxu0 0.0
        %1576 = vmatprep.subr.mxu0 0.0
        %1577 = vmatpush1.msra.mxu0 0.0
        %1578 = vmatprep.subr.mxu0 0.0
        %1579 = vmatpush1.msra.mxu0 0.0
        %1580 = vmatprep.subr.mxu0 0.0
        %1581 = vmatpush1.msra.mxu0 0.0
        %1582 = vmatprep.subr.mxu0 0.0
        %1583 = vmatpush1.msra.mxu0 0.0
        %1584 = vmatprep.subr.mxu0 0.0
        %1585 = vmatpush1.msra.mxu0 0.0
        %1586 = vmatprep.subr.mxu0 0.0
        %1587 = vmatpush1.msra.mxu0 0.0
        %1588 = vmatprep.subr.mxu0 0.0
        %1589 = vmatpush1.msra.mxu0 0.0
        %1590 = vmatprep.subr.mxu0 0.0
        %1591 = vmatpush1.msra.mxu0 0.0
        %1592 = vmatprep.subr.mxu0 0.0
        %1593 = vmatpush1.msra.mxu0 0.0
        %1594 = vmatprep.mubr.f32.mxu0 0.0
        %1595 = vmatmul.mubr.f32.gmra.mrb[0].mxu0 %v1528
        %v1596 = vpop.f32.mrb[0].mxu0
        %v1597 = vadd.f32 0.0, %v1596
        %v1598 = vpop.f32.mrb[0].mxu0
        %1599 = vdwg.mxu0
        %1600 = vrot.lane.b32.xlu0 %v415, 64
        %v1601 = vpop.permute.xlu0 %1600
        %v1604 = vsel %vm434, %v1142, 0
        %1606 = vmatprep.subr.mxu0 0.0
        %1607 = vmatpush1.msra.mxu0 %v1601
        %1608 = vmatprep.subr.mxu0 0.0
        %1609 = vmatpush1.msra.mxu0 0.0
        %1610 = vmatprep.subr.mxu0 0.0
        %1611 = vmatpush1.msra.mxu0 0.0
        %1612 = vmatprep.subr.mxu0 0.0
        %1613 = vmatpush1.msra.mxu0 0.0
        %1614 = vmatprep.subr.mxu0 0.0
        %1615 = vmatpush1.msra.mxu0 0.0
        %1616 = vmatprep.subr.mxu0 0.0
        %1617 = vmatpush1.msra.mxu0 0.0
        %1618 = vmatprep.subr.mxu0 0.0
        %1619 = vmatpush1.msra.mxu0 0.0
        %1620 = vmatprep.subr.mxu0 0.0
        %1621 = vmatpush1.msra.mxu0 0.0
        %1622 = vmatprep.subr.mxu0 0.0
        %1623 = vmatpush1.msra.mxu0 0.0
        %1624 = vmatprep.subr.mxu0 0.0
        %1625 = vmatpush1.msra.mxu0 0.0
        %1626 = vmatprep.subr.mxu0 0.0
        %1627 = vmatpush1.msra.mxu0 0.0
        %1628 = vmatprep.subr.mxu0 0.0
        %1629 = vmatpush1.msra.mxu0 0.0
        %1630 = vmatprep.subr.mxu0 0.0
        %1631 = vmatpush1.msra.mxu0 0.0
        %1632 = vmatprep.subr.mxu0 0.0
        %1633 = vmatpush1.msra.mxu0 0.0
        %1634 = vmatprep.subr.mxu0 0.0
        %1635 = vmatpush1.msra.mxu0 0.0
        %1636 = vmatprep.subr.mxu0 0.0
        %1637 = vmatpush1.msra.mxu0 0.0
        %1638 = vmatprep.subr.mxu0 0.0
        %1639 = vmatpush1.msra.mxu0 0.0
        %1640 = vmatprep.subr.mxu0 0.0
        %1641 = vmatpush1.msra.mxu0 0.0
        %1642 = vmatprep.subr.mxu0 0.0
        %1643 = vmatpush1.msra.mxu0 0.0
        %1644 = vmatprep.subr.mxu0 0.0
        %1645 = vmatpush1.msra.mxu0 0.0
        %1646 = vmatprep.subr.mxu0 0.0
        %1647 = vmatpush1.msra.mxu0 0.0
        %1648 = vmatprep.subr.mxu0 0.0
        %1649 = vmatpush1.msra.mxu0 0.0
        %1650 = vmatprep.subr.mxu0 0.0
        %1651 = vmatpush1.msra.mxu0 0.0
        %1652 = vmatprep.subr.mxu0 0.0
        %1653 = vmatpush1.msra.mxu0 0.0
        %1654 = vmatprep.subr.mxu0 0.0
        %1655 = vmatpush1.msra.mxu0 0.0
        %1656 = vmatprep.subr.mxu0 0.0
        %1657 = vmatpush1.msra.mxu0 0.0
        %1658 = vmatprep.subr.mxu0 0.0
        %1659 = vmatpush1.msra.mxu0 0.0
        %1660 = vmatprep.subr.mxu0 0.0
        %1661 = vmatpush1.msra.mxu0 0.0
        %1662 = vmatprep.subr.mxu0 0.0
        %1663 = vmatpush1.msra.mxu0 0.0
        %1664 = vmatprep.subr.mxu0 0.0
        %1665 = vmatpush1.msra.mxu0 0.0
        %1666 = vmatprep.subr.mxu0 0.0
        %1667 = vmatpush1.msra.mxu0 0.0
        %1668 = vmatprep.subr.mxu0 0.0
        %1669 = vmatpush1.msra.mxu0 0.0
        %1670 = vmatprep.mubr.f32.mxu0 0.0
        %1671 = vmatmul.mubr.f32.gmra.mrb[0].mxu0 %v1604
        %v1672 = vpop.f32.mrb[0].mxu0
        %v1673 = vadd.f32 0.0, %v1672
        %v1674 = vpop.f32.mrb[0].mxu0
        %1675 = vdwg.mxu0
        %1676 = vrot.lane.b32.xlu0 %v420, 64
        %v1677 = vpop.permute.xlu0 %1676
        %v1680 = vsel %vm434, %v1143, 0
        %1682 = vmatprep.subr.mxu0 0.0
        %1683 = vmatpush1.msra.mxu0 %v1677
        %1684 = vmatprep.subr.mxu0 0.0
        %1685 = vmatpush1.msra.mxu0 0.0
        %1686 = vmatprep.subr.mxu0 0.0
        %1687 = vmatpush1.msra.mxu0 0.0
        %1688 = vmatprep.subr.mxu0 0.0
        %1689 = vmatpush1.msra.mxu0 0.0
        %1690 = vmatprep.subr.mxu0 0.0
        %1691 = vmatpush1.msra.mxu0 0.0
        %1692 = vmatprep.subr.mxu0 0.0
        %1693 = vmatpush1.msra.mxu0 0.0
        %1694 = vmatprep.subr.mxu0 0.0
        %1695 = vmatpush1.msra.mxu0 0.0
        %1696 = vmatprep.subr.mxu0 0.0
        %1697 = vmatpush1.msra.mxu0 0.0
        %1698 = vmatprep.subr.mxu0 0.0
        %1699 = vmatpush1.msra.mxu0 0.0
        %1700 = vmatprep.subr.mxu0 0.0
        %1701 = vmatpush1.msra.mxu0 0.0
        %1702 = vmatprep.subr.mxu0 0.0
        %1703 = vmatpush1.msra.mxu0 0.0
        %1704 = vmatprep.subr.mxu0 0.0
        %1705 = vmatpush1.msra.mxu0 0.0
        %1706 = vmatprep.subr.mxu0 0.0
        %1707 = vmatpush1.msra.mxu0 0.0
        %1708 = vmatprep.subr.mxu0 0.0
        %1709 = vmatpush1.msra.mxu0 0.0
        %1710 = vmatprep.subr.mxu0 0.0
        %1711 = vmatpush1.msra.mxu0 0.0
        %1712 = vmatprep.subr.mxu0 0.0
        %1713 = vmatpush1.msra.mxu0 0.0
        %1714 = vmatprep.subr.mxu0 0.0
        %1715 = vmatpush1.msra.mxu0 0.0
        %1716 = vmatprep.subr.mxu0 0.0
        %1717 = vmatpush1.msra.mxu0 0.0
        %1718 = vmatprep.subr.mxu0 0.0
        %1719 = vmatpush1.msra.mxu0 0.0
        %1720 = vmatprep.subr.mxu0 0.0
        %1721 = vmatpush1.msra.mxu0 0.0
        %1722 = vmatprep.subr.mxu0 0.0
        %1723 = vmatpush1.msra.mxu0 0.0
        %1724 = vmatprep.subr.mxu0 0.0
        %1725 = vmatpush1.msra.mxu0 0.0
        %1726 = vmatprep.subr.mxu0 0.0
        %1727 = vmatpush1.msra.mxu0 0.0
        %1728 = vmatprep.subr.mxu0 0.0
        %1729 = vmatpush1.msra.mxu0 0.0
        %1730 = vmatprep.subr.mxu0 0.0
        %1731 = vmatpush1.msra.mxu0 0.0
        %1732 = vmatprep.subr.mxu0 0.0
        %1733 = vmatpush1.msra.mxu0 0.0
        %1734 = vmatprep.subr.mxu0 0.0
        %1735 = vmatpush1.msra.mxu0 0.0
        %1736 = vmatprep.subr.mxu0 0.0
        %1737 = vmatpush1.msra.mxu0 0.0
        %1738 = vmatprep.subr.mxu0 0.0
        %1739 = vmatpush1.msra.mxu0 0.0
        %1740 = vmatprep.subr.mxu0 0.0
        %1741 = vmatpush1.msra.mxu0 0.0
        %1742 = vmatprep.subr.mxu0 0.0
        %1743 = vmatpush1.msra.mxu0 0.0
        %1744 = vmatprep.subr.mxu0 0.0
        %1745 = vmatpush1.msra.mxu0 0.0
        %1746 = vmatprep.mubr.f32.mxu0 0.0
        %1747 = vmatmul.mubr.f32.gmra.mrb[0].mxu0 %v1680
        %v1748 = vpop.f32.mrb[0].mxu0
        %v1749 = vadd.f32 0.0, %v1748
        %v1750 = vpop.f32.mrb[0].mxu0
        %1751 = vdwg.mxu0
        %1752 = vrot.lane.b32.xlu0 %v423, 120
        %v1753 = vpop.permute.xlu0 %1752
        %1754 = vrot.lane.b32.xlu0 %v385, 88
        %v1755 = vpop.permute.xlu0 %1754
        %v1756 = vsel %vm434, %v1753, 0
        %v1758 = vsel %vm434, %v1755, 0
        %1760 = vmatprep.subr.mxu0 0.0
        %1761 = vmatpush1.xpose.msra.mxu0 %v1758
        %1762 = vmatprep.subr.mxu0 0.0
        %1763 = vmatpush1.xpose.msra.mxu0 0.0
        %1764 = vmatprep.subr.mxu0 0.0
        %1765 = vmatpush1.xpose.msra.mxu0 0.0
        %1766 = vmatprep.subr.mxu0 0.0
        %1767 = vmatpush1.xpose.msra.mxu0 0.0
        %1768 = vmatprep.subr.mxu0 0.0
        %1769 = vmatpush1.xpose.msra.mxu0 0.0
        %1770 = vmatprep.subr.mxu0 0.0
        %1771 = vmatpush1.xpose.msra.mxu0 0.0
        %1772 = vmatprep.subr.mxu0 0.0
        %1773 = vmatpush1.xpose.msra.mxu0 0.0
        %1774 = vmatprep.subr.mxu0 0.0
        %1775 = vmatpush1.xpose.msra.mxu0 0.0
        %1776 = vmatprep.subr.mxu0 0.0
        %1777 = vmatpush1.xpose.msra.mxu0 0.0
        %1778 = vmatprep.subr.mxu0 0.0
        %1779 = vmatpush1.xpose.msra.mxu0 0.0
        %1780 = vmatprep.subr.mxu0 0.0
        %1781 = vmatpush1.xpose.msra.mxu0 0.0
        %1782 = vmatprep.subr.mxu0 0.0
        %1783 = vmatpush1.xpose.msra.mxu0 0.0
        %1784 = vmatprep.subr.mxu0 0.0
        %1785 = vmatpush1.xpose.msra.mxu0 0.0
        %1786 = vmatprep.subr.mxu0 0.0
        %1787 = vmatpush1.xpose.msra.mxu0 0.0
        %1788 = vmatprep.subr.mxu0 0.0
        %1789 = vmatpush1.xpose.msra.mxu0 0.0
        %1790 = vmatprep.subr.mxu0 0.0
        %1791 = vmatpush1.xpose.msra.mxu0 0.0
        %1792 = vmatprep.subr.mxu0 0.0
        %1793 = vmatpush1.xpose.msra.mxu0 0.0
        %1794 = vmatprep.subr.mxu0 0.0
        %1795 = vmatpush1.xpose.msra.mxu0 0.0
        %1796 = vmatprep.subr.mxu0 0.0
        %1797 = vmatpush1.xpose.msra.mxu0 0.0
        %1798 = vmatprep.subr.mxu0 0.0
        %1799 = vmatpush1.xpose.msra.mxu0 0.0
        %1800 = vmatprep.subr.mxu0 0.0
        %1801 = vmatpush1.xpose.msra.mxu0 0.0
        %1802 = vmatprep.subr.mxu0 0.0
        %1803 = vmatpush1.xpose.msra.mxu0 0.0
        %1804 = vmatprep.subr.mxu0 0.0
        %1805 = vmatpush1.xpose.msra.mxu0 0.0
        %1806 = vmatprep.subr.mxu0 0.0
        %1807 = vmatpush1.xpose.msra.mxu0 0.0
        %1808 = vmatprep.subr.mxu0 0.0
        %1809 = vmatpush1.xpose.msra.mxu0 0.0
        %1810 = vmatprep.subr.mxu0 0.0
        %1811 = vmatpush1.xpose.msra.mxu0 0.0
        %1812 = vmatprep.subr.mxu0 0.0
        %1813 = vmatpush1.xpose.msra.mxu0 0.0
        %1814 = vmatprep.subr.mxu0 0.0
        %1815 = vmatpush1.xpose.msra.mxu0 0.0
        %1816 = vmatprep.subr.mxu0 0.0
        %1817 = vmatpush1.xpose.msra.mxu0 0.0
        %1818 = vmatprep.subr.mxu0 0.0
        %1819 = vmatpush1.xpose.msra.mxu0 0.0
        %1820 = vmatprep.subr.mxu0 0.0
        %1821 = vmatpush1.xpose.msra.mxu0 0.0
        %1822 = vmatprep.subr.mxu0 0.0
        %1823 = vmatpush1.xpose.msra.mxu0 0.0
        %1824 = vmatprep.mubr.f32.mxu0 0.0
        %1825 = vmatmul.mubr.f32.gmra.mrb[0].mxu0 %v1756
        %v1826 = vpop.f32.mrb[0].mxu0
        %v1827 = vadd.f32 0.0, %v1826
        %v1828 = vpop.f32.mrb[0].mxu0
        %1829 = vdwg.mxu0
        %1830 = vrot.lane.b32.xlu0 %v424, 120
        %v1831 = vpop.permute.xlu0 %1830
        %1832 = vrot.lane.b32.xlu0 %v390, 88
        %v1833 = vpop.permute.xlu0 %1832
        %v1834 = vsel %vm434, %v1831, 0
        %v1836 = vsel %vm434, %v1833, 0
        %1838 = vmatprep.subr.mxu0 0.0
        %1839 = vmatpush1.xpose.msra.mxu0 %v1836
        %1840 = vmatprep.subr.mxu0 0.0
        %1841 = vmatpush1.xpose.msra.mxu0 0.0
        %1842 = vmatprep.subr.mxu0 0.0
        %1843 = vmatpush1.xpose.msra.mxu0 0.0
        %1844 = vmatprep.subr.mxu0 0.0
        %1845 = vmatpush1.xpose.msra.mxu0 0.0
        %1846 = vmatprep.subr.mxu0 0.0
        %1847 = vmatpush1.xpose.msra.mxu0 0.0
        %1848 = vmatprep.subr.mxu0 0.0
        %1849 = vmatpush1.xpose.msra.mxu0 0.0
        %1850 = vmatprep.subr.mxu0 0.0
        %1851 = vmatpush1.xpose.msra.mxu0 0.0
        %1852 = vmatprep.subr.mxu0 0.0
        %1853 = vmatpush1.xpose.msra.mxu0 0.0
        %1854 = vmatprep.subr.mxu0 0.0
        %1855 = vmatpush1.xpose.msra.mxu0 0.0
        %1856 = vmatprep.subr.mxu0 0.0
        %1857 = vmatpush1.xpose.msra.mxu0 0.0
        %1858 = vmatprep.subr.mxu0 0.0
        %1859 = vmatpush1.xpose.msra.mxu0 0.0
        %1860 = vmatprep.subr.mxu0 0.0
        %1861 = vmatpush1.xpose.msra.mxu0 0.0
        %1862 = vmatprep.subr.mxu0 0.0
        %1863 = vmatpush1.xpose.msra.mxu0 0.0
        %1864 = vmatprep.subr.mxu0 0.0
        %1865 = vmatpush1.xpose.msra.mxu0 0.0
        %1866 = vmatprep.subr.mxu0 0.0
        %1867 = vmatpush1.xpose.msra.mxu0 0.0
        %1868 = vmatprep.subr.mxu0 0.0
        %1869 = vmatpush1.xpose.msra.mxu0 0.0
        %1870 = vmatprep.subr.mxu0 0.0
        %1871 = vmatpush1.xpose.msra.mxu0 0.0
        %1872 = vmatprep.subr.mxu0 0.0
        %1873 = vmatpush1.xpose.msra.mxu0 0.0
        %1874 = vmatprep.subr.mxu0 0.0
        %1875 = vmatpush1.xpose.msra.mxu0 0.0
        %1876 = vmatprep.subr.mxu0 0.0
        %1877 = vmatpush1.xpose.msra.mxu0 0.0
        %1878 = vmatprep.subr.mxu0 0.0
        %1879 = vmatpush1.xpose.msra.mxu0 0.0
        %1880 = vmatprep.subr.mxu0 0.0
        %1881 = vmatpush1.xpose.msra.mxu0 0.0
        %1882 = vmatprep.subr.mxu0 0.0
        %1883 = vmatpush1.xpose.msra.mxu0 0.0
        %1884 = vmatprep.subr.mxu0 0.0
        %1885 = vmatpush1.xpose.msra.mxu0 0.0
        %1886 = vmatprep.subr.mxu0 0.0
        %1887 = vmatpush1.xpose.msra.mxu0 0.0
        %1888 = vmatprep.subr.mxu0 0.0
        %1889 = vmatpush1.xpose.msra.mxu0 0.0
        %1890 = vmatprep.subr.mxu0 0.0
        %1891 = vmatpush1.xpose.msra.mxu0 0.0
        %1892 = vmatprep.subr.mxu0 0.0
        %1893 = vmatpush1.xpose.msra.mxu0 0.0
        %1894 = vmatprep.subr.mxu0 0.0
        %1895 = vmatpush1.xpose.msra.mxu0 0.0
        %1896 = vmatprep.subr.mxu0 0.0
        %1897 = vmatpush1.xpose.msra.mxu0 0.0
        %1898 = vmatprep.subr.mxu0 0.0
        %1899 = vmatpush1.xpose.msra.mxu0 0.0
        %1900 = vmatprep.subr.mxu0 0.0
        %1901 = vmatpush1.xpose.msra.mxu0 0.0
        %1902 = vmatprep.mubr.f32.mxu0 0.0
        %1903 = vmatmul.mubr.f32.gmra.mrb[0].mxu0 %v1834
        %v1904 = vpop.f32.mrb[0].mxu0
        %v1905 = vadd.f32 0.0, %v1904
        %v1906 = vpop.f32.mrb[0].mxu0
        %1907 = vdwg.mxu0
        %1908 = vrot.lane.b32.xlu0 %v425, 120
        %v1909 = vpop.permute.xlu0 %1908
        %1910 = vrot.lane.b32.xlu0 %v395, 88
        %v1911 = vpop.permute.xlu0 %1910
        %v1912 = vsel %vm434, %v1909, 0
        %v1914 = vsel %vm434, %v1911, 0
        %1916 = vmatprep.subr.mxu0 0.0
        %1917 = vmatpush1.xpose.msra.mxu0 %v1914
        %1918 = vmatprep.subr.mxu0 0.0
        %1919 = vmatpush1.xpose.msra.mxu0 0.0
        %1920 = vmatprep.subr.mxu0 0.0
        %1921 = vmatpush1.xpose.msra.mxu0 0.0
        %1922 = vmatprep.subr.mxu0 0.0
        %1923 = vmatpush1.xpose.msra.mxu0 0.0
        %1924 = vmatprep.subr.mxu0 0.0
        %1925 = vmatpush1.xpose.msra.mxu0 0.0
        %1926 = vmatprep.subr.mxu0 0.0
        %1927 = vmatpush1.xpose.msra.mxu0 0.0
        %1928 = vmatprep.subr.mxu0 0.0
        %1929 = vmatpush1.xpose.msra.mxu0 0.0
        %1930 = vmatprep.subr.mxu0 0.0
        %1931 = vmatpush1.xpose.msra.mxu0 0.0
        %1932 = vmatprep.subr.mxu0 0.0
        %1933 = vmatpush1.xpose.msra.mxu0 0.0
        %1934 = vmatprep.subr.mxu0 0.0
        %1935 = vmatpush1.xpose.msra.mxu0 0.0
        %1936 = vmatprep.subr.mxu0 0.0
        %1937 = vmatpush1.xpose.msra.mxu0 0.0
        %1938 = vmatprep.subr.mxu0 0.0
        %1939 = vmatpush1.xpose.msra.mxu0 0.0
        %1940 = vmatprep.subr.mxu0 0.0
        %1941 = vmatpush1.xpose.msra.mxu0 0.0
        %1942 = vmatprep.subr.mxu0 0.0
        %1943 = vmatpush1.xpose.msra.mxu0 0.0
        %1944 = vmatprep.subr.mxu0 0.0
        %1945 = vmatpush1.xpose.msra.mxu0 0.0
        %1946 = vmatprep.subr.mxu0 0.0
        %1947 = vmatpush1.xpose.msra.mxu0 0.0
        %1948 = vmatprep.subr.mxu0 0.0
        %1949 = vmatpush1.xpose.msra.mxu0 0.0
        %1950 = vmatprep.subr.mxu0 0.0
        %1951 = vmatpush1.xpose.msra.mxu0 0.0
        %1952 = vmatprep.subr.mxu0 0.0
        %1953 = vmatpush1.xpose.msra.mxu0 0.0
        %1954 = vmatprep.subr.mxu0 0.0
        %1955 = vmatpush1.xpose.msra.mxu0 0.0
        %1956 = vmatprep.subr.mxu0 0.0
        %1957 = vmatpush1.xpose.msra.mxu0 0.0
        %1958 = vmatprep.subr.mxu0 0.0
        %1959 = vmatpush1.xpose.msra.mxu0 0.0
        %1960 = vmatprep.subr.mxu0 0.0
        %1961 = vmatpush1.xpose.msra.mxu0 0.0
        %1962 = vmatprep.subr.mxu0 0.0
        %1963 = vmatpush1.xpose.msra.mxu0 0.0
        %1964 = vmatprep.subr.mxu0 0.0
        %1965 = vmatpush1.xpose.msra.mxu0 0.0
        %1966 = vmatprep.subr.mxu0 0.0
        %1967 = vmatpush1.xpose.msra.mxu0 0.0
        %1968 = vmatprep.subr.mxu0 0.0
        %1969 = vmatpush1.xpose.msra.mxu0 0.0
        %1970 = vmatprep.subr.mxu0 0.0
        %1971 = vmatpush1.xpose.msra.mxu0 0.0
        %1972 = vmatprep.subr.mxu0 0.0
        %1973 = vmatpush1.xpose.msra.mxu0 0.0
        %1974 = vmatprep.subr.mxu0 0.0
        %1975 = vmatpush1.xpose.msra.mxu0 0.0
        %1976 = vmatprep.subr.mxu0 0.0
        %1977 = vmatpush1.xpose.msra.mxu0 0.0
        %1978 = vmatprep.subr.mxu0 0.0
        %1979 = vmatpush1.xpose.msra.mxu0 0.0
        %1980 = vmatprep.mubr.f32.mxu0 0.0
        %1981 = vmatmul.mubr.f32.gmra.mrb[0].mxu0 %v1912
        %v1982 = vpop.f32.mrb[0].mxu0
        %v1983 = vadd.f32 0.0, %v1982
        %v1984 = vpop.f32.mrb[0].mxu0
        %1985 = vdwg.mxu0
        %1986 = vrot.lane.b32.xlu0 %v426, 120
        %v1987 = vpop.permute.xlu0 %1986
        %1988 = vrot.lane.b32.xlu0 %v400, 88
        %v1989 = vpop.permute.xlu0 %1988
        %v1990 = vsel %vm434, %v1987, 0
        %v1992 = vsel %vm434, %v1989, 0
        %1994 = vmatprep.subr.mxu0 0.0
        %1995 = vmatpush1.xpose.msra.mxu0 %v1992
        %1996 = vmatprep.subr.mxu0 0.0
        %1997 = vmatpush1.xpose.msra.mxu0 0.0
        %1998 = vmatprep.subr.mxu0 0.0
        %1999 = vmatpush1.xpose.msra.mxu0 0.0
        %2000 = vmatprep.subr.mxu0 0.0
        %2001 = vmatpush1.xpose.msra.mxu0 0.0
        %2002 = vmatprep.subr.mxu0 0.0
        %2003 = vmatpush1.xpose.msra.mxu0 0.0
        %2004 = vmatprep.subr.mxu0 0.0
        %2005 = vmatpush1.xpose.msra.mxu0 0.0
        %2006 = vmatprep.subr.mxu0 0.0
        %2007 = vmatpush1.xpose.msra.mxu0 0.0
        %2008 = vmatprep.subr.mxu0 0.0
        %2009 = vmatpush1.xpose.msra.mxu0 0.0
        %2010 = vmatprep.subr.mxu0 0.0
        %2011 = vmatpush1.xpose.msra.mxu0 0.0
        %2012 = vmatprep.subr.mxu0 0.0
        %2013 = vmatpush1.xpose.msra.mxu0 0.0
        %2014 = vmatprep.subr.mxu0 0.0
        %2015 = vmatpush1.xpose.msra.mxu0 0.0
        %2016 = vmatprep.subr.mxu0 0.0
        %2017 = vmatpush1.xpose.msra.mxu0 0.0
        %2018 = vmatprep.subr.mxu0 0.0
        %2019 = vmatpush1.xpose.msra.mxu0 0.0
        %2020 = vmatprep.subr.mxu0 0.0
        %2021 = vmatpush1.xpose.msra.mxu0 0.0
        %2022 = vmatprep.subr.mxu0 0.0
        %2023 = vmatpush1.xpose.msra.mxu0 0.0
        %2024 = vmatprep.subr.mxu0 0.0
        %2025 = vmatpush1.xpose.msra.mxu0 0.0
        %2026 = vmatprep.subr.mxu0 0.0
        %2027 = vmatpush1.xpose.msra.mxu0 0.0
        %2028 = vmatprep.subr.mxu0 0.0
        %2029 = vmatpush1.xpose.msra.mxu0 0.0
        %2030 = vmatprep.subr.mxu0 0.0
        %2031 = vmatpush1.xpose.msra.mxu0 0.0
        %2032 = vmatprep.subr.mxu0 0.0
        %2033 = vmatpush1.xpose.msra.mxu0 0.0
        %2034 = vmatprep.subr.mxu0 0.0
        %2035 = vmatpush1.xpose.msra.mxu0 0.0
        %2036 = vmatprep.subr.mxu0 0.0
        %2037 = vmatpush1.xpose.msra.mxu0 0.0
        %2038 = vmatprep.subr.mxu0 0.0
        %2039 = vmatpush1.xpose.msra.mxu0 0.0
        %2040 = vmatprep.subr.mxu0 0.0
        %2041 = vmatpush1.xpose.msra.mxu0 0.0
        %2042 = vmatprep.subr.mxu0 0.0
        %2043 = vmatpush1.xpose.msra.mxu0 0.0
        %2044 = vmatprep.subr.mxu0 0.0
        %2045 = vmatpush1.xpose.msra.mxu0 0.0
        %2046 = vmatprep.subr.mxu0 0.0
        %2047 = vmatpush1.xpose.msra.mxu0 0.0
        %2048 = vmatprep.subr.mxu0 0.0
        %2049 = vmatpush1.xpose.msra.mxu0 0.0
        %2050 = vmatprep.subr.mxu0 0.0
        %2051 = vmatpush1.xpose.msra.mxu0 0.0
        %2052 = vmatprep.subr.mxu0 0.0
        %2053 = vmatpush1.xpose.msra.mxu0 0.0
        %2054 = vmatprep.subr.mxu0 0.0
        %2055 = vmatpush1.xpose.msra.mxu0 0.0
        %2056 = vmatprep.subr.mxu0 0.0
        %2057 = vmatpush1.xpose.msra.mxu0 0.0
        %2058 = vmatprep.mubr.f32.mxu0 0.0
        %2059 = vmatmul.mubr.f32.gmra.mrb[0].mxu0 %v1990
        %v2060 = vpop.f32.mrb[0].mxu0
        %v2061 = vadd.f32 0.0, %v2060
        %v2062 = vpop.f32.mrb[0].mxu0
        %2063 = vdwg.mxu0
        %2064 = vrot.lane.b32.xlu0 %v427, 120
        %v2065 = vpop.permute.xlu0 %2064
        %2066 = vrot.lane.b32.xlu0 %v405, 88
        %v2067 = vpop.permute.xlu0 %2066
        %v2068 = vsel %vm434, %v2065, 0
        %v2070 = vsel %vm434, %v2067, 0
        %2072 = vmatprep.subr.mxu0 0.0
        %2073 = vmatpush1.xpose.msra.mxu0 %v2070
        %2074 = vmatprep.subr.mxu0 0.0
        %2075 = vmatpush1.xpose.msra.mxu0 0.0
        %2076 = vmatprep.subr.mxu0 0.0
        %2077 = vmatpush1.xpose.msra.mxu0 0.0
        %2078 = vmatprep.subr.mxu0 0.0
        %2079 = vmatpush1.xpose.msra.mxu0 0.0
        %2080 = vmatprep.subr.mxu0 0.0
        %2081 = vmatpush1.xpose.msra.mxu0 0.0
        %2082 = vmatprep.subr.mxu0 0.0
        %2083 = vmatpush1.xpose.msra.mxu0 0.0
        %2084 = vmatprep.subr.mxu0 0.0
        %2085 = vmatpush1.xpose.msra.mxu0 0.0
        %2086 = vmatprep.subr.mxu0 0.0
        %2087 = vmatpush1.xpose.msra.mxu0 0.0
        %2088 = vmatprep.subr.mxu0 0.0
        %2089 = vmatpush1.xpose.msra.mxu0 0.0
        %2090 = vmatprep.subr.mxu0 0.0
        %2091 = vmatpush1.xpose.msra.mxu0 0.0
        %2092 = vmatprep.subr.mxu0 0.0
        %2093 = vmatpush1.xpose.msra.mxu0 0.0
        %2094 = vmatprep.subr.mxu0 0.0
        %2095 = vmatpush1.xpose.msra.mxu0 0.0
        %2096 = vmatprep.subr.mxu0 0.0
        %2097 = vmatpush1.xpose.msra.mxu0 0.0
        %2098 = vmatprep.subr.mxu0 0.0
        %2099 = vmatpush1.xpose.msra.mxu0 0.0
        %2100 = vmatprep.subr.mxu0 0.0
        %2101 = vmatpush1.xpose.msra.mxu0 0.0
        %2102 = vmatprep.subr.mxu0 0.0
        %2103 = vmatpush1.xpose.msra.mxu0 0.0
        %2104 = vmatprep.subr.mxu0 0.0
        %2105 = vmatpush1.xpose.msra.mxu0 0.0
        %2106 = vmatprep.subr.mxu0 0.0
        %2107 = vmatpush1.xpose.msra.mxu0 0.0
        %2108 = vmatprep.subr.mxu0 0.0
        %2109 = vmatpush1.xpose.msra.mxu0 0.0
        %2110 = vmatprep.subr.mxu0 0.0
        %2111 = vmatpush1.xpose.msra.mxu0 0.0
        %2112 = vmatprep.subr.mxu0 0.0
        %2113 = vmatpush1.xpose.msra.mxu0 0.0
        %2114 = vmatprep.subr.mxu0 0.0
        %2115 = vmatpush1.xpose.msra.mxu0 0.0
        %2116 = vmatprep.subr.mxu0 0.0
        %2117 = vmatpush1.xpose.msra.mxu0 0.0
        %2118 = vmatprep.subr.mxu0 0.0
        %2119 = vmatpush1.xpose.msra.mxu0 0.0
        %2120 = vmatprep.subr.mxu0 0.0
        %2121 = vmatpush1.xpose.msra.mxu0 0.0
        %2122 = vmatprep.subr.mxu0 0.0
        %2123 = vmatpush1.xpose.msra.mxu0 0.0
        %2124 = vmatprep.subr.mxu0 0.0
        %2125 = vmatpush1.xpose.msra.mxu0 0.0
        %2126 = vmatprep.subr.mxu0 0.0
        %2127 = vmatpush1.xpose.msra.mxu0 0.0
        %2128 = vmatprep.subr.mxu0 0.0
        %2129 = vmatpush1.xpose.msra.mxu0 0.0
        %2130 = vmatprep.subr.mxu0 0.0
        %2131 = vmatpush1.xpose.msra.mxu0 0.0
        %2132 = vmatprep.subr.mxu0 0.0
        %2133 = vmatpush1.xpose.msra.mxu0 0.0
        %2134 = vmatprep.subr.mxu0 0.0
        %2135 = vmatpush1.xpose.msra.mxu0 0.0
        %2136 = vmatprep.mubr.f32.mxu0 0.0
        %2137 = vmatmul.mubr.f32.gmra.mrb[0].mxu0 %v2068
        %v2138 = vpop.f32.mrb[0].mxu0
        %v2139 = vadd.f32 0.0, %v2138
        %v2140 = vpop.f32.mrb[0].mxu0
        %2141 = vdwg.mxu0
        %2142 = vrot.lane.b32.xlu0 %v428, 120
        %v2143 = vpop.permute.xlu0 %2142
        %2144 = vrot.lane.b32.xlu0 %v410, 88
        %v2145 = vpop.permute.xlu0 %2144
        %v2146 = vsel %vm434, %v2143, 0
        %v2148 = vsel %vm434, %v2145, 0
        %2150 = vmatprep.subr.mxu0 0.0
        %2151 = vmatpush1.xpose.msra.mxu0 %v2148
        %2152 = vmatprep.subr.mxu0 0.0
        %2153 = vmatpush1.xpose.msra.mxu0 0.0
        %2154 = vmatprep.subr.mxu0 0.0
        %2155 = vmatpush1.xpose.msra.mxu0 0.0
        %2156 = vmatprep.subr.mxu0 0.0
        %2157 = vmatpush1.xpose.msra.mxu0 0.0
        %2158 = vmatprep.subr.mxu0 0.0
        %2159 = vmatpush1.xpose.msra.mxu0 0.0
        %2160 = vmatprep.subr.mxu0 0.0
        %2161 = vmatpush1.xpose.msra.mxu0 0.0
        %2162 = vmatprep.subr.mxu0 0.0
        %2163 = vmatpush1.xpose.msra.mxu0 0.0
        %2164 = vmatprep.subr.mxu0 0.0
        %2165 = vmatpush1.xpose.msra.mxu0 0.0
        %2166 = vmatprep.subr.mxu0 0.0
        %2167 = vmatpush1.xpose.msra.mxu0 0.0
        %2168 = vmatprep.subr.mxu0 0.0
        %2169 = vmatpush1.xpose.msra.mxu0 0.0
        %2170 = vmatprep.subr.mxu0 0.0
        %2171 = vmatpush1.xpose.msra.mxu0 0.0
        %2172 = vmatprep.subr.mxu0 0.0
        %2173 = vmatpush1.xpose.msra.mxu0 0.0
        %2174 = vmatprep.subr.mxu0 0.0
        %2175 = vmatpush1.xpose.msra.mxu0 0.0
        %2176 = vmatprep.subr.mxu0 0.0
        %2177 = vmatpush1.xpose.msra.mxu0 0.0
        %2178 = vmatprep.subr.mxu0 0.0
        %2179 = vmatpush1.xpose.msra.mxu0 0.0
        %2180 = vmatprep.subr.mxu0 0.0
        %2181 = vmatpush1.xpose.msra.mxu0 0.0
        %2182 = vmatprep.subr.mxu0 0.0
        %2183 = vmatpush1.xpose.msra.mxu0 0.0
        %2184 = vmatprep.subr.mxu0 0.0
        %2185 = vmatpush1.xpose.msra.mxu0 0.0
        %2186 = vmatprep.subr.mxu0 0.0
        %2187 = vmatpush1.xpose.msra.mxu0 0.0
        %2188 = vmatprep.subr.mxu0 0.0
        %2189 = vmatpush1.xpose.msra.mxu0 0.0
        %2190 = vmatprep.subr.mxu0 0.0
        %2191 = vmatpush1.xpose.msra.mxu0 0.0
        %2192 = vmatprep.subr.mxu0 0.0
        %2193 = vmatpush1.xpose.msra.mxu0 0.0
        %2194 = vmatprep.subr.mxu0 0.0
        %2195 = vmatpush1.xpose.msra.mxu0 0.0
        %2196 = vmatprep.subr.mxu0 0.0
        %2197 = vmatpush1.xpose.msra.mxu0 0.0
        %2198 = vmatprep.subr.mxu0 0.0
        %2199 = vmatpush1.xpose.msra.mxu0 0.0
        %2200 = vmatprep.subr.mxu0 0.0
        %2201 = vmatpush1.xpose.msra.mxu0 0.0
        %2202 = vmatprep.subr.mxu0 0.0
        %2203 = vmatpush1.xpose.msra.mxu0 0.0
        %2204 = vmatprep.subr.mxu0 0.0
        %2205 = vmatpush1.xpose.msra.mxu0 0.0
        %2206 = vmatprep.subr.mxu0 0.0
        %2207 = vmatpush1.xpose.msra.mxu0 0.0
        %2208 = vmatprep.subr.mxu0 0.0
        %2209 = vmatpush1.xpose.msra.mxu0 0.0
        %2210 = vmatprep.subr.mxu0 0.0
        %2211 = vmatpush1.xpose.msra.mxu0 0.0
        %2212 = vmatprep.subr.mxu0 0.0
        %2213 = vmatpush1.xpose.msra.mxu0 0.0
        %2214 = vmatprep.mubr.f32.mxu0 0.0
        %2215 = vmatmul.mubr.f32.gmra.mrb[0].mxu0 %v2146
        %v2216 = vpop.f32.mrb[0].mxu0
        %v2217 = vadd.f32 0.0, %v2216
        %v2218 = vpop.f32.mrb[0].mxu0
        %2219 = vdwg.mxu0
        %2220 = vrot.lane.b32.xlu0 %v429, 120
        %v2221 = vpop.permute.xlu0 %2220
        %2222 = vrot.lane.b32.xlu0 %v415, 88
        %v2223 = vpop.permute.xlu0 %2222
        %v2224 = vsel %vm434, %v2221, 0
        %v2226 = vsel %vm434, %v2223, 0
        %2228 = vmatprep.subr.mxu0 0.0
        %2229 = vmatpush1.xpose.msra.mxu0 %v2226
        %2230 = vmatprep.subr.mxu0 0.0
        %2231 = vmatpush1.xpose.msra.mxu0 0.0
        %2232 = vmatprep.subr.mxu0 0.0
        %2233 = vmatpush1.xpose.msra.mxu0 0.0
        %2234 = vmatprep.subr.mxu0 0.0
        %2235 = vmatpush1.xpose.msra.mxu0 0.0
        %2236 = vmatprep.subr.mxu0 0.0
        %2237 = vmatpush1.xpose.msra.mxu0 0.0
        %2238 = vmatprep.subr.mxu0 0.0
        %2239 = vmatpush1.xpose.msra.mxu0 0.0
        %2240 = vmatprep.subr.mxu0 0.0
        %2241 = vmatpush1.xpose.msra.mxu0 0.0
        %2242 = vmatprep.subr.mxu0 0.0
        %2243 = vmatpush1.xpose.msra.mxu0 0.0
        %2244 = vmatprep.subr.mxu0 0.0
        %2245 = vmatpush1.xpose.msra.mxu0 0.0
        %2246 = vmatprep.subr.mxu0 0.0
        %2247 = vmatpush1.xpose.msra.mxu0 0.0
        %2248 = vmatprep.subr.mxu0 0.0
        %2249 = vmatpush1.xpose.msra.mxu0 0.0
        %2250 = vmatprep.subr.mxu0 0.0
        %2251 = vmatpush1.xpose.msra.mxu0 0.0
        %2252 = vmatprep.subr.mxu0 0.0
        %2253 = vmatpush1.xpose.msra.mxu0 0.0
        %2254 = vmatprep.subr.mxu0 0.0
        %2255 = vmatpush1.xpose.msra.mxu0 0.0
        %2256 = vmatprep.subr.mxu0 0.0
        %2257 = vmatpush1.xpose.msra.mxu0 0.0
        %2258 = vmatprep.subr.mxu0 0.0
        %2259 = vmatpush1.xpose.msra.mxu0 0.0
        %2260 = vmatprep.subr.mxu0 0.0
        %2261 = vmatpush1.xpose.msra.mxu0 0.0
        %2262 = vmatprep.subr.mxu0 0.0
        %2263 = vmatpush1.xpose.msra.mxu0 0.0
        %2264 = vmatprep.subr.mxu0 0.0
        %2265 = vmatpush1.xpose.msra.mxu0 0.0
        %2266 = vmatprep.subr.mxu0 0.0
        %2267 = vmatpush1.xpose.msra.mxu0 0.0
        %2268 = vmatprep.subr.mxu0 0.0
        %2269 = vmatpush1.xpose.msra.mxu0 0.0
        %2270 = vmatprep.subr.mxu0 0.0
        %2271 = vmatpush1.xpose.msra.mxu0 0.0
        %2272 = vmatprep.subr.mxu0 0.0
        %2273 = vmatpush1.xpose.msra.mxu0 0.0
        %2274 = vmatprep.subr.mxu0 0.0
        %2275 = vmatpush1.xpose.msra.mxu0 0.0
        %2276 = vmatprep.subr.mxu0 0.0
        %2277 = vmatpush1.xpose.msra.mxu0 0.0
        %2278 = vmatprep.subr.mxu0 0.0
        %2279 = vmatpush1.xpose.msra.mxu0 0.0
        %2280 = vmatprep.subr.mxu0 0.0
        %2281 = vmatpush1.xpose.msra.mxu0 0.0
        %2282 = vmatprep.subr.mxu0 0.0
        %2283 = vmatpush1.xpose.msra.mxu0 0.0
        %2284 = vmatprep.subr.mxu0 0.0
        %2285 = vmatpush1.xpose.msra.mxu0 0.0
        %2286 = vmatprep.subr.mxu0 0.0
        %2287 = vmatpush1.xpose.msra.mxu0 0.0
        %2288 = vmatprep.subr.mxu0 0.0
        %2289 = vmatpush1.xpose.msra.mxu0 0.0
        %2290 = vmatprep.subr.mxu0 0.0
        %2291 = vmatpush1.xpose.msra.mxu0 0.0
        %2292 = vmatprep.mubr.f32.mxu0 0.0
        %2293 = vmatmul.mubr.f32.gmra.mrb[0].mxu0 %v2224
        %v2294 = vpop.f32.mrb[0].mxu0
        %v2295 = vadd.f32 0.0, %v2294
        %v2296 = vpop.f32.mrb[0].mxu0
        %2297 = vdwg.mxu0
        %2298 = vrot.lane.b32.xlu0 %v430, 120
        %v2299 = vpop.permute.xlu0 %2298
        %2300 = vrot.lane.b32.xlu0 %v420, 88
        %v2301 = vpop.permute.xlu0 %2300
        %v2302 = vsel %vm434, %v2299, 0
        %v2304 = vsel %vm434, %v2301, 0
        %2306 = vmatprep.subr.mxu0 0.0
        %2307 = vmatpush1.xpose.msra.mxu0 %v2304
        %2308 = vmatprep.subr.mxu0 0.0
        %2309 = vmatpush1.xpose.msra.mxu0 0.0
        %2310 = vmatprep.subr.mxu0 0.0
        %2311 = vmatpush1.xpose.msra.mxu0 0.0
        %2312 = vmatprep.subr.mxu0 0.0
        %2313 = vmatpush1.xpose.msra.mxu0 0.0
        %2314 = vmatprep.subr.mxu0 0.0
        %2315 = vmatpush1.xpose.msra.mxu0 0.0
        %2316 = vmatprep.subr.mxu0 0.0
        %2317 = vmatpush1.xpose.msra.mxu0 0.0
        %2318 = vmatprep.subr.mxu0 0.0
        %2319 = vmatpush1.xpose.msra.mxu0 0.0
        %2320 = vmatprep.subr.mxu0 0.0
        %2321 = vmatpush1.xpose.msra.mxu0 0.0
        %2322 = vmatprep.subr.mxu0 0.0
        %2323 = vmatpush1.xpose.msra.mxu0 0.0
        %2324 = vmatprep.subr.mxu0 0.0
        %2325 = vmatpush1.xpose.msra.mxu0 0.0
        %2326 = vmatprep.subr.mxu0 0.0
        %2327 = vmatpush1.xpose.msra.mxu0 0.0
        %2328 = vmatprep.subr.mxu0 0.0
        %2329 = vmatpush1.xpose.msra.mxu0 0.0
        %2330 = vmatprep.subr.mxu0 0.0
        %2331 = vmatpush1.xpose.msra.mxu0 0.0
        %2332 = vmatprep.subr.mxu0 0.0
        %2333 = vmatpush1.xpose.msra.mxu0 0.0
        %2334 = vmatprep.subr.mxu0 0.0
        %2335 = vmatpush1.xpose.msra.mxu0 0.0
        %2336 = vmatprep.subr.mxu0 0.0
        %2337 = vmatpush1.xpose.msra.mxu0 0.0
        %2338 = vmatprep.subr.mxu0 0.0
        %2339 = vmatpush1.xpose.msra.mxu0 0.0
        %2340 = vmatprep.subr.mxu0 0.0
        %2341 = vmatpush1.xpose.msra.mxu0 0.0
        %2342 = vmatprep.subr.mxu0 0.0
        %2343 = vmatpush1.xpose.msra.mxu0 0.0
        %2344 = vmatprep.subr.mxu0 0.0
        %2345 = vmatpush1.xpose.msra.mxu0 0.0
        %2346 = vmatprep.subr.mxu0 0.0
        %2347 = vmatpush1.xpose.msra.mxu0 0.0
        %2348 = vmatprep.subr.mxu0 0.0
        %2349 = vmatpush1.xpose.msra.mxu0 0.0
        %2350 = vmatprep.subr.mxu0 0.0
        %2351 = vmatpush1.xpose.msra.mxu0 0.0
        %2352 = vmatprep.subr.mxu0 0.0
        %2353 = vmatpush1.xpose.msra.mxu0 0.0
        %2354 = vmatprep.subr.mxu0 0.0
        %2355 = vmatpush1.xpose.msra.mxu0 0.0
        %2356 = vmatprep.subr.mxu0 0.0
        %2357 = vmatpush1.xpose.msra.mxu0 0.0
        %2358 = vmatprep.subr.mxu0 0.0
        %2359 = vmatpush1.xpose.msra.mxu0 0.0
        %2360 = vmatprep.subr.mxu0 0.0
        %2361 = vmatpush1.xpose.msra.mxu0 0.0
        %2362 = vmatprep.subr.mxu0 0.0
        %2363 = vmatpush1.xpose.msra.mxu0 0.0
        %2364 = vmatprep.subr.mxu0 0.0
        %2365 = vmatpush1.xpose.msra.mxu0 0.0
        %2366 = vmatprep.subr.mxu0 0.0
        %2367 = vmatpush1.xpose.msra.mxu0 0.0
        %2368 = vmatprep.subr.mxu0 0.0
        %2369 = vmatpush1.xpose.msra.mxu0 0.0
        %2370 = vmatprep.mubr.f32.mxu0 0.0
        %2371 = vmatmul.mubr.f32.gmra.mrb[0].mxu0 %v2302
        %v2372 = vpop.f32.mrb[0].mxu0
        %v2373 = vadd.f32 0.0, %v2372
        %v2374 = vpop.f32.mrb[0].mxu0
        %2375 = vdwg.mxu0
        %v2376 = vsel %vm434, %v1827, -inf
        %2377 = vmax.xlane.f32.xlu0 %v2376
        %v2378 = vpop.xlane.xlu0 %2377
        %v2379 = vsel %vm434, %v1905, -inf
        %2380 = vmax.xlane.f32.xlu0 %v2379
        %v2381 = vpop.xlane.xlu0 %2380
        %v2382 = vsel %vm434, %v1983, -inf
        %2383 = vmax.xlane.f32.xlu0 %v2382
        %v2384 = vpop.xlane.xlu0 %2383
        %v2385 = vsel %vm434, %v2061, -inf
        %2386 = vmax.xlane.f32.xlu0 %v2385
        %v2387 = vpop.xlane.xlu0 %2386
        %v2388 = vsel %vm434, %v2139, -inf
        %2389 = vmax.xlane.f32.xlu0 %v2388
        %v2390 = vpop.xlane.xlu0 %2389
        %v2391 = vsel %vm434, %v2217, -inf
        %2392 = vmax.xlane.f32.xlu0 %v2391
        %v2393 = vpop.xlane.xlu0 %2392
        %v2394 = vsel %vm434, %v2295, -inf
        %2395 = vmax.xlane.f32.xlu0 %v2394
        %v2396 = vpop.xlane.xlu0 %2395
        %v2397 = vsel %vm434, %v2373, -inf
        %2398 = vmax.xlane.f32.xlu0 %v2397
        %v2399 = vpop.xlane.xlu0 %2398
        %v2400 = vsub.f32 %v1827, %v2378
        %v2401 = vsub.f32 %v1905, %v2381
        %v2402 = vsub.f32 %v1983, %v2384
        %v2403 = vsub.f32 %v2061, %v2387
        %v2404 = vsub.f32 %v2139, %v2390
        %v2405 = vsub.f32 %v2217, %v2393
        %v2406 = vsub.f32 %v2295, %v2396
        %v2407 = vsub.f32 %v2373, %v2399
        %v2408 = vmul.f32 %v2400, 1.442695
        %v2409 = vpow.pop %v2408
        %v2410 = vmul.f32 %v2401, 1.442695
        %v2411 = vpow.pop %v2410
        %v2412 = vmul.f32 %v2402, 1.442695
        %v2413 = vpow.pop %v2412
        %v2414 = vmul.f32 %v2403, 1.442695
        %v2415 = vpow.pop %v2414
        %v2416 = vmul.f32 %v2404, 1.442695
        %v2417 = vpow.pop %v2416
        %v2418 = vmul.f32 %v2405, 1.442695
        %v2419 = vpow.pop %v2418
        %v2420 = vmul.f32 %v2406, 1.442695
        %v2421 = vpow.pop %v2420
        %v2422 = vmul.f32 %v2407, 1.442695
        %v2423 = vpow.pop %v2422
        %v2424 = vsel %vm434, %v2409, 0.0
        %2425 = vadd.xlane.f32.xlu0 %v2424
        %v2426 = vpop.xlane.xlu0 %2425
        %v2427 = vsel %vm434, %v2411, 0.0
        %2428 = vadd.xlane.f32.xlu0 %v2427
        %v2429 = vpop.xlane.xlu0 %2428
        %v2430 = vsel %vm434, %v2413, 0.0
        %2431 = vadd.xlane.f32.xlu0 %v2430
        %v2432 = vpop.xlane.xlu0 %2431
        %v2433 = vsel %vm434, %v2415, 0.0
        %2434 = vadd.xlane.f32.xlu0 %v2433
        %v2435 = vpop.xlane.xlu0 %2434
        %v2436 = vsel %vm434, %v2417, 0.0
        %2437 = vadd.xlane.f32.xlu0 %v2436
        %v2438 = vpop.xlane.xlu0 %2437
        %v2439 = vsel %vm434, %v2419, 0.0
        %2440 = vadd.xlane.f32.xlu0 %v2439
        %v2441 = vpop.xlane.xlu0 %2440
        %v2442 = vsel %vm434, %v2421, 0.0
        %2443 = vadd.xlane.f32.xlu0 %v2442
        %v2444 = vpop.xlane.xlu0 %2443
        %v2445 = vsel %vm434, %v2423, 0.0
        %2446 = vadd.xlane.f32.xlu0 %v2445
        %v2447 = vpop.xlane.xlu0 %2446
        %v2448 = vrcp.pop %v2426
        %v2449 = vrcp.pop %v2429
        %v2450 = vrcp.pop %v2432
        %v2451 = vrcp.pop %v2435
        %v2452 = vrcp.pop %v2438
        %v2453 = vrcp.pop %v2441
        %v2454 = vrcp.pop %v2444
        %v2455 = vrcp.pop %v2447
        %v2456 = vmul.f32 %v2409, %v2448
        %v2457 = vmul.f32 %v2411, %v2449
        %v2458 = vmul.f32 %v2413, %v2450
        %v2459 = vmul.f32 %v2415, %v2451
        %v2460 = vmul.f32 %v2417, %v2452
        %v2461 = vmul.f32 %v2419, %v2453
        %v2462 = vmul.f32 %v2421, %v2454
        %v2463 = vmul.f32 %v2423, %v2455
        %2464 = vrot.lane.b32.xlu0 %v385, 56
        %v2465 = vpop.permute.xlu0 %2464
        %v2468 = vsel %vm434, %v2456, 0
        %2470 = vmatprep.subr.mxu0 0.0
        %2471 = vmatpush1.msra.mxu0 %v2465
        %2472 = vmatprep.subr.mxu0 0.0
        %2473 = vmatpush1.msra.mxu0 0.0
        %2474 = vmatprep.subr.mxu0 0.0
        %2475 = vmatpush1.msra.mxu0 0.0
        %2476 = vmatprep.subr.mxu0 0.0
        %2477 = vmatpush1.msra.mxu0 0.0
        %2478 = vmatprep.subr.mxu0 0.0
        %2479 = vmatpush1.msra.mxu0 0.0
        %2480 = vmatprep.subr.mxu0 0.0
        %2481 = vmatpush1.msra.mxu0 0.0
        %2482 = vmatprep.subr.mxu0 0.0
        %2483 = vmatpush1.msra.mxu0 0.0
        %2484 = vmatprep.subr.mxu0 0.0
        %2485 = vmatpush1.msra.mxu0 0.0
        %2486 = vmatprep.subr.mxu0 0.0
        %2487 = vmatpush1.msra.mxu0 0.0
        %2488 = vmatprep.subr.mxu0 0.0
        %2489 = vmatpush1.msra.mxu0 0.0
        %2490 = vmatprep.subr.mxu0 0.0
        %2491 = vmatpush1.msra.mxu0 0.0
        %2492 = vmatprep.subr.mxu0 0.0
        %2493 = vmatpush1.msra.mxu0 0.0
        %2494 = vmatprep.subr.mxu0 0.0
        %2495 = vmatpush1.msra.mxu0 0.0
        %2496 = vmatprep.subr.mxu0 0.0
        %2497 = vmatpush1.msra.mxu0 0.0
        %2498 = vmatprep.subr.mxu0 0.0
        %2499 = vmatpush1.msra.mxu0 0.0
        %2500 = vmatprep.subr.mxu0 0.0
        %2501 = vmatpush1.msra.mxu0 0.0
        %2502 = vmatprep.subr.mxu0 0.0
        %2503 = vmatpush1.msra.mxu0 0.0
        %2504 = vmatprep.subr.mxu0 0.0
        %2505 = vmatpush1.msra.mxu0 0.0
        %2506 = vmatprep.subr.mxu0 0.0
        %2507 = vmatpush1.msra.mxu0 0.0
        %2508 = vmatprep.subr.mxu0 0.0
        %2509 = vmatpush1.msra.mxu0 0.0
        %2510 = vmatprep.subr.mxu0 0.0
        %2511 = vmatpush1.msra.mxu0 0.0
        %2512 = vmatprep.subr.mxu0 0.0
        %2513 = vmatpush1.msra.mxu0 0.0
        %2514 = vmatprep.subr.mxu0 0.0
        %2515 = vmatpush1.msra.mxu0 0.0
        %2516 = vmatprep.subr.mxu0 0.0
        %2517 = vmatpush1.msra.mxu0 0.0
        %2518 = vmatprep.subr.mxu0 0.0
        %2519 = vmatpush1.msra.mxu0 0.0
        %2520 = vmatprep.subr.mxu0 0.0
        %2521 = vmatpush1.msra.mxu0 0.0
        %2522 = vmatprep.subr.mxu0 0.0
        %2523 = vmatpush1.msra.mxu0 0.0
        %2524 = vmatprep.subr.mxu0 0.0
        %2525 = vmatpush1.msra.mxu0 0.0
        %2526 = vmatprep.subr.mxu0 0.0
        %2527 = vmatpush1.msra.mxu0 0.0
        %2528 = vmatprep.subr.mxu0 0.0
        %2529 = vmatpush1.msra.mxu0 0.0
        %2530 = vmatprep.subr.mxu0 0.0
        %2531 = vmatpush1.msra.mxu0 0.0
        %2532 = vmatprep.subr.mxu0 0.0
        %2533 = vmatpush1.msra.mxu0 0.0
        %2534 = vmatprep.mubr.f32.mxu0 0.0
        %2535 = vmatmul.mubr.f32.gmra.mrb[0].mxu0 %v2468
        %v2536 = vpop.f32.mrb[0].mxu0
        %v2537 = vadd.f32 0.0, %v2536
        %v2538 = vpop.f32.mrb[0].mxu0
        %2539 = vdwg.mxu0
        %2540 = vrot.lane.b32.xlu0 %v390, 56
        %v2541 = vpop.permute.xlu0 %2540
        %v2544 = vsel %vm434, %v2457, 0
        %2546 = vmatprep.subr.mxu0 0.0
        %2547 = vmatpush1.msra.mxu0 %v2541
        %2548 = vmatprep.subr.mxu0 0.0
        %2549 = vmatpush1.msra.mxu0 0.0
        %2550 = vmatprep.subr.mxu0 0.0
        %2551 = vmatpush1.msra.mxu0 0.0
        %2552 = vmatprep.subr.mxu0 0.0
        %2553 = vmatpush1.msra.mxu0 0.0
        %2554 = vmatprep.subr.mxu0 0.0
        %2555 = vmatpush1.msra.mxu0 0.0
        %2556 = vmatprep.subr.mxu0 0.0
        %2557 = vmatpush1.msra.mxu0 0.0
        %2558 = vmatprep.subr.mxu0 0.0
        %2559 = vmatpush1.msra.mxu0 0.0
        %2560 = vmatprep.subr.mxu0 0.0
        %2561 = vmatpush1.msra.mxu0 0.0
        %2562 = vmatprep.subr.mxu0 0.0
        %2563 = vmatpush1.msra.mxu0 0.0
        %2564 = vmatprep.subr.mxu0 0.0
        %2565 = vmatpush1.msra.mxu0 0.0
        %2566 = vmatprep.subr.mxu0 0.0
        %2567 = vmatpush1.msra.mxu0 0.0
        %2568 = vmatprep.subr.mxu0 0.0
        %2569 = vmatpush1.msra.mxu0 0.0
        %2570 = vmatprep.subr.mxu0 0.0
        %2571 = vmatpush1.msra.mxu0 0.0
        %2572 = vmatprep.subr.mxu0 0.0
        %2573 = vmatpush1.msra.mxu0 0.0
        %2574 = vmatprep.subr.mxu0 0.0
        %2575 = vmatpush1.msra.mxu0 0.0
        %2576 = vmatprep.subr.mxu0 0.0
        %2577 = vmatpush1.msra.mxu0 0.0
        %2578 = vmatprep.subr.mxu0 0.0
        %2579 = vmatpush1.msra.mxu0 0.0
        %2580 = vmatprep.subr.mxu0 0.0
        %2581 = vmatpush1.msra.mxu0 0.0
        %2582 = vmatprep.subr.mxu0 0.0
        %2583 = vmatpush1.msra.mxu0 0.0
        %2584 = vmatprep.subr.mxu0 0.0
        %2585 = vmatpush1.msra.mxu0 0.0
        %2586 = vmatprep.subr.mxu0 0.0
        %2587 = vmatpush1.msra.mxu0 0.0
        %2588 = vmatprep.subr.mxu0 0.0
        %2589 = vmatpush1.msra.mxu0 0.0
        %2590 = vmatprep.subr.mxu0 0.0
        %2591 = vmatpush1.msra.mxu0 0.0
        %2592 = vmatprep.subr.mxu0 0.0
        %2593 = vmatpush1.msra.mxu0 0.0
        %2594 = vmatprep.subr.mxu0 0.0
        %2595 = vmatpush1.msra.mxu0 0.0
        %2596 = vmatprep.subr.mxu0 0.0
        %2597 = vmatpush1.msra.mxu0 0.0
        %2598 = vmatprep.subr.mxu0 0.0
        %2599 = vmatpush1.msra.mxu0 0.0
        %2600 = vmatprep.subr.mxu0 0.0
        %2601 = vmatpush1.msra.mxu0 0.0
        %2602 = vmatprep.subr.mxu0 0.0
        %2603 = vmatpush1.msra.mxu0 0.0
        %2604 = vmatprep.subr.mxu0 0.0
        %2605 = vmatpush1.msra.mxu0 0.0
        %2606 = vmatprep.subr.mxu0 0.0
        %2607 = vmatpush1.msra.mxu0 0.0
        %2608 = vmatprep.subr.mxu0 0.0
        %2609 = vmatpush1.msra.mxu0 0.0
        %2610 = vmatprep.mubr.f32.mxu0 0.0
        %2611 = vmatmul.mubr.f32.gmra.mrb[0].mxu0 %v2544
        %v2612 = vpop.f32.mrb[0].mxu0
        %v2613 = vadd.f32 0.0, %v2612
        %v2614 = vpop.f32.mrb[0].mxu0
        %2615 = vdwg.mxu0
        %2616 = vrot.lane.b32.xlu0 %v395, 56
        %v2617 = vpop.permute.xlu0 %2616
        %v2620 = vsel %vm434, %v2458, 0
        %2622 = vmatprep.subr.mxu0 0.0
        %2623 = vmatpush1.msra.mxu0 %v2617
        %2624 = vmatprep.subr.mxu0 0.0
        %2625 = vmatpush1.msra.mxu0 0.0
        %2626 = vmatprep.subr.mxu0 0.0
        %2627 = vmatpush1.msra.mxu0 0.0
        %2628 = vmatprep.subr.mxu0 0.0
        %2629 = vmatpush1.msra.mxu0 0.0
        %2630 = vmatprep.subr.mxu0 0.0
        %2631 = vmatpush1.msra.mxu0 0.0
        %2632 = vmatprep.subr.mxu0 0.0
        %2633 = vmatpush1.msra.mxu0 0.0
        %2634 = vmatprep.subr.mxu0 0.0
        %2635 = vmatpush1.msra.mxu0 0.0
        %2636 = vmatprep.subr.mxu0 0.0
        %2637 = vmatpush1.msra.mxu0 0.0
        %2638 = vmatprep.subr.mxu0 0.0
        %2639 = vmatpush1.msra.mxu0 0.0
        %2640 = vmatprep.subr.mxu0 0.0
        %2641 = vmatpush1.msra.mxu0 0.0
        %2642 = vmatprep.subr.mxu0 0.0
        %2643 = vmatpush1.msra.mxu0 0.0
        %2644 = vmatprep.subr.mxu0 0.0
        %2645 = vmatpush1.msra.mxu0 0.0
        %2646 = vmatprep.subr.mxu0 0.0
        %2647 = vmatpush1.msra.mxu0 0.0
        %2648 = vmatprep.subr.mxu0 0.0
        %2649 = vmatpush1.msra.mxu0 0.0
        %2650 = vmatprep.subr.mxu0 0.0
        %2651 = vmatpush1.msra.mxu0 0.0
        %2652 = vmatprep.subr.mxu0 0.0
        %2653 = vmatpush1.msra.mxu0 0.0
        %2654 = vmatprep.subr.mxu0 0.0
        %2655 = vmatpush1.msra.mxu0 0.0
        %2656 = vmatprep.subr.mxu0 0.0
        %2657 = vmatpush1.msra.mxu0 0.0
        %2658 = vmatprep.subr.mxu0 0.0
        %2659 = vmatpush1.msra.mxu0 0.0
        %2660 = vmatprep.subr.mxu0 0.0
        %2661 = vmatpush1.msra.mxu0 0.0
        %2662 = vmatprep.subr.mxu0 0.0
        %2663 = vmatpush1.msra.mxu0 0.0
        %2664 = vmatprep.subr.mxu0 0.0
        %2665 = vmatpush1.msra.mxu0 0.0
        %2666 = vmatprep.subr.mxu0 0.0
        %2667 = vmatpush1.msra.mxu0 0.0
        %2668 = vmatprep.subr.mxu0 0.0
        %2669 = vmatpush1.msra.mxu0 0.0
        %2670 = vmatprep.subr.mxu0 0.0
        %2671 = vmatpush1.msra.mxu0 0.0
        %2672 = vmatprep.subr.mxu0 0.0
        %2673 = vmatpush1.msra.mxu0 0.0
        %2674 = vmatprep.subr.mxu0 0.0
        %2675 = vmatpush1.msra.mxu0 0.0
        %2676 = vmatprep.subr.mxu0 0.0
        %2677 = vmatpush1.msra.mxu0 0.0
        %2678 = vmatprep.subr.mxu0 0.0
        %2679 = vmatpush1.msra.mxu0 0.0
        %2680 = vmatprep.subr.mxu0 0.0
        %2681 = vmatpush1.msra.mxu0 0.0
        %2682 = vmatprep.subr.mxu0 0.0
        %2683 = vmatpush1.msra.mxu0 0.0
        %2684 = vmatprep.subr.mxu0 0.0
        %2685 = vmatpush1.msra.mxu0 0.0
        %2686 = vmatprep.mubr.f32.mxu0 0.0
        %2687 = vmatmul.mubr.f32.gmra.mrb[0].mxu0 %v2620
        %v2688 = vpop.f32.mrb[0].mxu0
        %v2689 = vadd.f32 0.0, %v2688
        %v2690 = vpop.f32.mrb[0].mxu0
        %2691 = vdwg.mxu0
        %2692 = vrot.lane.b32.xlu0 %v400, 56
        %v2693 = vpop.permute.xlu0 %2692
        %v2696 = vsel %vm434, %v2459, 0
        %2698 = vmatprep.subr.mxu0 0.0
        %2699 = vmatpush1.msra.mxu0 %v2693
        %2700 = vmatprep.subr.mxu0 0.0
        %2701 = vmatpush1.msra.mxu0 0.0
        %2702 = vmatprep.subr.mxu0 0.0
        %2703 = vmatpush1.msra.mxu0 0.0
        %2704 = vmatprep.subr.mxu0 0.0
        %2705 = vmatpush1.msra.mxu0 0.0
        %2706 = vmatprep.subr.mxu0 0.0
        %2707 = vmatpush1.msra.mxu0 0.0
        %2708 = vmatprep.subr.mxu0 0.0
        %2709 = vmatpush1.msra.mxu0 0.0
        %2710 = vmatprep.subr.mxu0 0.0
        %2711 = vmatpush1.msra.mxu0 0.0
        %2712 = vmatprep.subr.mxu0 0.0
        %2713 = vmatpush1.msra.mxu0 0.0
        %2714 = vmatprep.subr.mxu0 0.0
        %2715 = vmatpush1.msra.mxu0 0.0
        %2716 = vmatprep.subr.mxu0 0.0
        %2717 = vmatpush1.msra.mxu0 0.0
        %2718 = vmatprep.subr.mxu0 0.0
        %2719 = vmatpush1.msra.mxu0 0.0
        %2720 = vmatprep.subr.mxu0 0.0
        %2721 = vmatpush1.msra.mxu0 0.0
        %2722 = vmatprep.subr.mxu0 0.0
        %2723 = vmatpush1.msra.mxu0 0.0
        %2724 = vmatprep.subr.mxu0 0.0
        %2725 = vmatpush1.msra.mxu0 0.0
        %2726 = vmatprep.subr.mxu0 0.0
        %2727 = vmatpush1.msra.mxu0 0.0
        %2728 = vmatprep.subr.mxu0 0.0
        %2729 = vmatpush1.msra.mxu0 0.0
        %2730 = vmatprep.subr.mxu0 0.0
        %2731 = vmatpush1.msra.mxu0 0.0
        %2732 = vmatprep.subr.mxu0 0.0
        %2733 = vmatpush1.msra.mxu0 0.0
        %2734 = vmatprep.subr.mxu0 0.0
        %2735 = vmatpush1.msra.mxu0 0.0
        %2736 = vmatprep.subr.mxu0 0.0
        %2737 = vmatpush1.msra.mxu0 0.0
        %2738 = vmatprep.subr.mxu0 0.0
        %2739 = vmatpush1.msra.mxu0 0.0
        %2740 = vmatprep.subr.mxu0 0.0
        %2741 = vmatpush1.msra.mxu0 0.0
        %2742 = vmatprep.subr.mxu0 0.0
        %2743 = vmatpush1.msra.mxu0 0.0
        %2744 = vmatprep.subr.mxu0 0.0
        %2745 = vmatpush1.msra.mxu0 0.0
        %2746 = vmatprep.subr.mxu0 0.0
        %2747 = vmatpush1.msra.mxu0 0.0
        %2748 = vmatprep.subr.mxu0 0.0
        %2749 = vmatpush1.msra.mxu0 0.0
        %2750 = vmatprep.subr.mxu0 0.0
        %2751 = vmatpush1.msra.mxu0 0.0
        %2752 = vmatprep.subr.mxu0 0.0
        %2753 = vmatpush1.msra.mxu0 0.0
        %2754 = vmatprep.subr.mxu0 0.0
        %2755 = vmatpush1.msra.mxu0 0.0
        %2756 = vmatprep.subr.mxu0 0.0
        %2757 = vmatpush1.msra.mxu0 0.0
        %2758 = vmatprep.subr.mxu0 0.0
        %2759 = vmatpush1.msra.mxu0 0.0
        %2760 = vmatprep.subr.mxu0 0.0
        %2761 = vmatpush1.msra.mxu0 0.0
        %2762 = vmatprep.mubr.f32.mxu0 0.0
        %2763 = vmatmul.mubr.f32.gmra.mrb[0].mxu0 %v2696
        %v2764 = vpop.f32.mrb[0].mxu0
        %v2765 = vadd.f32 0.0, %v2764
        %v2766 = vpop.f32.mrb[0].mxu0
        %2767 = vdwg.mxu0
        %2768 = vrot.lane.b32.xlu0 %v405, 56
        %v2769 = vpop.permute.xlu0 %2768
        %v2772 = vsel %vm434, %v2460, 0
        %2774 = vmatprep.subr.mxu0 0.0
        %2775 = vmatpush1.msra.mxu0 %v2769
        %2776 = vmatprep.subr.mxu0 0.0
        %2777 = vmatpush1.msra.mxu0 0.0
        %2778 = vmatprep.subr.mxu0 0.0
        %2779 = vmatpush1.msra.mxu0 0.0
        %2780 = vmatprep.subr.mxu0 0.0
        %2781 = vmatpush1.msra.mxu0 0.0
        %2782 = vmatprep.subr.mxu0 0.0
        %2783 = vmatpush1.msra.mxu0 0.0
        %2784 = vmatprep.subr.mxu0 0.0
        %2785 = vmatpush1.msra.mxu0 0.0
        %2786 = vmatprep.subr.mxu0 0.0
        %2787 = vmatpush1.msra.mxu0 0.0
        %2788 = vmatprep.subr.mxu0 0.0
        %2789 = vmatpush1.msra.mxu0 0.0
        %2790 = vmatprep.subr.mxu0 0.0
        %2791 = vmatpush1.msra.mxu0 0.0
        %2792 = vmatprep.subr.mxu0 0.0
        %2793 = vmatpush1.msra.mxu0 0.0
        %2794 = vmatprep.subr.mxu0 0.0
        %2795 = vmatpush1.msra.mxu0 0.0
        %2796 = vmatprep.subr.mxu0 0.0
        %2797 = vmatpush1.msra.mxu0 0.0
        %2798 = vmatprep.subr.mxu0 0.0
        %2799 = vmatpush1.msra.mxu0 0.0
        %2800 = vmatprep.subr.mxu0 0.0
        %2801 = vmatpush1.msra.mxu0 0.0
        %2802 = vmatprep.subr.mxu0 0.0
        %2803 = vmatpush1.msra.mxu0 0.0
        %2804 = vmatprep.subr.mxu0 0.0
        %2805 = vmatpush1.msra.mxu0 0.0
        %2806 = vmatprep.subr.mxu0 0.0
        %2807 = vmatpush1.msra.mxu0 0.0
        %2808 = vmatprep.subr.mxu0 0.0
        %2809 = vmatpush1.msra.mxu0 0.0
        %2810 = vmatprep.subr.mxu0 0.0
        %2811 = vmatpush1.msra.mxu0 0.0
        %2812 = vmatprep.subr.mxu0 0.0
        %2813 = vmatpush1.msra.mxu0 0.0
        %2814 = vmatprep.subr.mxu0 0.0
        %2815 = vmatpush1.msra.mxu0 0.0
        %2816 = vmatprep.subr.mxu0 0.0
        %2817 = vmatpush1.msra.mxu0 0.0
        %2818 = vmatprep.subr.mxu0 0.0
        %2819 = vmatpush1.msra.mxu0 0.0
        %2820 = vmatprep.subr.mxu0 0.0
        %2821 = vmatpush1.msra.mxu0 0.0
        %2822 = vmatprep.subr.mxu0 0.0
        %2823 = vmatpush1.msra.mxu0 0.0
        %2824 = vmatprep.subr.mxu0 0.0
        %2825 = vmatpush1.msra.mxu0 0.0
        %2826 = vmatprep.subr.mxu0 0.0
        %2827 = vmatpush1.msra.mxu0 0.0
        %2828 = vmatprep.subr.mxu0 0.0
        %2829 = vmatpush1.msra.mxu0 0.0
        %2830 = vmatprep.subr.mxu0 0.0
        %2831 = vmatpush1.msra.mxu0 0.0
        %2832 = vmatprep.subr.mxu0 0.0
        %2833 = vmatpush1.msra.mxu0 0.0
        %2834 = vmatprep.subr.mxu0 0.0
        %2835 = vmatpush1.msra.mxu0 0.0
        %2836 = vmatprep.subr.mxu0 0.0
        %2837 = vmatpush1.msra.mxu0 0.0
        %2838 = vmatprep.mubr.f32.mxu0 0.0
        %2839 = vmatmul.mubr.f32.gmra.mrb[0].mxu0 %v2772
        %v2840 = vpop.f32.mrb[0].mxu0
        %v2841 = vadd.f32 0.0, %v2840
        %v2842 = vpop.f32.mrb[0].mxu0
        %2843 = vdwg.mxu0
        %2844 = vrot.lane.b32.xlu0 %v410, 56
        %v2845 = vpop.permute.xlu0 %2844
        %v2848 = vsel %vm434, %v2461, 0
        %2850 = vmatprep.subr.mxu0 0.0
        %2851 = vmatpush1.msra.mxu0 %v2845
        %2852 = vmatprep.subr.mxu0 0.0
        %2853 = vmatpush1.msra.mxu0 0.0
        %2854 = vmatprep.subr.mxu0 0.0
        %2855 = vmatpush1.msra.mxu0 0.0
        %2856 = vmatprep.subr.mxu0 0.0
        %2857 = vmatpush1.msra.mxu0 0.0
        %2858 = vmatprep.subr.mxu0 0.0
        %2859 = vmatpush1.msra.mxu0 0.0
        %2860 = vmatprep.subr.mxu0 0.0
        %2861 = vmatpush1.msra.mxu0 0.0
        %2862 = vmatprep.subr.mxu0 0.0
        %2863 = vmatpush1.msra.mxu0 0.0
        %2864 = vmatprep.subr.mxu0 0.0
        %2865 = vmatpush1.msra.mxu0 0.0
        %2866 = vmatprep.subr.mxu0 0.0
        %2867 = vmatpush1.msra.mxu0 0.0
        %2868 = vmatprep.subr.mxu0 0.0
        %2869 = vmatpush1.msra.mxu0 0.0
        %2870 = vmatprep.subr.mxu0 0.0
        %2871 = vmatpush1.msra.mxu0 0.0
        %2872 = vmatprep.subr.mxu0 0.0
        %2873 = vmatpush1.msra.mxu0 0.0
        %2874 = vmatprep.subr.mxu0 0.0
        %2875 = vmatpush1.msra.mxu0 0.0
        %2876 = vmatprep.subr.mxu0 0.0
        %2877 = vmatpush1.msra.mxu0 0.0
        %2878 = vmatprep.subr.mxu0 0.0
        %2879 = vmatpush1.msra.mxu0 0.0
        %2880 = vmatprep.subr.mxu0 0.0
        %2881 = vmatpush1.msra.mxu0 0.0
        %2882 = vmatprep.subr.mxu0 0.0
        %2883 = vmatpush1.msra.mxu0 0.0
        %2884 = vmatprep.subr.mxu0 0.0
        %2885 = vmatpush1.msra.mxu0 0.0
        %2886 = vmatprep.subr.mxu0 0.0
        %2887 = vmatpush1.msra.mxu0 0.0
        %2888 = vmatprep.subr.mxu0 0.0
        %2889 = vmatpush1.msra.mxu0 0.0
        %2890 = vmatprep.subr.mxu0 0.0
        %2891 = vmatpush1.msra.mxu0 0.0
        %2892 = vmatprep.subr.mxu0 0.0
        %2893 = vmatpush1.msra.mxu0 0.0
        %2894 = vmatprep.subr.mxu0 0.0
        %2895 = vmatpush1.msra.mxu0 0.0
        %2896 = vmatprep.subr.mxu0 0.0
        %2897 = vmatpush1.msra.mxu0 0.0
        %2898 = vmatprep.subr.mxu0 0.0
        %2899 = vmatpush1.msra.mxu0 0.0
        %2900 = vmatprep.subr.mxu0 0.0
        %2901 = vmatpush1.msra.mxu0 0.0
        %2902 = vmatprep.subr.mxu0 0.0
        %2903 = vmatpush1.msra.mxu0 0.0
        %2904 = vmatprep.subr.mxu0 0.0
        %2905 = vmatpush1.msra.mxu0 0.0
        %2906 = vmatprep.subr.mxu0 0.0
        %2907 = vmatpush1.msra.mxu0 0.0
        %2908 = vmatprep.subr.mxu0 0.0
        %2909 = vmatpush1.msra.mxu0 0.0
        %2910 = vmatprep.subr.mxu0 0.0
        %2911 = vmatpush1.msra.mxu0 0.0
        %2912 = vmatprep.subr.mxu0 0.0
        %2913 = vmatpush1.msra.mxu0 0.0
        %2914 = vmatprep.mubr.f32.mxu0 0.0
        %2915 = vmatmul.mubr.f32.gmra.mrb[0].mxu0 %v2848
        %v2916 = vpop.f32.mrb[0].mxu0
        %v2917 = vadd.f32 0.0, %v2916
        %v2918 = vpop.f32.mrb[0].mxu0
        %2919 = vdwg.mxu0
        %2920 = vrot.lane.b32.xlu0 %v415, 56
        %v2921 = vpop.permute.xlu0 %2920
        %v2924 = vsel %vm434, %v2462, 0
        %2926 = vmatprep.subr.mxu0 0.0
        %2927 = vmatpush1.msra.mxu0 %v2921
        %2928 = vmatprep.subr.mxu0 0.0
        %2929 = vmatpush1.msra.mxu0 0.0
        %2930 = vmatprep.subr.mxu0 0.0
        %2931 = vmatpush1.msra.mxu0 0.0
        %2932 = vmatprep.subr.mxu0 0.0
        %2933 = vmatpush1.msra.mxu0 0.0
        %2934 = vmatprep.subr.mxu0 0.0
        %2935 = vmatpush1.msra.mxu0 0.0
        %2936 = vmatprep.subr.mxu0 0.0
        %2937 = vmatpush1.msra.mxu0 0.0
        %2938 = vmatprep.subr.mxu0 0.0
        %2939 = vmatpush1.msra.mxu0 0.0
        %2940 = vmatprep.subr.mxu0 0.0
        %2941 = vmatpush1.msra.mxu0 0.0
        %2942 = vmatprep.subr.mxu0 0.0
        %2943 = vmatpush1.msra.mxu0 0.0
        %2944 = vmatprep.subr.mxu0 0.0
        %2945 = vmatpush1.msra.mxu0 0.0
        %2946 = vmatprep.subr.mxu0 0.0
        %2947 = vmatpush1.msra.mxu0 0.0
        %2948 = vmatprep.subr.mxu0 0.0
        %2949 = vmatpush1.msra.mxu0 0.0
        %2950 = vmatprep.subr.mxu0 0.0
        %2951 = vmatpush1.msra.mxu0 0.0
        %2952 = vmatprep.subr.mxu0 0.0
        %2953 = vmatpush1.msra.mxu0 0.0
        %2954 = vmatprep.subr.mxu0 0.0
        %2955 = vmatpush1.msra.mxu0 0.0
        %2956 = vmatprep.subr.mxu0 0.0
        %2957 = vmatpush1.msra.mxu0 0.0
        %2958 = vmatprep.subr.mxu0 0.0
        %2959 = vmatpush1.msra.mxu0 0.0
        %2960 = vmatprep.subr.mxu0 0.0
        %2961 = vmatpush1.msra.mxu0 0.0
        %2962 = vmatprep.subr.mxu0 0.0
        %2963 = vmatpush1.msra.mxu0 0.0
        %2964 = vmatprep.subr.mxu0 0.0
        %2965 = vmatpush1.msra.mxu0 0.0
        %2966 = vmatprep.subr.mxu0 0.0
        %2967 = vmatpush1.msra.mxu0 0.0
        %2968 = vmatprep.subr.mxu0 0.0
        %2969 = vmatpush1.msra.mxu0 0.0
        %2970 = vmatprep.subr.mxu0 0.0
        %2971 = vmatpush1.msra.mxu0 0.0
        %2972 = vmatprep.subr.mxu0 0.0
        %2973 = vmatpush1.msra.mxu0 0.0
        %2974 = vmatprep.subr.mxu0 0.0
        %2975 = vmatpush1.msra.mxu0 0.0
        %2976 = vmatprep.subr.mxu0 0.0
        %2977 = vmatpush1.msra.mxu0 0.0
        %2978 = vmatprep.subr.mxu0 0.0
        %2979 = vmatpush1.msra.mxu0 0.0
        %2980 = vmatprep.subr.mxu0 0.0
        %2981 = vmatpush1.msra.mxu0 0.0
        %2982 = vmatprep.subr.mxu0 0.0
        %2983 = vmatpush1.msra.mxu0 0.0
        %2984 = vmatprep.subr.mxu0 0.0
        %2985 = vmatpush1.msra.mxu0 0.0
        %2986 = vmatprep.subr.mxu0 0.0
        %2987 = vmatpush1.msra.mxu0 0.0
        %2988 = vmatprep.subr.mxu0 0.0
        %2989 = vmatpush1.msra.mxu0 0.0
        %2990 = vmatprep.mubr.f32.mxu0 0.0
        %2991 = vmatmul.mubr.f32.gmra.mrb[0].mxu0 %v2924
        %v2992 = vpop.f32.mrb[0].mxu0
        %v2993 = vadd.f32 0.0, %v2992
        %v2994 = vpop.f32.mrb[0].mxu0
        %2995 = vdwg.mxu0
        %2996 = vrot.lane.b32.xlu0 %v420, 56
        %v2997 = vpop.permute.xlu0 %2996
        %v3000 = vsel %vm434, %v2463, 0
        %3002 = vmatprep.subr.mxu0 0.0
        %3003 = vmatpush1.msra.mxu0 %v2997
        %3004 = vmatprep.subr.mxu0 0.0
        %3005 = vmatpush1.msra.mxu0 0.0
        %3006 = vmatprep.subr.mxu0 0.0
        %3007 = vmatpush1.msra.mxu0 0.0
        %3008 = vmatprep.subr.mxu0 0.0
        %3009 = vmatpush1.msra.mxu0 0.0
        %3010 = vmatprep.subr.mxu0 0.0
        %3011 = vmatpush1.msra.mxu0 0.0
        %3012 = vmatprep.subr.mxu0 0.0
        %3013 = vmatpush1.msra.mxu0 0.0
        %3014 = vmatprep.subr.mxu0 0.0
        %3015 = vmatpush1.msra.mxu0 0.0
        %3016 = vmatprep.subr.mxu0 0.0
        %3017 = vmatpush1.msra.mxu0 0.0
        %3018 = vmatprep.subr.mxu0 0.0
        %3019 = vmatpush1.msra.mxu0 0.0
        %3020 = vmatprep.subr.mxu0 0.0
        %3021 = vmatpush1.msra.mxu0 0.0
        %3022 = vmatprep.subr.mxu0 0.0
        %3023 = vmatpush1.msra.mxu0 0.0
        %3024 = vmatprep.subr.mxu0 0.0
        %3025 = vmatpush1.msra.mxu0 0.0
        %3026 = vmatprep.subr.mxu0 0.0
        %3027 = vmatpush1.msra.mxu0 0.0
        %3028 = vmatprep.subr.mxu0 0.0
        %3029 = vmatpush1.msra.mxu0 0.0
        %3030 = vmatprep.subr.mxu0 0.0
        %3031 = vmatpush1.msra.mxu0 0.0
        %3032 = vmatprep.subr.mxu0 0.0
        %3033 = vmatpush1.msra.mxu0 0.0
        %3034 = vmatprep.subr.mxu0 0.0
        %3035 = vmatpush1.msra.mxu0 0.0
        %3036 = vmatprep.subr.mxu0 0.0
        %3037 = vmatpush1.msra.mxu0 0.0
        %3038 = vmatprep.subr.mxu0 0.0
        %3039 = vmatpush1.msra.mxu0 0.0
        %3040 = vmatprep.subr.mxu0 0.0
        %3041 = vmatpush1.msra.mxu0 0.0
        %3042 = vmatprep.subr.mxu0 0.0
        %3043 = vmatpush1.msra.mxu0 0.0
        %3044 = vmatprep.subr.mxu0 0.0
        %3045 = vmatpush1.msra.mxu0 0.0
        %3046 = vmatprep.subr.mxu0 0.0
        %3047 = vmatpush1.msra.mxu0 0.0
        %3048 = vmatprep.subr.mxu0 0.0
        %3049 = vmatpush1.msra.mxu0 0.0
        %3050 = vmatprep.subr.mxu0 0.0
        %3051 = vmatpush1.msra.mxu0 0.0
        %3052 = vmatprep.subr.mxu0 0.0
        %3053 = vmatpush1.msra.mxu0 0.0
        %3054 = vmatprep.subr.mxu0 0.0
        %3055 = vmatpush1.msra.mxu0 0.0
        %3056 = vmatprep.subr.mxu0 0.0
        %3057 = vmatpush1.msra.mxu0 0.0
        %3058 = vmatprep.subr.mxu0 0.0
        %3059 = vmatpush1.msra.mxu0 0.0
        %3060 = vmatprep.subr.mxu0 0.0
        %3061 = vmatpush1.msra.mxu0 0.0
        %3062 = vmatprep.subr.mxu0 0.0
        %3063 = vmatpush1.msra.mxu0 0.0
        %3064 = vmatprep.subr.mxu0 0.0
        %3065 = vmatpush1.msra.mxu0 0.0
        %3066 = vmatprep.mubr.f32.mxu0 0.0
        %3067 = vmatmul.mubr.f32.gmra.mrb[0].mxu0 %v3000
        %v3068 = vpop.f32.mrb[0].mxu0
        %v3069 = vadd.f32 0.0, %v3068
        %v3070 = vpop.f32.mrb[0].mxu0
        %3071 = vdwg.mxu0
        %3072 = vrot.lane.b32.xlu0 %v423, 112
        %v3073 = vpop.permute.xlu0 %3072
        %3074 = vrot.lane.b32.xlu0 %v385, 80
        %v3075 = vpop.permute.xlu0 %3074
        %v3076 = vsel %vm434, %v3073, 0
        %v3078 = vsel %vm434, %v3075, 0
        %3080 = vmatprep.subr.mxu0 0.0
        %3081 = vmatpush1.xpose.msra.mxu0 %v3078
        %3082 = vmatprep.subr.mxu0 0.0
        %3083 = vmatpush1.xpose.msra.mxu0 0.0
        %3084 = vmatprep.subr.mxu0 0.0
        %3085 = vmatpush1.xpose.msra.mxu0 0.0
        %3086 = vmatprep.subr.mxu0 0.0
        %3087 = vmatpush1.xpose.msra.mxu0 0.0
        %3088 = vmatprep.subr.mxu0 0.0
        %3089 = vmatpush1.xpose.msra.mxu0 0.0
        %3090 = vmatprep.subr.mxu0 0.0
        %3091 = vmatpush1.xpose.msra.mxu0 0.0
        %3092 = vmatprep.subr.mxu0 0.0
        %3093 = vmatpush1.xpose.msra.mxu0 0.0
        %3094 = vmatprep.subr.mxu0 0.0
        %3095 = vmatpush1.xpose.msra.mxu0 0.0
        %3096 = vmatprep.subr.mxu0 0.0
        %3097 = vmatpush1.xpose.msra.mxu0 0.0
        %3098 = vmatprep.subr.mxu0 0.0
        %3099 = vmatpush1.xpose.msra.mxu0 0.0
        %3100 = vmatprep.subr.mxu0 0.0
        %3101 = vmatpush1.xpose.msra.mxu0 0.0
        %3102 = vmatprep.subr.mxu0 0.0
        %3103 = vmatpush1.xpose.msra.mxu0 0.0
        %3104 = vmatprep.subr.mxu0 0.0
        %3105 = vmatpush1.xpose.msra.mxu0 0.0
        %3106 = vmatprep.subr.mxu0 0.0
        %3107 = vmatpush1.xpose.msra.mxu0 0.0
        %3108 = vmatprep.subr.mxu0 0.0
        %3109 = vmatpush1.xpose.msra.mxu0 0.0
        %3110 = vmatprep.subr.mxu0 0.0
        %3111 = vmatpush1.xpose.msra.mxu0 0.0
        %3112 = vmatprep.subr.mxu0 0.0
        %3113 = vmatpush1.xpose.msra.mxu0 0.0
        %3114 = vmatprep.subr.mxu0 0.0
        %3115 = vmatpush1.xpose.msra.mxu0 0.0
        %3116 = vmatprep.subr.mxu0 0.0
        %3117 = vmatpush1.xpose.msra.mxu0 0.0
        %3118 = vmatprep.subr.mxu0 0.0
        %3119 = vmatpush1.xpose.msra.mxu0 0.0
        %3120 = vmatprep.subr.mxu0 0.0
        %3121 = vmatpush1.xpose.msra.mxu0 0.0
        %3122 = vmatprep.subr.mxu0 0.0
        %3123 = vmatpush1.xpose.msra.mxu0 0.0
        %3124 = vmatprep.subr.mxu0 0.0
        %3125 = vmatpush1.xpose.msra.mxu0 0.0
        %3126 = vmatprep.subr.mxu0 0.0
        %3127 = vmatpush1.xpose.msra.mxu0 0.0
        %3128 = vmatprep.subr.mxu0 0.0
        %3129 = vmatpush1.xpose.msra.mxu0 0.0
        %3130 = vmatprep.subr.mxu0 0.0
        %3131 = vmatpush1.xpose.msra.mxu0 0.0
        %3132 = vmatprep.subr.mxu0 0.0
        %3133 = vmatpush1.xpose.msra.mxu0 0.0
        %3134 = vmatprep.subr.mxu0 0.0
        %3135 = vmatpush1.xpose.msra.mxu0 0.0
        %3136 = vmatprep.subr.mxu0 0.0
        %3137 = vmatpush1.xpose.msra.mxu0 0.0
        %3138 = vmatprep.subr.mxu0 0.0
        %3139 = vmatpush1.xpose.msra.mxu0 0.0
        %3140 = vmatprep.subr.mxu0 0.0
        %3141 = vmatpush1.xpose.msra.mxu0 0.0
        %3142 = vmatprep.subr.mxu0 0.0
        %3143 = vmatpush1.xpose.msra.mxu0 0.0
        %3144 = vmatprep.mubr.f32.mxu0 0.0
        %3145 = vmatmul.mubr.f32.gmra.mrb[0].mxu0 %v3076
        %v3146 = vpop.f32.mrb[0].mxu0
        %v3147 = vadd.f32 0.0, %v3146
        %v3148 = vpop.f32.mrb[0].mxu0
        %3149 = vdwg.mxu0
        %3150 = vrot.lane.b32.xlu0 %v424, 112
        %v3151 = vpop.permute.xlu0 %3150
        %3152 = vrot.lane.b32.xlu0 %v390, 80
        %v3153 = vpop.permute.xlu0 %3152
        %v3154 = vsel %vm434, %v3151, 0
        %v3156 = vsel %vm434, %v3153, 0
        %3158 = vmatprep.subr.mxu0 0.0
        %3159 = vmatpush1.xpose.msra.mxu0 %v3156
        %3160 = vmatprep.subr.mxu0 0.0
        %3161 = vmatpush1.xpose.msra.mxu0 0.0
        %3162 = vmatprep.subr.mxu0 0.0
        %3163 = vmatpush1.xpose.msra.mxu0 0.0
        %3164 = vmatprep.subr.mxu0 0.0
        %3165 = vmatpush1.xpose.msra.mxu0 0.0
        %3166 = vmatprep.subr.mxu0 0.0
        %3167 = vmatpush1.xpose.msra.mxu0 0.0
        %3168 = vmatprep.subr.mxu0 0.0
        %3169 = vmatpush1.xpose.msra.mxu0 0.0
        %3170 = vmatprep.subr.mxu0 0.0
        %3171 = vmatpush1.xpose.msra.mxu0 0.0
        %3172 = vmatprep.subr.mxu0 0.0
        %3173 = vmatpush1.xpose.msra.mxu0 0.0
        %3174 = vmatprep.subr.mxu0 0.0
        %3175 = vmatpush1.xpose.msra.mxu0 0.0
        %3176 = vmatprep.subr.mxu0 0.0
        %3177 = vmatpush1.xpose.msra.mxu0 0.0
        %3178 = vmatprep.subr.mxu0 0.0
        %3179 = vmatpush1.xpose.msra.mxu0 0.0
        %3180 = vmatprep.subr.mxu0 0.0
        %3181 = vmatpush1.xpose.msra.mxu0 0.0
        %3182 = vmatprep.subr.mxu0 0.0
        %3183 = vmatpush1.xpose.msra.mxu0 0.0
        %3184 = vmatprep.subr.mxu0 0.0
        %3185 = vmatpush1.xpose.msra.mxu0 0.0
        %3186 = vmatprep.subr.mxu0 0.0
        %3187 = vmatpush1.xpose.msra.mxu0 0.0
        %3188 = vmatprep.subr.mxu0 0.0
        %3189 = vmatpush1.xpose.msra.mxu0 0.0
        %3190 = vmatprep.subr.mxu0 0.0
        %3191 = vmatpush1.xpose.msra.mxu0 0.0
        %3192 = vmatprep.subr.mxu0 0.0
        %3193 = vmatpush1.xpose.msra.mxu0 0.0
        %3194 = vmatprep.subr.mxu0 0.0
        %3195 = vmatpush1.xpose.msra.mxu0 0.0
        %3196 = vmatprep.subr.mxu0 0.0
        %3197 = vmatpush1.xpose.msra.mxu0 0.0
        %3198 = vmatprep.subr.mxu0 0.0
        %3199 = vmatpush1.xpose.msra.mxu0 0.0
        %3200 = vmatprep.subr.mxu0 0.0
        %3201 = vmatpush1.xpose.msra.mxu0 0.0
        %3202 = vmatprep.subr.mxu0 0.0
        %3203 = vmatpush1.xpose.msra.mxu0 0.0
        %3204 = vmatprep.subr.mxu0 0.0
        %3205 = vmatpush1.xpose.msra.mxu0 0.0
        %3206 = vmatprep.subr.mxu0 0.0
        %3207 = vmatpush1.xpose.msra.mxu0 0.0
        %3208 = vmatprep.subr.mxu0 0.0
        %3209 = vmatpush1.xpose.msra.mxu0 0.0
        %3210 = vmatprep.subr.mxu0 0.0
        %3211 = vmatpush1.xpose.msra.mxu0 0.0
        %3212 = vmatprep.subr.mxu0 0.0
        %3213 = vmatpush1.xpose.msra.mxu0 0.0
        %3214 = vmatprep.subr.mxu0 0.0
        %3215 = vmatpush1.xpose.msra.mxu0 0.0
        %3216 = vmatprep.subr.mxu0 0.0
        %3217 = vmatpush1.xpose.msra.mxu0 0.0
        %3218 = vmatprep.subr.mxu0 0.0
        %3219 = vmatpush1.xpose.msra.mxu0 0.0
        %3220 = vmatprep.subr.mxu0 0.0
        %3221 = vmatpush1.xpose.msra.mxu0 0.0
        %3222 = vmatprep.mubr.f32.mxu0 0.0
        %3223 = vmatmul.mubr.f32.gmra.mrb[0].mxu0 %v3154
        %v3224 = vpop.f32.mrb[0].mxu0
        %v3225 = vadd.f32 0.0, %v3224
        %v3226 = vpop.f32.mrb[0].mxu0
        %3227 = vdwg.mxu0
        %3228 = vrot.lane.b32.xlu0 %v425, 112
        %v3229 = vpop.permute.xlu0 %3228
        %3230 = vrot.lane.b32.xlu0 %v395, 80
        %v3231 = vpop.permute.xlu0 %3230
        %v3232 = vsel %vm434, %v3229, 0
        %v3234 = vsel %vm434, %v3231, 0
        %3236 = vmatprep.subr.mxu0 0.0
        %3237 = vmatpush1.xpose.msra.mxu0 %v3234
        %3238 = vmatprep.subr.mxu0 0.0
        %3239 = vmatpush1.xpose.msra.mxu0 0.0
        %3240 = vmatprep.subr.mxu0 0.0
        %3241 = vmatpush1.xpose.msra.mxu0 0.0
        %3242 = vmatprep.subr.mxu0 0.0
        %3243 = vmatpush1.xpose.msra.mxu0 0.0
        %3244 = vmatprep.subr.mxu0 0.0
        %3245 = vmatpush1.xpose.msra.mxu0 0.0
        %3246 = vmatprep.subr.mxu0 0.0
        %3247 = vmatpush1.xpose.msra.mxu0 0.0
        %3248 = vmatprep.subr.mxu0 0.0
        %3249 = vmatpush1.xpose.msra.mxu0 0.0
        %3250 = vmatprep.subr.mxu0 0.0
        %3251 = vmatpush1.xpose.msra.mxu0 0.0
        %3252 = vmatprep.subr.mxu0 0.0
        %3253 = vmatpush1.xpose.msra.mxu0 0.0
        %3254 = vmatprep.subr.mxu0 0.0
        %3255 = vmatpush1.xpose.msra.mxu0 0.0
        %3256 = vmatprep.subr.mxu0 0.0
        %3257 = vmatpush1.xpose.msra.mxu0 0.0
        %3258 = vmatprep.subr.mxu0 0.0
        %3259 = vmatpush1.xpose.msra.mxu0 0.0
        %3260 = vmatprep.subr.mxu0 0.0
        %3261 = vmatpush1.xpose.msra.mxu0 0.0
        %3262 = vmatprep.subr.mxu0 0.0
        %3263 = vmatpush1.xpose.msra.mxu0 0.0
        %3264 = vmatprep.subr.mxu0 0.0
        %3265 = vmatpush1.xpose.msra.mxu0 0.0
        %3266 = vmatprep.subr.mxu0 0.0
        %3267 = vmatpush1.xpose.msra.mxu0 0.0
        %3268 = vmatprep.subr.mxu0 0.0
        %3269 = vmatpush1.xpose.msra.mxu0 0.0
        %3270 = vmatprep.subr.mxu0 0.0
        %3271 = vmatpush1.xpose.msra.mxu0 0.0
        %3272 = vmatprep.subr.mxu0 0.0
        %3273 = vmatpush1.xpose.msra.mxu0 0.0
        %3274 = vmatprep.subr.mxu0 0.0
        %3275 = vmatpush1.xpose.msra.mxu0 0.0
        %3276 = vmatprep.subr.mxu0 0.0
        %3277 = vmatpush1.xpose.msra.mxu0 0.0
        %3278 = vmatprep.subr.mxu0 0.0
        %3279 = vmatpush1.xpose.msra.mxu0 0.0
        %3280 = vmatprep.subr.mxu0 0.0
        %3281 = vmatpush1.xpose.msra.mxu0 0.0
        %3282 = vmatprep.subr.mxu0 0.0
        %3283 = vmatpush1.xpose.msra.mxu0 0.0
        %3284 = vmatprep.subr.mxu0 0.0
        %3285 = vmatpush1.xpose.msra.mxu0 0.0
        %3286 = vmatprep.subr.mxu0 0.0
        %3287 = vmatpush1.xpose.msra.mxu0 0.0
        %3288 = vmatprep.subr.mxu0 0.0
        %3289 = vmatpush1.xpose.msra.mxu0 0.0
        %3290 = vmatprep.subr.mxu0 0.0
        %3291 = vmatpush1.xpose.msra.mxu0 0.0
        %3292 = vmatprep.subr.mxu0 0.0
        %3293 = vmatpush1.xpose.msra.mxu0 0.0
        %3294 = vmatprep.subr.mxu0 0.0
        %3295 = vmatpush1.xpose.msra.mxu0 0.0
        %3296 = vmatprep.subr.mxu0 0.0
        %3297 = vmatpush1.xpose.msra.mxu0 0.0
        %3298 = vmatprep.subr.mxu0 0.0
        %3299 = vmatpush1.xpose.msra.mxu0 0.0
        %3300 = vmatprep.mubr.f32.mxu0 0.0
        %3301 = vmatmul.mubr.f32.gmra.mrb[0].mxu0 %v3232
        %v3302 = vpop.f32.mrb[0].mxu0
        %v3303 = vadd.f32 0.0, %v3302
        %v3304 = vpop.f32.mrb[0].mxu0
        %3305 = vdwg.mxu0
        %3306 = vrot.lane.b32.xlu0 %v426, 112
        %v3307 = vpop.permute.xlu0 %3306
        %3308 = vrot.lane.b32.xlu0 %v400, 80
        %v3309 = vpop.permute.xlu0 %3308
        %v3310 = vsel %vm434, %v3307, 0
        %v3312 = vsel %vm434, %v3309, 0
        %3314 = vmatprep.subr.mxu0 0.0
        %3315 = vmatpush1.xpose.msra.mxu0 %v3312
        %3316 = vmatprep.subr.mxu0 0.0
        %3317 = vmatpush1.xpose.msra.mxu0 0.0
        %3318 = vmatprep.subr.mxu0 0.0
        %3319 = vmatpush1.xpose.msra.mxu0 0.0
        %3320 = vmatprep.subr.mxu0 0.0
        %3321 = vmatpush1.xpose.msra.mxu0 0.0
        %3322 = vmatprep.subr.mxu0 0.0
        %3323 = vmatpush1.xpose.msra.mxu0 0.0
        %3324 = vmatprep.subr.mxu0 0.0
        %3325 = vmatpush1.xpose.msra.mxu0 0.0
        %3326 = vmatprep.subr.mxu0 0.0
        %3327 = vmatpush1.xpose.msra.mxu0 0.0
        %3328 = vmatprep.subr.mxu0 0.0
        %3329 = vmatpush1.xpose.msra.mxu0 0.0
        %3330 = vmatprep.subr.mxu0 0.0
        %3331 = vmatpush1.xpose.msra.mxu0 0.0
        %3332 = vmatprep.subr.mxu0 0.0
        %3333 = vmatpush1.xpose.msra.mxu0 0.0
        %3334 = vmatprep.subr.mxu0 0.0
        %3335 = vmatpush1.xpose.msra.mxu0 0.0
        %3336 = vmatprep.subr.mxu0 0.0
        %3337 = vmatpush1.xpose.msra.mxu0 0.0
        %3338 = vmatprep.subr.mxu0 0.0
        %3339 = vmatpush1.xpose.msra.mxu0 0.0
        %3340 = vmatprep.subr.mxu0 0.0
        %3341 = vmatpush1.xpose.msra.mxu0 0.0
        %3342 = vmatprep.subr.mxu0 0.0
        %3343 = vmatpush1.xpose.msra.mxu0 0.0
        %3344 = vmatprep.subr.mxu0 0.0
        %3345 = vmatpush1.xpose.msra.mxu0 0.0
        %3346 = vmatprep.subr.mxu0 0.0
        %3347 = vmatpush1.xpose.msra.mxu0 0.0
        %3348 = vmatprep.subr.mxu0 0.0
        %3349 = vmatpush1.xpose.msra.mxu0 0.0
        %3350 = vmatprep.subr.mxu0 0.0
        %3351 = vmatpush1.xpose.msra.mxu0 0.0
        %3352 = vmatprep.subr.mxu0 0.0
        %3353 = vmatpush1.xpose.msra.mxu0 0.0
        %3354 = vmatprep.subr.mxu0 0.0
        %3355 = vmatpush1.xpose.msra.mxu0 0.0
        %3356 = vmatprep.subr.mxu0 0.0
        %3357 = vmatpush1.xpose.msra.mxu0 0.0
        %3358 = vmatprep.subr.mxu0 0.0
        %3359 = vmatpush1.xpose.msra.mxu0 0.0
        %3360 = vmatprep.subr.mxu0 0.0
        %3361 = vmatpush1.xpose.msra.mxu0 0.0
        %3362 = vmatprep.subr.mxu0 0.0
        %3363 = vmatpush1.xpose.msra.mxu0 0.0
        %3364 = vmatprep.subr.mxu0 0.0
        %3365 = vmatpush1.xpose.msra.mxu0 0.0
        %3366 = vmatprep.subr.mxu0 0.0
        %3367 = vmatpush1.xpose.msra.mxu0 0.0
        %3368 = vmatprep.subr.mxu0 0.0
        %3369 = vmatpush1.xpose.msra.mxu0 0.0
        %3370 = vmatprep.subr.mxu0 0.0
        %3371 = vmatpush1.xpose.msra.mxu0 0.0
        %3372 = vmatprep.subr.mxu0 0.0
        %3373 = vmatpush1.xpose.msra.mxu0 0.0
        %3374 = vmatprep.subr.mxu0 0.0
        %3375 = vmatpush1.xpose.msra.mxu0 0.0
        %3376 = vmatprep.subr.mxu0 0.0
        %3377 = vmatpush1.xpose.msra.mxu0 0.0
        %3378 = vmatprep.mubr.f32.mxu0 0.0
        %3379 = vmatmul.mubr.f32.gmra.mrb[0].mxu0 %v3310
        %v3380 = vpop.f32.mrb[0].mxu0
        %v3381 = vadd.f32 0.0, %v3380
        %v3382 = vpop.f32.mrb[0].mxu0
        %3383 = vdwg.mxu0
        %3384 = vrot.lane.b32.xlu0 %v427, 112
        %v3385 = vpop.permute.xlu0 %3384
        %3386 = vrot.lane.b32.xlu0 %v405, 80
        %v3387 = vpop.permute.xlu0 %3386
        %v3388 = vsel %vm434, %v3385, 0
        %v3390 = vsel %vm434, %v3387, 0
        %3392 = vmatprep.subr.mxu0 0.0
        %3393 = vmatpush1.xpose.msra.mxu0 %v3390
        %3394 = vmatprep.subr.mxu0 0.0
        %3395 = vmatpush1.xpose.msra.mxu0 0.0
        %3396 = vmatprep.subr.mxu0 0.0
        %3397 = vmatpush1.xpose.msra.mxu0 0.0
        %3398 = vmatprep.subr.mxu0 0.0
        %3399 = vmatpush1.xpose.msra.mxu0 0.0
        %3400 = vmatprep.subr.mxu0 0.0
        %3401 = vmatpush1.xpose.msra.mxu0 0.0
        %3402 = vmatprep.subr.mxu0 0.0
        %3403 = vmatpush1.xpose.msra.mxu0 0.0
        %3404 = vmatprep.subr.mxu0 0.0
        %3405 = vmatpush1.xpose.msra.mxu0 0.0
        %3406 = vmatprep.subr.mxu0 0.0
        %3407 = vmatpush1.xpose.msra.mxu0 0.0
        %3408 = vmatprep.subr.mxu0 0.0
        %3409 = vmatpush1.xpose.msra.mxu0 0.0
        %3410 = vmatprep.subr.mxu0 0.0
        %3411 = vmatpush1.xpose.msra.mxu0 0.0
        %3412 = vmatprep.subr.mxu0 0.0
        %3413 = vmatpush1.xpose.msra.mxu0 0.0
        %3414 = vmatprep.subr.mxu0 0.0
        %3415 = vmatpush1.xpose.msra.mxu0 0.0
        %3416 = vmatprep.subr.mxu0 0.0
        %3417 = vmatpush1.xpose.msra.mxu0 0.0
        %3418 = vmatprep.subr.mxu0 0.0
        %3419 = vmatpush1.xpose.msra.mxu0 0.0
        %3420 = vmatprep.subr.mxu0 0.0
        %3421 = vmatpush1.xpose.msra.mxu0 0.0
        %3422 = vmatprep.subr.mxu0 0.0
        %3423 = vmatpush1.xpose.msra.mxu0 0.0
        %3424 = vmatprep.subr.mxu0 0.0
        %3425 = vmatpush1.xpose.msra.mxu0 0.0
        %3426 = vmatprep.subr.mxu0 0.0
        %3427 = vmatpush1.xpose.msra.mxu0 0.0
        %3428 = vmatprep.subr.mxu0 0.0
        %3429 = vmatpush1.xpose.msra.mxu0 0.0
        %3430 = vmatprep.subr.mxu0 0.0
        %3431 = vmatpush1.xpose.msra.mxu0 0.0
        %3432 = vmatprep.subr.mxu0 0.0
        %3433 = vmatpush1.xpose.msra.mxu0 0.0
        %3434 = vmatprep.subr.mxu0 0.0
        %3435 = vmatpush1.xpose.msra.mxu0 0.0
        %3436 = vmatprep.subr.mxu0 0.0
        %3437 = vmatpush1.xpose.msra.mxu0 0.0
        %3438 = vmatprep.subr.mxu0 0.0
        %3439 = vmatpush1.xpose.msra.mxu0 0.0
        %3440 = vmatprep.subr.mxu0 0.0
        %3441 = vmatpush1.xpose.msra.mxu0 0.0
        %3442 = vmatprep.subr.mxu0 0.0
        %3443 = vmatpush1.xpose.msra.mxu0 0.0
        %3444 = vmatprep.subr.mxu0 0.0
        %3445 = vmatpush1.xpose.msra.mxu0 0.0
        %3446 = vmatprep.subr.mxu0 0.0
        %3447 = vmatpush1.xpose.msra.mxu0 0.0
        %3448 = vmatprep.subr.mxu0 0.0
        %3449 = vmatpush1.xpose.msra.mxu0 0.0
        %3450 = vmatprep.subr.mxu0 0.0
        %3451 = vmatpush1.xpose.msra.mxu0 0.0
        %3452 = vmatprep.subr.mxu0 0.0
        %3453 = vmatpush1.xpose.msra.mxu0 0.0
        %3454 = vmatprep.subr.mxu0 0.0
        %3455 = vmatpush1.xpose.msra.mxu0 0.0
        %3456 = vmatprep.mubr.f32.mxu0 0.0
        %3457 = vmatmul.mubr.f32.gmra.mrb[0].mxu0 %v3388
        %v3458 = vpop.f32.mrb[0].mxu0
        %v3459 = vadd.f32 0.0, %v3458
        %v3460 = vpop.f32.mrb[0].mxu0
        %3461 = vdwg.mxu0
        %3462 = vrot.lane.b32.xlu0 %v428, 112
        %v3463 = vpop.permute.xlu0 %3462
        %3464 = vrot.lane.b32.xlu0 %v410, 80
        %v3465 = vpop.permute.xlu0 %3464
        %v3466 = vsel %vm434, %v3463, 0
        %v3468 = vsel %vm434, %v3465, 0
        %3470 = vmatprep.subr.mxu0 0.0
        %3471 = vmatpush1.xpose.msra.mxu0 %v3468
        %3472 = vmatprep.subr.mxu0 0.0
        %3473 = vmatpush1.xpose.msra.mxu0 0.0
        %3474 = vmatprep.subr.mxu0 0.0
        %3475 = vmatpush1.xpose.msra.mxu0 0.0
        %3476 = vmatprep.subr.mxu0 0.0
        %3477 = vmatpush1.xpose.msra.mxu0 0.0
        %3478 = vmatprep.subr.mxu0 0.0
        %3479 = vmatpush1.xpose.msra.mxu0 0.0
        %3480 = vmatprep.subr.mxu0 0.0
        %3481 = vmatpush1.xpose.msra.mxu0 0.0
        %3482 = vmatprep.subr.mxu0 0.0
        %3483 = vmatpush1.xpose.msra.mxu0 0.0
        %3484 = vmatprep.subr.mxu0 0.0
        %3485 = vmatpush1.xpose.msra.mxu0 0.0
        %3486 = vmatprep.subr.mxu0 0.0
        %3487 = vmatpush1.xpose.msra.mxu0 0.0
        %3488 = vmatprep.subr.mxu0 0.0
        %3489 = vmatpush1.xpose.msra.mxu0 0.0
        %3490 = vmatprep.subr.mxu0 0.0
        %3491 = vmatpush1.xpose.msra.mxu0 0.0
        %3492 = vmatprep.subr.mxu0 0.0
        %3493 = vmatpush1.xpose.msra.mxu0 0.0
        %3494 = vmatprep.subr.mxu0 0.0
        %3495 = vmatpush1.xpose.msra.mxu0 0.0
        %3496 = vmatprep.subr.mxu0 0.0
        %3497 = vmatpush1.xpose.msra.mxu0 0.0
        %3498 = vmatprep.subr.mxu0 0.0
        %3499 = vmatpush1.xpose.msra.mxu0 0.0
        %3500 = vmatprep.subr.mxu0 0.0
        %3501 = vmatpush1.xpose.msra.mxu0 0.0
        %3502 = vmatprep.subr.mxu0 0.0
        %3503 = vmatpush1.xpose.msra.mxu0 0.0
        %3504 = vmatprep.subr.mxu0 0.0
        %3505 = vmatpush1.xpose.msra.mxu0 0.0
        %3506 = vmatprep.subr.mxu0 0.0
        %3507 = vmatpush1.xpose.msra.mxu0 0.0
        %3508 = vmatprep.subr.mxu0 0.0
        %3509 = vmatpush1.xpose.msra.mxu0 0.0
        %3510 = vmatprep.subr.mxu0 0.0
        %3511 = vmatpush1.xpose.msra.mxu0 0.0
        %3512 = vmatprep.subr.mxu0 0.0
        %3513 = vmatpush1.xpose.msra.mxu0 0.0
        %3514 = vmatprep.subr.mxu0 0.0
        %3515 = vmatpush1.xpose.msra.mxu0 0.0
        %3516 = vmatprep.subr.mxu0 0.0
        %3517 = vmatpush1.xpose.msra.mxu0 0.0
        %3518 = vmatprep.subr.mxu0 0.0
        %3519 = vmatpush1.xpose.msra.mxu0 0.0
        %3520 = vmatprep.subr.mxu0 0.0
        %3521 = vmatpush1.xpose.msra.mxu0 0.0
        %3522 = vmatprep.subr.mxu0 0.0
        %3523 = vmatpush1.xpose.msra.mxu0 0.0
        %3524 = vmatprep.subr.mxu0 0.0
        %3525 = vmatpush1.xpose.msra.mxu0 0.0
        %3526 = vmatprep.subr.mxu0 0.0
        %3527 = vmatpush1.xpose.msra.mxu0 0.0
        %3528 = vmatprep.subr.mxu0 0.0
        %3529 = vmatpush1.xpose.msra.mxu0 0.0
        %3530 = vmatprep.subr.mxu0 0.0
        %3531 = vmatpush1.xpose.msra.mxu0 0.0
        %3532 = vmatprep.subr.mxu0 0.0
        %3533 = vmatpush1.xpose.msra.mxu0 0.0
        %3534 = vmatprep.mubr.f32.mxu0 0.0
        %3535 = vmatmul.mubr.f32.gmra.mrb[0].mxu0 %v3466
        %v3536 = vpop.f32.mrb[0].mxu0
        %v3537 = vadd.f32 0.0, %v3536
        %v3538 = vpop.f32.mrb[0].mxu0
        %3539 = vdwg.mxu0
        %3540 = vrot.lane.b32.xlu0 %v429, 112
        %v3541 = vpop.permute.xlu0 %3540
        %3542 = vrot.lane.b32.xlu0 %v415, 80
        %v3543 = vpop.permute.xlu0 %3542
        %v3544 = vsel %vm434, %v3541, 0
        %v3546 = vsel %vm434, %v3543, 0
        %3548 = vmatprep.subr.mxu0 0.0
        %3549 = vmatpush1.xpose.msra.mxu0 %v3546
        %3550 = vmatprep.subr.mxu0 0.0
        %3551 = vmatpush1.xpose.msra.mxu0 0.0
        %3552 = vmatprep.subr.mxu0 0.0
        %3553 = vmatpush1.xpose.msra.mxu0 0.0
        %3554 = vmatprep.subr.mxu0 0.0
        %3555 = vmatpush1.xpose.msra.mxu0 0.0
        %3556 = vmatprep.subr.mxu0 0.0
        %3557 = vmatpush1.xpose.msra.mxu0 0.0
        %3558 = vmatprep.subr.mxu0 0.0
        %3559 = vmatpush1.xpose.msra.mxu0 0.0
        %3560 = vmatprep.subr.mxu0 0.0
        %3561 = vmatpush1.xpose.msra.mxu0 0.0
        %3562 = vmatprep.subr.mxu0 0.0
        %3563 = vmatpush1.xpose.msra.mxu0 0.0
        %3564 = vmatprep.subr.mxu0 0.0
        %3565 = vmatpush1.xpose.msra.mxu0 0.0
        %3566 = vmatprep.subr.mxu0 0.0
        %3567 = vmatpush1.xpose.msra.mxu0 0.0
        %3568 = vmatprep.subr.mxu0 0.0
        %3569 = vmatpush1.xpose.msra.mxu0 0.0
        %3570 = vmatprep.subr.mxu0 0.0
        %3571 = vmatpush1.xpose.msra.mxu0 0.0
        %3572 = vmatprep.subr.mxu0 0.0
        %3573 = vmatpush1.xpose.msra.mxu0 0.0
        %3574 = vmatprep.subr.mxu0 0.0
        %3575 = vmatpush1.xpose.msra.mxu0 0.0
        %3576 = vmatprep.subr.mxu0 0.0
        %3577 = vmatpush1.xpose.msra.mxu0 0.0
        %3578 = vmatprep.subr.mxu0 0.0
        %3579 = vmatpush1.xpose.msra.mxu0 0.0
        %3580 = vmatprep.subr.mxu0 0.0
        %3581 = vmatpush1.xpose.msra.mxu0 0.0
        %3582 = vmatprep.subr.mxu0 0.0
        %3583 = vmatpush1.xpose.msra.mxu0 0.0
        %3584 = vmatprep.subr.mxu0 0.0
        %3585 = vmatpush1.xpose.msra.mxu0 0.0
        %3586 = vmatprep.subr.mxu0 0.0
        %3587 = vmatpush1.xpose.msra.mxu0 0.0
        %3588 = vmatprep.subr.mxu0 0.0
        %3589 = vmatpush1.xpose.msra.mxu0 0.0
        %3590 = vmatprep.subr.mxu0 0.0
        %3591 = vmatpush1.xpose.msra.mxu0 0.0
        %3592 = vmatprep.subr.mxu0 0.0
        %3593 = vmatpush1.xpose.msra.mxu0 0.0
        %3594 = vmatprep.subr.mxu0 0.0
        %3595 = vmatpush1.xpose.msra.mxu0 0.0
        %3596 = vmatprep.subr.mxu0 0.0
        %3597 = vmatpush1.xpose.msra.mxu0 0.0
        %3598 = vmatprep.subr.mxu0 0.0
        %3599 = vmatpush1.xpose.msra.mxu0 0.0
        %3600 = vmatprep.subr.mxu0 0.0
        %3601 = vmatpush1.xpose.msra.mxu0 0.0
        %3602 = vmatprep.subr.mxu0 0.0
        %3603 = vmatpush1.xpose.msra.mxu0 0.0
        %3604 = vmatprep.subr.mxu0 0.0
        %3605 = vmatpush1.xpose.msra.mxu0 0.0
        %3606 = vmatprep.subr.mxu0 0.0
        %3607 = vmatpush1.xpose.msra.mxu0 0.0
        %3608 = vmatprep.subr.mxu0 0.0
        %3609 = vmatpush1.xpose.msra.mxu0 0.0
        %3610 = vmatprep.subr.mxu0 0.0
        %3611 = vmatpush1.xpose.msra.mxu0 0.0
        %3612 = vmatprep.mubr.f32.mxu0 0.0
        %3613 = vmatmul.mubr.f32.gmra.mrb[0].mxu0 %v3544
        %v3614 = vpop.f32.mrb[0].mxu0
        %v3615 = vadd.f32 0.0, %v3614
        %v3616 = vpop.f32.mrb[0].mxu0
        %3617 = vdwg.mxu0
        %3618 = vrot.lane.b32.xlu0 %v430, 112
        %v3619 = vpop.permute.xlu0 %3618
        %3620 = vrot.lane.b32.xlu0 %v420, 80
        %v3621 = vpop.permute.xlu0 %3620
        %v3622 = vsel %vm434, %v3619, 0
        %v3624 = vsel %vm434, %v3621, 0
        %3626 = vmatprep.subr.mxu0 0.0
        %3627 = vmatpush1.xpose.msra.mxu0 %v3624
        %3628 = vmatprep.subr.mxu0 0.0
        %3629 = vmatpush1.xpose.msra.mxu0 0.0
        %3630 = vmatprep.subr.mxu0 0.0
        %3631 = vmatpush1.xpose.msra.mxu0 0.0
        %3632 = vmatprep.subr.mxu0 0.0
        %3633 = vmatpush1.xpose.msra.mxu0 0.0
        %3634 = vmatprep.subr.mxu0 0.0
        %3635 = vmatpush1.xpose.msra.mxu0 0.0
        %3636 = vmatprep.subr.mxu0 0.0
        %3637 = vmatpush1.xpose.msra.mxu0 0.0
        %3638 = vmatprep.subr.mxu0 0.0
        %3639 = vmatpush1.xpose.msra.mxu0 0.0
        %3640 = vmatprep.subr.mxu0 0.0
        %3641 = vmatpush1.xpose.msra.mxu0 0.0
        %3642 = vmatprep.subr.mxu0 0.0
        %3643 = vmatpush1.xpose.msra.mxu0 0.0
        %3644 = vmatprep.subr.mxu0 0.0
        %3645 = vmatpush1.xpose.msra.mxu0 0.0
        %3646 = vmatprep.subr.mxu0 0.0
        %3647 = vmatpush1.xpose.msra.mxu0 0.0
        %3648 = vmatprep.subr.mxu0 0.0
        %3649 = vmatpush1.xpose.msra.mxu0 0.0
        %3650 = vmatprep.subr.mxu0 0.0
        %3651 = vmatpush1.xpose.msra.mxu0 0.0
        %3652 = vmatprep.subr.mxu0 0.0
        %3653 = vmatpush1.xpose.msra.mxu0 0.0
        %3654 = vmatprep.subr.mxu0 0.0
        %3655 = vmatpush1.xpose.msra.mxu0 0.0
        %3656 = vmatprep.subr.mxu0 0.0
        %3657 = vmatpush1.xpose.msra.mxu0 0.0
        %3658 = vmatprep.subr.mxu0 0.0
        %3659 = vmatpush1.xpose.msra.mxu0 0.0
        %3660 = vmatprep.subr.mxu0 0.0
        %3661 = vmatpush1.xpose.msra.mxu0 0.0
        %3662 = vmatprep.subr.mxu0 0.0
        %3663 = vmatpush1.xpose.msra.mxu0 0.0
        %3664 = vmatprep.subr.mxu0 0.0
        %3665 = vmatpush1.xpose.msra.mxu0 0.0
        %3666 = vmatprep.subr.mxu0 0.0
        %3667 = vmatpush1.xpose.msra.mxu0 0.0
        %3668 = vmatprep.subr.mxu0 0.0
        %3669 = vmatpush1.xpose.msra.mxu0 0.0
        %3670 = vmatprep.subr.mxu0 0.0
        %3671 = vmatpush1.xpose.msra.mxu0 0.0
        %3672 = vmatprep.subr.mxu0 0.0
        %3673 = vmatpush1.xpose.msra.mxu0 0.0
        %3674 = vmatprep.subr.mxu0 0.0
        %3675 = vmatpush1.xpose.msra.mxu0 0.0
        %3676 = vmatprep.subr.mxu0 0.0
        %3677 = vmatpush1.xpose.msra.mxu0 0.0
        %3678 = vmatprep.subr.mxu0 0.0
        %3679 = vmatpush1.xpose.msra.mxu0 0.0
        %3680 = vmatprep.subr.mxu0 0.0
        %3681 = vmatpush1.xpose.msra.mxu0 0.0
        %3682 = vmatprep.subr.mxu0 0.0
        %3683 = vmatpush1.xpose.msra.mxu0 0.0
        %3684 = vmatprep.subr.mxu0 0.0
        %3685 = vmatpush1.xpose.msra.mxu0 0.0
        %3686 = vmatprep.subr.mxu0 0.0
        %3687 = vmatpush1.xpose.msra.mxu0 0.0
        %3688 = vmatprep.subr.mxu0 0.0
        %3689 = vmatpush1.xpose.msra.mxu0 0.0
        %3690 = vmatprep.mubr.f32.mxu0 0.0
        %3691 = vmatmul.mubr.f32.gmra.mrb[0].mxu0 %v3622
        %v3692 = vpop.f32.mrb[0].mxu0
        %v3693 = vadd.f32 0.0, %v3692
        %v3694 = vpop.f32.mrb[0].mxu0
        %3695 = vdwg.mxu0
        %v3696 = vsel %vm434, %v3147, -inf
        %3697 = vmax.xlane.f32.xlu0 %v3696
        %v3698 = vpop.xlane.xlu0 %3697
        %v3699 = vsel %vm434, %v3225, -inf
        %3700 = vmax.xlane.f32.xlu0 %v3699
        %v3701 = vpop.xlane.xlu0 %3700
        %v3702 = vsel %vm434, %v3303, -inf
        %3703 = vmax.xlane.f32.xlu0 %v3702
        %v3704 = vpop.xlane.xlu0 %3703
        %v3705 = vsel %vm434, %v3381, -inf
        %3706 = vmax.xlane.f32.xlu0 %v3705
        %v3707 = vpop.xlane.xlu0 %3706
        %v3708 = vsel %vm434, %v3459, -inf
        %3709 = vmax.xlane.f32.xlu0 %v3708
        %v3710 = vpop.xlane.xlu0 %3709
        %v3711 = vsel %vm434, %v3537, -inf
        %3712 = vmax.xlane.f32.xlu0 %v3711
        %v3713 = vpop.xlane.xlu0 %3712
        %v3714 = vsel %vm434, %v3615, -inf
        %3715 = vmax.xlane.f32.xlu0 %v3714
        %v3716 = vpop.xlane.xlu0 %3715
        %v3717 = vsel %vm434, %v3693, -inf
        %3718 = vmax.xlane.f32.xlu0 %v3717
        %v3719 = vpop.xlane.xlu0 %3718
        %v3720 = vsub.f32 %v3147, %v3698
        %v3721 = vsub.f32 %v3225, %v3701
        %v3722 = vsub.f32 %v3303, %v3704
        %v3723 = vsub.f32 %v3381, %v3707
        %v3724 = vsub.f32 %v3459, %v3710
        %v3725 = vsub.f32 %v3537, %v3713
        %v3726 = vsub.f32 %v3615, %v3716
        %v3727 = vsub.f32 %v3693, %v3719
        %v3728 = vmul.f32 %v3720, 1.442695
        %v3729 = vpow.pop %v3728
        %v3730 = vmul.f32 %v3721, 1.442695
        %v3731 = vpow.pop %v3730
        %v3732 = vmul.f32 %v3722, 1.442695
        %v3733 = vpow.pop %v3732
        %v3734 = vmul.f32 %v3723, 1.442695
        %v3735 = vpow.pop %v3734
        %v3736 = vmul.f32 %v3724, 1.442695
        %v3737 = vpow.pop %v3736
        %v3738 = vmul.f32 %v3725, 1.442695
        %v3739 = vpow.pop %v3738
        %v3740 = vmul.f32 %v3726, 1.442695
        %v3741 = vpow.pop %v3740
        %v3742 = vmul.f32 %v3727, 1.442695
        %v3743 = vpow.pop %v3742
        %v3744 = vsel %vm434, %v3729, 0.0
        %3745 = vadd.xlane.f32.xlu0 %v3744
        %v3746 = vpop.xlane.xlu0 %3745
        %v3747 = vsel %vm434, %v3731, 0.0
        %3748 = vadd.xlane.f32.xlu0 %v3747
        %v3749 = vpop.xlane.xlu0 %3748
        %v3750 = vsel %vm434, %v3733, 0.0
        %3751 = vadd.xlane.f32.xlu0 %v3750
        %v3752 = vpop.xlane.xlu0 %3751
        %v3753 = vsel %vm434, %v3735, 0.0
        %3754 = vadd.xlane.f32.xlu0 %v3753
        %v3755 = vpop.xlane.xlu0 %3754
        %v3756 = vsel %vm434, %v3737, 0.0
        %3757 = vadd.xlane.f32.xlu0 %v3756
        %v3758 = vpop.xlane.xlu0 %3757
        %v3759 = vsel %vm434, %v3739, 0.0
        %3760 = vadd.xlane.f32.xlu0 %v3759
        %v3761 = vpop.xlane.xlu0 %3760
        %v3762 = vsel %vm434, %v3741, 0.0
        %3763 = vadd.xlane.f32.xlu0 %v3762
        %v3764 = vpop.xlane.xlu0 %3763
        %v3765 = vsel %vm434, %v3743, 0.0
        %3766 = vadd.xlane.f32.xlu0 %v3765
        %v3767 = vpop.xlane.xlu0 %3766
        %v3768 = vrcp.pop %v3746
        %v3769 = vrcp.pop %v3749
        %v3770 = vrcp.pop %v3752
        %v3771 = vrcp.pop %v3755
        %v3772 = vrcp.pop %v3758
        %v3773 = vrcp.pop %v3761
        %v3774 = vrcp.pop %v3764
        %v3775 = vrcp.pop %v3767
        %v3776 = vmul.f32 %v3729, %v3768
        %v3777 = vmul.f32 %v3731, %v3769
        %v3778 = vmul.f32 %v3733, %v3770
        %v3779 = vmul.f32 %v3735, %v3771
        %v3780 = vmul.f32 %v3737, %v3772
        %v3781 = vmul.f32 %v3739, %v3773
        %v3782 = vmul.f32 %v3741, %v3774
        %v3783 = vmul.f32 %v3743, %v3775
        %3784 = vrot.lane.b32.xlu0 %v385, 48
        %v3785 = vpop.permute.xlu0 %3784
        %v3788 = vsel %vm434, %v3776, 0
        %3790 = vmatprep.subr.mxu0 0.0
        %3791 = vmatpush1.msra.mxu0 %v3785
        %3792 = vmatprep.subr.mxu0 0.0
        %3793 = vmatpush1.msra.mxu0 0.0
        %3794 = vmatprep.subr.mxu0 0.0
        %3795 = vmatpush1.msra.mxu0 0.0
        %3796 = vmatprep.subr.mxu0 0.0
        %3797 = vmatpush1.msra.mxu0 0.0
        %3798 = vmatprep.subr.mxu0 0.0
        %3799 = vmatpush1.msra.mxu0 0.0
        %3800 = vmatprep.subr.mxu0 0.0
        %3801 = vmatpush1.msra.mxu0 0.0
        %3802 = vmatprep.subr.mxu0 0.0
        %3803 = vmatpush1.msra.mxu0 0.0
        %3804 = vmatprep.subr.mxu0 0.0
        %3805 = vmatpush1.msra.mxu0 0.0
        %3806 = vmatprep.subr.mxu0 0.0
        %3807 = vmatpush1.msra.mxu0 0.0
        %3808 = vmatprep.subr.mxu0 0.0
        %3809 = vmatpush1.msra.mxu0 0.0
        %3810 = vmatprep.subr.mxu0 0.0
        %3811 = vmatpush1.msra.mxu0 0.0
        %3812 = vmatprep.subr.mxu0 0.0
        %3813 = vmatpush1.msra.mxu0 0.0
        %3814 = vmatprep.subr.mxu0 0.0
        %3815 = vmatpush1.msra.mxu0 0.0
        %3816 = vmatprep.subr.mxu0 0.0
        %3817 = vmatpush1.msra.mxu0 0.0
        %3818 = vmatprep.subr.mxu0 0.0
        %3819 = vmatpush1.msra.mxu0 0.0
        %3820 = vmatprep.subr.mxu0 0.0
        %3821 = vmatpush1.msra.mxu0 0.0
        %3822 = vmatprep.subr.mxu0 0.0
        %3823 = vmatpush1.msra.mxu0 0.0
        %3824 = vmatprep.subr.mxu0 0.0
        %3825 = vmatpush1.msra.mxu0 0.0
        %3826 = vmatprep.subr.mxu0 0.0
        %3827 = vmatpush1.msra.mxu0 0.0
        %3828 = vmatprep.subr.mxu0 0.0
        %3829 = vmatpush1.msra.mxu0 0.0
        %3830 = vmatprep.subr.mxu0 0.0
        %3831 = vmatpush1.msra.mxu0 0.0
        %3832 = vmatprep.subr.mxu0 0.0
        %3833 = vmatpush1.msra.mxu0 0.0
        %3834 = vmatprep.subr.mxu0 0.0
        %3835 = vmatpush1.msra.mxu0 0.0
        %3836 = vmatprep.subr.mxu0 0.0
        %3837 = vmatpush1.msra.mxu0 0.0
        %3838 = vmatprep.subr.mxu0 0.0
        %3839 = vmatpush1.msra.mxu0 0.0
        %3840 = vmatprep.subr.mxu0 0.0
        %3841 = vmatpush1.msra.mxu0 0.0
        %3842 = vmatprep.subr.mxu0 0.0
        %3843 = vmatpush1.msra.mxu0 0.0
        %3844 = vmatprep.subr.mxu0 0.0
        %3845 = vmatpush1.msra.mxu0 0.0
        %3846 = vmatprep.subr.mxu0 0.0
        %3847 = vmatpush1.msra.mxu0 0.0
        %3848 = vmatprep.subr.mxu0 0.0
        %3849 = vmatpush1.msra.mxu0 0.0
        %3850 = vmatprep.subr.mxu0 0.0
        %3851 = vmatpush1.msra.mxu0 0.0
        %3852 = vmatprep.subr.mxu0 0.0
        %3853 = vmatpush1.msra.mxu0 0.0
        %3854 = vmatprep.mubr.f32.mxu0 0.0
        %3855 = vmatmul.mubr.f32.gmra.mrb[0].mxu0 %v3788
        %v3856 = vpop.f32.mrb[0].mxu0
        %v3857 = vadd.f32 0.0, %v3856
        %v3858 = vpop.f32.mrb[0].mxu0
        %3859 = vdwg.mxu0
        %3860 = vrot.lane.b32.xlu0 %v390, 48
        %v3861 = vpop.permute.xlu0 %3860
        %v3864 = vsel %vm434, %v3777, 0
        %3866 = vmatprep.subr.mxu0 0.0
        %3867 = vmatpush1.msra.mxu0 %v3861
        %3868 = vmatprep.subr.mxu0 0.0
        %3869 = vmatpush1.msra.mxu0 0.0
        %3870 = vmatprep.subr.mxu0 0.0
        %3871 = vmatpush1.msra.mxu0 0.0
        %3872 = vmatprep.subr.mxu0 0.0
        %3873 = vmatpush1.msra.mxu0 0.0
        %3874 = vmatprep.subr.mxu0 0.0
        %3875 = vmatpush1.msra.mxu0 0.0
        %3876 = vmatprep.subr.mxu0 0.0
        %3877 = vmatpush1.msra.mxu0 0.0
        %3878 = vmatprep.subr.mxu0 0.0
        %3879 = vmatpush1.msra.mxu0 0.0
        %3880 = vmatprep.subr.mxu0 0.0
        %3881 = vmatpush1.msra.mxu0 0.0
        %3882 = vmatprep.subr.mxu0 0.0
        %3883 = vmatpush1.msra.mxu0 0.0
        %3884 = vmatprep.subr.mxu0 0.0
        %3885 = vmatpush1.msra.mxu0 0.0
        %3886 = vmatprep.subr.mxu0 0.0
        %3887 = vmatpush1.msra.mxu0 0.0
        %3888 = vmatprep.subr.mxu0 0.0
        %3889 = vmatpush1.msra.mxu0 0.0
        %3890 = vmatprep.subr.mxu0 0.0
        %3891 = vmatpush1.msra.mxu0 0.0
        %3892 = vmatprep.subr.mxu0 0.0
        %3893 = vmatpush1.msra.mxu0 0.0
        %3894 = vmatprep.subr.mxu0 0.0
        %3895 = vmatpush1.msra.mxu0 0.0
        %3896 = vmatprep.subr.mxu0 0.0
        %3897 = vmatpush1.msra.mxu0 0.0
        %3898 = vmatprep.subr.mxu0 0.0
        %3899 = vmatpush1.msra.mxu0 0.0
        %3900 = vmatprep.subr.mxu0 0.0
        %3901 = vmatpush1.msra.mxu0 0.0
        %3902 = vmatprep.subr.mxu0 0.0
        %3903 = vmatpush1.msra.mxu0 0.0
        %3904 = vmatprep.subr.mxu0 0.0
        %3905 = vmatpush1.msra.mxu0 0.0
        %3906 = vmatprep.subr.mxu0 0.0
        %3907 = vmatpush1.msra.mxu0 0.0
        %3908 = vmatprep.subr.mxu0 0.0
        %3909 = vmatpush1.msra.mxu0 0.0
        %3910 = vmatprep.subr.mxu0 0.0
        %3911 = vmatpush1.msra.mxu0 0.0
        %3912 = vmatprep.subr.mxu0 0.0
        %3913 = vmatpush1.msra.mxu0 0.0
        %3914 = vmatprep.subr.mxu0 0.0
        %3915 = vmatpush1.msra.mxu0 0.0
        %3916 = vmatprep.subr.mxu0 0.0
        %3917 = vmatpush1.msra.mxu0 0.0
        %3918 = vmatprep.subr.mxu0 0.0
        %3919 = vmatpush1.msra.mxu0 0.0
        %3920 = vmatprep.subr.mxu0 0.0
        %3921 = vmatpush1.msra.mxu0 0.0
        %3922 = vmatprep.subr.mxu0 0.0
        %3923 = vmatpush1.msra.mxu0 0.0
        %3924 = vmatprep.subr.mxu0 0.0
        %3925 = vmatpush1.msra.mxu0 0.0
        %3926 = vmatprep.subr.mxu0 0.0
        %3927 = vmatpush1.msra.mxu0 0.0
        %3928 = vmatprep.subr.mxu0 0.0
        %3929 = vmatpush1.msra.mxu0 0.0
        %3930 = vmatprep.mubr.f32.mxu0 0.0
        %3931 = vmatmul.mubr.f32.gmra.mrb[0].mxu0 %v3864
        %v3932 = vpop.f32.mrb[0].mxu0
        %v3933 = vadd.f32 0.0, %v3932
        %v3934 = vpop.f32.mrb[0].mxu0
        %3935 = vdwg.mxu0
        %3936 = vrot.lane.b32.xlu0 %v395, 48
        %v3937 = vpop.permute.xlu0 %3936
        %v3940 = vsel %vm434, %v3778, 0
        %3942 = vmatprep.subr.mxu0 0.0
        %3943 = vmatpush1.msra.mxu0 %v3937
        %3944 = vmatprep.subr.mxu0 0.0
        %3945 = vmatpush1.msra.mxu0 0.0
        %3946 = vmatprep.subr.mxu0 0.0
        %3947 = vmatpush1.msra.mxu0 0.0
        %3948 = vmatprep.subr.mxu0 0.0
        %3949 = vmatpush1.msra.mxu0 0.0
        %3950 = vmatprep.subr.mxu0 0.0
        %3951 = vmatpush1.msra.mxu0 0.0
        %3952 = vmatprep.subr.mxu0 0.0
        %3953 = vmatpush1.msra.mxu0 0.0
        %3954 = vmatprep.subr.mxu0 0.0
        %3955 = vmatpush1.msra.mxu0 0.0
        %3956 = vmatprep.subr.mxu0 0.0
        %3957 = vmatpush1.msra.mxu0 0.0
        %3958 = vmatprep.subr.mxu0 0.0
        %3959 = vmatpush1.msra.mxu0 0.0
        %3960 = vmatprep.subr.mxu0 0.0
        %3961 = vmatpush1.msra.mxu0 0.0
        %3962 = vmatprep.subr.mxu0 0.0
        %3963 = vmatpush1.msra.mxu0 0.0
        %3964 = vmatprep.subr.mxu0 0.0
        %3965 = vmatpush1.msra.mxu0 0.0
        %3966 = vmatprep.subr.mxu0 0.0
        %3967 = vmatpush1.msra.mxu0 0.0
        %3968 = vmatprep.subr.mxu0 0.0
        %3969 = vmatpush1.msra.mxu0 0.0
        %3970 = vmatprep.subr.mxu0 0.0
        %3971 = vmatpush1.msra.mxu0 0.0
        %3972 = vmatprep.subr.mxu0 0.0
        %3973 = vmatpush1.msra.mxu0 0.0
        %3974 = vmatprep.subr.mxu0 0.0
        %3975 = vmatpush1.msra.mxu0 0.0
        %3976 = vmatprep.subr.mxu0 0.0
        %3977 = vmatpush1.msra.mxu0 0.0
        %3978 = vmatprep.subr.mxu0 0.0
        %3979 = vmatpush1.msra.mxu0 0.0
        %3980 = vmatprep.subr.mxu0 0.0
        %3981 = vmatpush1.msra.mxu0 0.0
        %3982 = vmatprep.subr.mxu0 0.0
        %3983 = vmatpush1.msra.mxu0 0.0
        %3984 = vmatprep.subr.mxu0 0.0
        %3985 = vmatpush1.msra.mxu0 0.0
        %3986 = vmatprep.subr.mxu0 0.0
        %3987 = vmatpush1.msra.mxu0 0.0
        %3988 = vmatprep.subr.mxu0 0.0
        %3989 = vmatpush1.msra.mxu0 0.0
        %3990 = vmatprep.subr.mxu0 0.0
        %3991 = vmatpush1.msra.mxu0 0.0
        %3992 = vmatprep.subr.mxu0 0.0
        %3993 = vmatpush1.msra.mxu0 0.0
        %3994 = vmatprep.subr.mxu0 0.0
        %3995 = vmatpush1.msra.mxu0 0.0
        %3996 = vmatprep.subr.mxu0 0.0
        %3997 = vmatpush1.msra.mxu0 0.0
        %3998 = vmatprep.subr.mxu0 0.0
        %3999 = vmatpush1.msra.mxu0 0.0
        %4000 = vmatprep.subr.mxu0 0.0
        %4001 = vmatpush1.msra.mxu0 0.0
        %4002 = vmatprep.subr.mxu0 0.0
        %4003 = vmatpush1.msra.mxu0 0.0
        %4004 = vmatprep.subr.mxu0 0.0
        %4005 = vmatpush1.msra.mxu0 0.0
        %4006 = vmatprep.mubr.f32.mxu0 0.0
        %4007 = vmatmul.mubr.f32.gmra.mrb[0].mxu0 %v3940
        %v4008 = vpop.f32.mrb[0].mxu0
        %v4009 = vadd.f32 0.0, %v4008
        %v4010 = vpop.f32.mrb[0].mxu0
        %4011 = vdwg.mxu0
        %4012 = vrot.lane.b32.xlu0 %v400, 48
        %v4013 = vpop.permute.xlu0 %4012
        %v4016 = vsel %vm434, %v3779, 0
        %4018 = vmatprep.subr.mxu0 0.0
        %4019 = vmatpush1.msra.mxu0 %v4013
        %4020 = vmatprep.subr.mxu0 0.0
        %4021 = vmatpush1.msra.mxu0 0.0
        %4022 = vmatprep.subr.mxu0 0.0
        %4023 = vmatpush1.msra.mxu0 0.0
        %4024 = vmatprep.subr.mxu0 0.0
        %4025 = vmatpush1.msra.mxu0 0.0
        %4026 = vmatprep.subr.mxu0 0.0
        %4027 = vmatpush1.msra.mxu0 0.0
        %4028 = vmatprep.subr.mxu0 0.0
        %4029 = vmatpush1.msra.mxu0 0.0
        %4030 = vmatprep.subr.mxu0 0.0
        %4031 = vmatpush1.msra.mxu0 0.0
        %4032 = vmatprep.subr.mxu0 0.0
        %4033 = vmatpush1.msra.mxu0 0.0
        %4034 = vmatprep.subr.mxu0 0.0
        %4035 = vmatpush1.msra.mxu0 0.0
        %4036 = vmatprep.subr.mxu0 0.0
        %4037 = vmatpush1.msra.mxu0 0.0
        %4038 = vmatprep.subr.mxu0 0.0
        %4039 = vmatpush1.msra.mxu0 0.0
        %4040 = vmatprep.subr.mxu0 0.0
        %4041 = vmatpush1.msra.mxu0 0.0
        %4042 = vmatprep.subr.mxu0 0.0
        %4043 = vmatpush1.msra.mxu0 0.0
        %4044 = vmatprep.subr.mxu0 0.0
        %4045 = vmatpush1.msra.mxu0 0.0
        %4046 = vmatprep.subr.mxu0 0.0
        %4047 = vmatpush1.msra.mxu0 0.0
        %4048 = vmatprep.subr.mxu0 0.0
        %4049 = vmatpush1.msra.mxu0 0.0
        %4050 = vmatprep.subr.mxu0 0.0
        %4051 = vmatpush1.msra.mxu0 0.0
        %4052 = vmatprep.subr.mxu0 0.0
        %4053 = vmatpush1.msra.mxu0 0.0
        %4054 = vmatprep.subr.mxu0 0.0
        %4055 = vmatpush1.msra.mxu0 0.0
        %4056 = vmatprep.subr.mxu0 0.0
        %4057 = vmatpush1.msra.mxu0 0.0
        %4058 = vmatprep.subr.mxu0 0.0
        %4059 = vmatpush1.msra.mxu0 0.0
        %4060 = vmatprep.subr.mxu0 0.0
        %4061 = vmatpush1.msra.mxu0 0.0
        %4062 = vmatprep.subr.mxu0 0.0
        %4063 = vmatpush1.msra.mxu0 0.0
        %4064 = vmatprep.subr.mxu0 0.0
        %4065 = vmatpush1.msra.mxu0 0.0
        %4066 = vmatprep.subr.mxu0 0.0
        %4067 = vmatpush1.msra.mxu0 0.0
        %4068 = vmatprep.subr.mxu0 0.0
        %4069 = vmatpush1.msra.mxu0 0.0
        %4070 = vmatprep.subr.mxu0 0.0
        %4071 = vmatpush1.msra.mxu0 0.0
        %4072 = vmatprep.subr.mxu0 0.0
        %4073 = vmatpush1.msra.mxu0 0.0
        %4074 = vmatprep.subr.mxu0 0.0
        %4075 = vmatpush1.msra.mxu0 0.0
        %4076 = vmatprep.subr.mxu0 0.0
        %4077 = vmatpush1.msra.mxu0 0.0
        %4078 = vmatprep.subr.mxu0 0.0
        %4079 = vmatpush1.msra.mxu0 0.0
        %4080 = vmatprep.subr.mxu0 0.0
        %4081 = vmatpush1.msra.mxu0 0.0
        %4082 = vmatprep.mubr.f32.mxu0 0.0
        %4083 = vmatmul.mubr.f32.gmra.mrb[0].mxu0 %v4016
        %v4084 = vpop.f32.mrb[0].mxu0
        %v4085 = vadd.f32 0.0, %v4084
        %v4086 = vpop.f32.mrb[0].mxu0
        %4087 = vdwg.mxu0
        %4088 = vrot.lane.b32.xlu0 %v405, 48
        %v4089 = vpop.permute.xlu0 %4088
        %v4092 = vsel %vm434, %v3780, 0
        %4094 = vmatprep.subr.mxu0 0.0
        %4095 = vmatpush1.msra.mxu0 %v4089
        %4096 = vmatprep.subr.mxu0 0.0
        %4097 = vmatpush1.msra.mxu0 0.0
        %4098 = vmatprep.subr.mxu0 0.0
        %4099 = vmatpush1.msra.mxu0 0.0
        %4100 = vmatprep.subr.mxu0 0.0
        %4101 = vmatpush1.msra.mxu0 0.0
        %4102 = vmatprep.subr.mxu0 0.0
        %4103 = vmatpush1.msra.mxu0 0.0
        %4104 = vmatprep.subr.mxu0 0.0
        %4105 = vmatpush1.msra.mxu0 0.0
        %4106 = vmatprep.subr.mxu0 0.0
        %4107 = vmatpush1.msra.mxu0 0.0
        %4108 = vmatprep.subr.mxu0 0.0
        %4109 = vmatpush1.msra.mxu0 0.0
        %4110 = vmatprep.subr.mxu0 0.0
        %4111 = vmatpush1.msra.mxu0 0.0
        %4112 = vmatprep.subr.mxu0 0.0
        %4113 = vmatpush1.msra.mxu0 0.0
        %4114 = vmatprep.subr.mxu0 0.0
        %4115 = vmatpush1.msra.mxu0 0.0
        %4116 = vmatprep.subr.mxu0 0.0
        %4117 = vmatpush1.msra.mxu0 0.0
        %4118 = vmatprep.subr.mxu0 0.0
        %4119 = vmatpush1.msra.mxu0 0.0
        %4120 = vmatprep.subr.mxu0 0.0
        %4121 = vmatpush1.msra.mxu0 0.0
        %4122 = vmatprep.subr.mxu0 0.0
        %4123 = vmatpush1.msra.mxu0 0.0
        %4124 = vmatprep.subr.mxu0 0.0
        %4125 = vmatpush1.msra.mxu0 0.0
        %4126 = vmatprep.subr.mxu0 0.0
        %4127 = vmatpush1.msra.mxu0 0.0
        %4128 = vmatprep.subr.mxu0 0.0
        %4129 = vmatpush1.msra.mxu0 0.0
        %4130 = vmatprep.subr.mxu0 0.0
        %4131 = vmatpush1.msra.mxu0 0.0
        %4132 = vmatprep.subr.mxu0 0.0
        %4133 = vmatpush1.msra.mxu0 0.0
        %4134 = vmatprep.subr.mxu0 0.0
        %4135 = vmatpush1.msra.mxu0 0.0
        %4136 = vmatprep.subr.mxu0 0.0
        %4137 = vmatpush1.msra.mxu0 0.0
        %4138 = vmatprep.subr.mxu0 0.0
        %4139 = vmatpush1.msra.mxu0 0.0
        %4140 = vmatprep.subr.mxu0 0.0
        %4141 = vmatpush1.msra.mxu0 0.0
        %4142 = vmatprep.subr.mxu0 0.0
        %4143 = vmatpush1.msra.mxu0 0.0
        %4144 = vmatprep.subr.mxu0 0.0
        %4145 = vmatpush1.msra.mxu0 0.0
        %4146 = vmatprep.subr.mxu0 0.0
        %4147 = vmatpush1.msra.mxu0 0.0
        %4148 = vmatprep.subr.mxu0 0.0
        %4149 = vmatpush1.msra.mxu0 0.0
        %4150 = vmatprep.subr.mxu0 0.0
        %4151 = vmatpush1.msra.mxu0 0.0
        %4152 = vmatprep.subr.mxu0 0.0
        %4153 = vmatpush1.msra.mxu0 0.0
        %4154 = vmatprep.subr.mxu0 0.0
        %4155 = vmatpush1.msra.mxu0 0.0
        %4156 = vmatprep.subr.mxu0 0.0
        %4157 = vmatpush1.msra.mxu0 0.0
        %4158 = vmatprep.mubr.f32.mxu0 0.0
        %4159 = vmatmul.mubr.f32.gmra.mrb[0].mxu0 %v4092
        %v4160 = vpop.f32.mrb[0].mxu0
        %v4161 = vadd.f32 0.0, %v4160
        %v4162 = vpop.f32.mrb[0].mxu0
        %4163 = vdwg.mxu0
        %4164 = vrot.lane.b32.xlu0 %v410, 48
        %v4165 = vpop.permute.xlu0 %4164
        %v4168 = vsel %vm434, %v3781, 0
        %4170 = vmatprep.subr.mxu0 0.0
        %4171 = vmatpush1.msra.mxu0 %v4165
        %4172 = vmatprep.subr.mxu0 0.0
        %4173 = vmatpush1.msra.mxu0 0.0
        %4174 = vmatprep.subr.mxu0 0.0
        %4175 = vmatpush1.msra.mxu0 0.0
        %4176 = vmatprep.subr.mxu0 0.0
        %4177 = vmatpush1.msra.mxu0 0.0
        %4178 = vmatprep.subr.mxu0 0.0
        %4179 = vmatpush1.msra.mxu0 0.0
        %4180 = vmatprep.subr.mxu0 0.0
        %4181 = vmatpush1.msra.mxu0 0.0
        %4182 = vmatprep.subr.mxu0 0.0
        %4183 = vmatpush1.msra.mxu0 0.0
        %4184 = vmatprep.subr.mxu0 0.0
        %4185 = vmatpush1.msra.mxu0 0.0
        %4186 = vmatprep.subr.mxu0 0.0
        %4187 = vmatpush1.msra.mxu0 0.0
        %4188 = vmatprep.subr.mxu0 0.0
        %4189 = vmatpush1.msra.mxu0 0.0
        %4190 = vmatprep.subr.mxu0 0.0
        %4191 = vmatpush1.msra.mxu0 0.0
        %4192 = vmatprep.subr.mxu0 0.0
        %4193 = vmatpush1.msra.mxu0 0.0
        %4194 = vmatprep.subr.mxu0 0.0
        %4195 = vmatpush1.msra.mxu0 0.0
        %4196 = vmatprep.subr.mxu0 0.0
        %4197 = vmatpush1.msra.mxu0 0.0
        %4198 = vmatprep.subr.mxu0 0.0
        %4199 = vmatpush1.msra.mxu0 0.0
        %4200 = vmatprep.subr.mxu0 0.0
        %4201 = vmatpush1.msra.mxu0 0.0
        %4202 = vmatprep.subr.mxu0 0.0
        %4203 = vmatpush1.msra.mxu0 0.0
        %4204 = vmatprep.subr.mxu0 0.0
        %4205 = vmatpush1.msra.mxu0 0.0
        %4206 = vmatprep.subr.mxu0 0.0
        %4207 = vmatpush1.msra.mxu0 0.0
        %4208 = vmatprep.subr.mxu0 0.0
        %4209 = vmatpush1.msra.mxu0 0.0
        %4210 = vmatprep.subr.mxu0 0.0
        %4211 = vmatpush1.msra.mxu0 0.0
        %4212 = vmatprep.subr.mxu0 0.0
        %4213 = vmatpush1.msra.mxu0 0.0
        %4214 = vmatprep.subr.mxu0 0.0
        %4215 = vmatpush1.msra.mxu0 0.0
        %4216 = vmatprep.subr.mxu0 0.0
        %4217 = vmatpush1.msra.mxu0 0.0
        %4218 = vmatprep.subr.mxu0 0.0
        %4219 = vmatpush1.msra.mxu0 0.0
        %4220 = vmatprep.subr.mxu0 0.0
        %4221 = vmatpush1.msra.mxu0 0.0
        %4222 = vmatprep.subr.mxu0 0.0
        %4223 = vmatpush1.msra.mxu0 0.0
        %4224 = vmatprep.subr.mxu0 0.0
        %4225 = vmatpush1.msra.mxu0 0.0
        %4226 = vmatprep.subr.mxu0 0.0
        %4227 = vmatpush1.msra.mxu0 0.0
        %4228 = vmatprep.subr.mxu0 0.0
        %4229 = vmatpush1.msra.mxu0 0.0
        %4230 = vmatprep.subr.mxu0 0.0
        %4231 = vmatpush1.msra.mxu0 0.0
        %4232 = vmatprep.subr.mxu0 0.0
        %4233 = vmatpush1.msra.mxu0 0.0
        %4234 = vmatprep.mubr.f32.mxu0 0.0
        %4235 = vmatmul.mubr.f32.gmra.mrb[0].mxu0 %v4168
        %v4236 = vpop.f32.mrb[0].mxu0
        %v4237 = vadd.f32 0.0, %v4236
        %v4238 = vpop.f32.mrb[0].mxu0
        %4239 = vdwg.mxu0
        %4240 = vrot.lane.b32.xlu0 %v415, 48
        %v4241 = vpop.permute.xlu0 %4240
        %v4244 = vsel %vm434, %v3782, 0
        %4246 = vmatprep.subr.mxu0 0.0
        %4247 = vmatpush1.msra.mxu0 %v4241
        %4248 = vmatprep.subr.mxu0 0.0
        %4249 = vmatpush1.msra.mxu0 0.0
        %4250 = vmatprep.subr.mxu0 0.0
        %4251 = vmatpush1.msra.mxu0 0.0
        %4252 = vmatprep.subr.mxu0 0.0
        %4253 = vmatpush1.msra.mxu0 0.0
        %4254 = vmatprep.subr.mxu0 0.0
        %4255 = vmatpush1.msra.mxu0 0.0
        %4256 = vmatprep.subr.mxu0 0.0
        %4257 = vmatpush1.msra.mxu0 0.0
        %4258 = vmatprep.subr.mxu0 0.0
        %4259 = vmatpush1.msra.mxu0 0.0
        %4260 = vmatprep.subr.mxu0 0.0
        %4261 = vmatpush1.msra.mxu0 0.0
        %4262 = vmatprep.subr.mxu0 0.0
        %4263 = vmatpush1.msra.mxu0 0.0
        %4264 = vmatprep.subr.mxu0 0.0
        %4265 = vmatpush1.msra.mxu0 0.0
        %4266 = vmatprep.subr.mxu0 0.0
        %4267 = vmatpush1.msra.mxu0 0.0
        %4268 = vmatprep.subr.mxu0 0.0
        %4269 = vmatpush1.msra.mxu0 0.0
        %4270 = vmatprep.subr.mxu0 0.0
        %4271 = vmatpush1.msra.mxu0 0.0
        %4272 = vmatprep.subr.mxu0 0.0
        %4273 = vmatpush1.msra.mxu0 0.0
        %4274 = vmatprep.subr.mxu0 0.0
        %4275 = vmatpush1.msra.mxu0 0.0
        %4276 = vmatprep.subr.mxu0 0.0
        %4277 = vmatpush1.msra.mxu0 0.0
        %4278 = vmatprep.subr.mxu0 0.0
        %4279 = vmatpush1.msra.mxu0 0.0
        %4280 = vmatprep.subr.mxu0 0.0
        %4281 = vmatpush1.msra.mxu0 0.0
        %4282 = vmatprep.subr.mxu0 0.0
        %4283 = vmatpush1.msra.mxu0 0.0
        %4284 = vmatprep.subr.mxu0 0.0
        %4285 = vmatpush1.msra.mxu0 0.0
        %4286 = vmatprep.subr.mxu0 0.0
        %4287 = vmatpush1.msra.mxu0 0.0
        %4288 = vmatprep.subr.mxu0 0.0
        %4289 = vmatpush1.msra.mxu0 0.0
        %4290 = vmatprep.subr.mxu0 0.0
        %4291 = vmatpush1.msra.mxu0 0.0
        %4292 = vmatprep.subr.mxu0 0.0
        %4293 = vmatpush1.msra.mxu0 0.0
        %4294 = vmatprep.subr.mxu0 0.0
        %4295 = vmatpush1.msra.mxu0 0.0
        %4296 = vmatprep.subr.mxu0 0.0
        %4297 = vmatpush1.msra.mxu0 0.0
        %4298 = vmatprep.subr.mxu0 0.0
        %4299 = vmatpush1.msra.mxu0 0.0
        %4300 = vmatprep.subr.mxu0 0.0
        %4301 = vmatpush1.msra.mxu0 0.0
        %4302 = vmatprep.subr.mxu0 0.0
        %4303 = vmatpush1.msra.mxu0 0.0
        %4304 = vmatprep.subr.mxu0 0.0
        %4305 = vmatpush1.msra.mxu0 0.0
        %4306 = vmatprep.subr.mxu0 0.0
        %4307 = vmatpush1.msra.mxu0 0.0
        %4308 = vmatprep.subr.mxu0 0.0
        %4309 = vmatpush1.msra.mxu0 0.0
        %4310 = vmatprep.mubr.f32.mxu0 0.0
        %4311 = vmatmul.mubr.f32.gmra.mrb[0].mxu0 %v4244
        %v4312 = vpop.f32.mrb[0].mxu0
        %v4313 = vadd.f32 0.0, %v4312
        %v4314 = vpop.f32.mrb[0].mxu0
        %4315 = vdwg.mxu0
        %4316 = vrot.lane.b32.xlu0 %v420, 48
        %v4317 = vpop.permute.xlu0 %4316
        %v4320 = vsel %vm434, %v3783, 0
        %4322 = vmatprep.subr.mxu0 0.0
        %4323 = vmatpush1.msra.mxu0 %v4317
        %4324 = vmatprep.subr.mxu0 0.0
        %4325 = vmatpush1.msra.mxu0 0.0
        %4326 = vmatprep.subr.mxu0 0.0
        %4327 = vmatpush1.msra.mxu0 0.0
        %4328 = vmatprep.subr.mxu0 0.0
        %4329 = vmatpush1.msra.mxu0 0.0
        %4330 = vmatprep.subr.mxu0 0.0
        %4331 = vmatpush1.msra.mxu0 0.0
        %4332 = vmatprep.subr.mxu0 0.0
        %4333 = vmatpush1.msra.mxu0 0.0
        %4334 = vmatprep.subr.mxu0 0.0
        %4335 = vmatpush1.msra.mxu0 0.0
        %4336 = vmatprep.subr.mxu0 0.0
        %4337 = vmatpush1.msra.mxu0 0.0
        %4338 = vmatprep.subr.mxu0 0.0
        %4339 = vmatpush1.msra.mxu0 0.0
        %4340 = vmatprep.subr.mxu0 0.0
        %4341 = vmatpush1.msra.mxu0 0.0
        %4342 = vmatprep.subr.mxu0 0.0
        %4343 = vmatpush1.msra.mxu0 0.0
        %4344 = vmatprep.subr.mxu0 0.0
        %4345 = vmatpush1.msra.mxu0 0.0
        %4346 = vmatprep.subr.mxu0 0.0
        %4347 = vmatpush1.msra.mxu0 0.0
        %4348 = vmatprep.subr.mxu0 0.0
        %4349 = vmatpush1.msra.mxu0 0.0
        %4350 = vmatprep.subr.mxu0 0.0
        %4351 = vmatpush1.msra.mxu0 0.0
        %4352 = vmatprep.subr.mxu0 0.0
        %4353 = vmatpush1.msra.mxu0 0.0
        %4354 = vmatprep.subr.mxu0 0.0
        %4355 = vmatpush1.msra.mxu0 0.0
        %4356 = vmatprep.subr.mxu0 0.0
        %4357 = vmatpush1.msra.mxu0 0.0
        %4358 = vmatprep.subr.mxu0 0.0
        %4359 = vmatpush1.msra.mxu0 0.0
        %4360 = vmatprep.subr.mxu0 0.0
        %4361 = vmatpush1.msra.mxu0 0.0
        %4362 = vmatprep.subr.mxu0 0.0
        %4363 = vmatpush1.msra.mxu0 0.0
        %4364 = vmatprep.subr.mxu0 0.0
        %4365 = vmatpush1.msra.mxu0 0.0
        %4366 = vmatprep.subr.mxu0 0.0
        %4367 = vmatpush1.msra.mxu0 0.0
        %4368 = vmatprep.subr.mxu0 0.0
        %4369 = vmatpush1.msra.mxu0 0.0
        %4370 = vmatprep.subr.mxu0 0.0
        %4371 = vmatpush1.msra.mxu0 0.0
        %4372 = vmatprep.subr.mxu0 0.0
        %4373 = vmatpush1.msra.mxu0 0.0
        %4374 = vmatprep.subr.mxu0 0.0
        %4375 = vmatpush1.msra.mxu0 0.0
        %4376 = vmatprep.subr.mxu0 0.0
        %4377 = vmatpush1.msra.mxu0 0.0
        %4378 = vmatprep.subr.mxu0 0.0
        %4379 = vmatpush1.msra.mxu0 0.0
        %4380 = vmatprep.subr.mxu0 0.0
        %4381 = vmatpush1.msra.mxu0 0.0
        %4382 = vmatprep.subr.mxu0 0.0
        %4383 = vmatpush1.msra.mxu0 0.0
        %4384 = vmatprep.subr.mxu0 0.0
        %4385 = vmatpush1.msra.mxu0 0.0
        %4386 = vmatprep.mubr.f32.mxu0 0.0
        %4387 = vmatmul.mubr.f32.gmra.mrb[0].mxu0 %v4320
        %v4388 = vpop.f32.mrb[0].mxu0
        %v4389 = vadd.f32 0.0, %v4388
        %v4390 = vpop.f32.mrb[0].mxu0
        %4391 = vdwg.mxu0
        %4392 = vrot.lane.b32.xlu0 %v423, 104
        %v4393 = vpop.permute.xlu0 %4392
        %4394 = vrot.lane.b32.xlu0 %v385, 72
        %v4395 = vpop.permute.xlu0 %4394
        %v4396 = vsel %vm434, %v4393, 0
        %v4398 = vsel %vm434, %v4395, 0
        %4400 = vmatprep.subr.mxu0 0.0
        %4401 = vmatpush1.xpose.msra.mxu0 %v4398
        %4402 = vmatprep.subr.mxu0 0.0
        %4403 = vmatpush1.xpose.msra.mxu0 0.0
        %4404 = vmatprep.subr.mxu0 0.0
        %4405 = vmatpush1.xpose.msra.mxu0 0.0
        %4406 = vmatprep.subr.mxu0 0.0
        %4407 = vmatpush1.xpose.msra.mxu0 0.0
        %4408 = vmatprep.subr.mxu0 0.0
        %4409 = vmatpush1.xpose.msra.mxu0 0.0
        %4410 = vmatprep.subr.mxu0 0.0
        %4411 = vmatpush1.xpose.msra.mxu0 0.0
        %4412 = vmatprep.subr.mxu0 0.0
        %4413 = vmatpush1.xpose.msra.mxu0 0.0
        %4414 = vmatprep.subr.mxu0 0.0
        %4415 = vmatpush1.xpose.msra.mxu0 0.0
        %4416 = vmatprep.subr.mxu0 0.0
        %4417 = vmatpush1.xpose.msra.mxu0 0.0
        %4418 = vmatprep.subr.mxu0 0.0
        %4419 = vmatpush1.xpose.msra.mxu0 0.0
        %4420 = vmatprep.subr.mxu0 0.0
        %4421 = vmatpush1.xpose.msra.mxu0 0.0
        %4422 = vmatprep.subr.mxu0 0.0
        %4423 = vmatpush1.xpose.msra.mxu0 0.0
        %4424 = vmatprep.subr.mxu0 0.0
        %4425 = vmatpush1.xpose.msra.mxu0 0.0
        %4426 = vmatprep.subr.mxu0 0.0
        %4427 = vmatpush1.xpose.msra.mxu0 0.0
        %4428 = vmatprep.subr.mxu0 0.0
        %4429 = vmatpush1.xpose.msra.mxu0 0.0
        %4430 = vmatprep.subr.mxu0 0.0
        %4431 = vmatpush1.xpose.msra.mxu0 0.0
        %4432 = vmatprep.subr.mxu0 0.0
        %4433 = vmatpush1.xpose.msra.mxu0 0.0
        %4434 = vmatprep.subr.mxu0 0.0
        %4435 = vmatpush1.xpose.msra.mxu0 0.0
        %4436 = vmatprep.subr.mxu0 0.0
        %4437 = vmatpush1.xpose.msra.mxu0 0.0
        %4438 = vmatprep.subr.mxu0 0.0
        %4439 = vmatpush1.xpose.msra.mxu0 0.0
        %4440 = vmatprep.subr.mxu0 0.0
        %4441 = vmatpush1.xpose.msra.mxu0 0.0
        %4442 = vmatprep.subr.mxu0 0.0
        %4443 = vmatpush1.xpose.msra.mxu0 0.0
        %4444 = vmatprep.subr.mxu0 0.0
        %4445 = vmatpush1.xpose.msra.mxu0 0.0
        %4446 = vmatprep.subr.mxu0 0.0
        %4447 = vmatpush1.xpose.msra.mxu0 0.0
        %4448 = vmatprep.subr.mxu0 0.0
        %4449 = vmatpush1.xpose.msra.mxu0 0.0
        %4450 = vmatprep.subr.mxu0 0.0
        %4451 = vmatpush1.xpose.msra.mxu0 0.0
        %4452 = vmatprep.subr.mxu0 0.0
        %4453 = vmatpush1.xpose.msra.mxu0 0.0
        %4454 = vmatprep.subr.mxu0 0.0
        %4455 = vmatpush1.xpose.msra.mxu0 0.0
        %4456 = vmatprep.subr.mxu0 0.0
        %4457 = vmatpush1.xpose.msra.mxu0 0.0
        %4458 = vmatprep.subr.mxu0 0.0
        %4459 = vmatpush1.xpose.msra.mxu0 0.0
        %4460 = vmatprep.subr.mxu0 0.0
        %4461 = vmatpush1.xpose.msra.mxu0 0.0
        %4462 = vmatprep.subr.mxu0 0.0
        %4463 = vmatpush1.xpose.msra.mxu0 0.0
        %4464 = vmatprep.mubr.f32.mxu0 0.0
        %4465 = vmatmul.mubr.f32.gmra.mrb[0].mxu0 %v4396
        %v4466 = vpop.f32.mrb[0].mxu0
        %v4467 = vadd.f32 0.0, %v4466
        %v4468 = vpop.f32.mrb[0].mxu0
        %4469 = vdwg.mxu0
        %4470 = vrot.lane.b32.xlu0 %v424, 104
        %v4471 = vpop.permute.xlu0 %4470
        %4472 = vrot.lane.b32.xlu0 %v390, 72
        %v4473 = vpop.permute.xlu0 %4472
        %v4474 = vsel %vm434, %v4471, 0
        %v4476 = vsel %vm434, %v4473, 0
        %4478 = vmatprep.subr.mxu0 0.0
        %4479 = vmatpush1.xpose.msra.mxu0 %v4476
        %4480 = vmatprep.subr.mxu0 0.0
        %4481 = vmatpush1.xpose.msra.mxu0 0.0
        %4482 = vmatprep.subr.mxu0 0.0
        %4483 = vmatpush1.xpose.msra.mxu0 0.0
        %4484 = vmatprep.subr.mxu0 0.0
        %4485 = vmatpush1.xpose.msra.mxu0 0.0
        %4486 = vmatprep.subr.mxu0 0.0
        %4487 = vmatpush1.xpose.msra.mxu0 0.0
        %4488 = vmatprep.subr.mxu0 0.0
        %4489 = vmatpush1.xpose.msra.mxu0 0.0
        %4490 = vmatprep.subr.mxu0 0.0
        %4491 = vmatpush1.xpose.msra.mxu0 0.0
        %4492 = vmatprep.subr.mxu0 0.0
        %4493 = vmatpush1.xpose.msra.mxu0 0.0
        %4494 = vmatprep.subr.mxu0 0.0
        %4495 = vmatpush1.xpose.msra.mxu0 0.0
        %4496 = vmatprep.subr.mxu0 0.0
        %4497 = vmatpush1.xpose.msra.mxu0 0.0
        %4498 = vmatprep.subr.mxu0 0.0
        %4499 = vmatpush1.xpose.msra.mxu0 0.0
        %4500 = vmatprep.subr.mxu0 0.0
        %4501 = vmatpush1.xpose.msra.mxu0 0.0
        %4502 = vmatprep.subr.mxu0 0.0
        %4503 = vmatpush1.xpose.msra.mxu0 0.0
        %4504 = vmatprep.subr.mxu0 0.0
        %4505 = vmatpush1.xpose.msra.mxu0 0.0
        %4506 = vmatprep.subr.mxu0 0.0
        %4507 = vmatpush1.xpose.msra.mxu0 0.0
        %4508 = vmatprep.subr.mxu0 0.0
        %4509 = vmatpush1.xpose.msra.mxu0 0.0
        %4510 = vmatprep.subr.mxu0 0.0
        %4511 = vmatpush1.xpose.msra.mxu0 0.0
        %4512 = vmatprep.subr.mxu0 0.0
        %4513 = vmatpush1.xpose.msra.mxu0 0.0
        %4514 = vmatprep.subr.mxu0 0.0
        %4515 = vmatpush1.xpose.msra.mxu0 0.0
        %4516 = vmatprep.subr.mxu0 0.0
        %4517 = vmatpush1.xpose.msra.mxu0 0.0
        %4518 = vmatprep.subr.mxu0 0.0
        %4519 = vmatpush1.xpose.msra.mxu0 0.0
        %4520 = vmatprep.subr.mxu0 0.0
        %4521 = vmatpush1.xpose.msra.mxu0 0.0
        %4522 = vmatprep.subr.mxu0 0.0
        %4523 = vmatpush1.xpose.msra.mxu0 0.0
        %4524 = vmatprep.subr.mxu0 0.0
        %4525 = vmatpush1.xpose.msra.mxu0 0.0
        %4526 = vmatprep.subr.mxu0 0.0
        %4527 = vmatpush1.xpose.msra.mxu0 0.0
        %4528 = vmatprep.subr.mxu0 0.0
        %4529 = vmatpush1.xpose.msra.mxu0 0.0
        %4530 = vmatprep.subr.mxu0 0.0
        %4531 = vmatpush1.xpose.msra.mxu0 0.0
        %4532 = vmatprep.subr.mxu0 0.0
        %4533 = vmatpush1.xpose.msra.mxu0 0.0
        %4534 = vmatprep.subr.mxu0 0.0
        %4535 = vmatpush1.xpose.msra.mxu0 0.0
        %4536 = vmatprep.subr.mxu0 0.0
        %4537 = vmatpush1.xpose.msra.mxu0 0.0
        %4538 = vmatprep.subr.mxu0 0.0
        %4539 = vmatpush1.xpose.msra.mxu0 0.0
        %4540 = vmatprep.subr.mxu0 0.0
        %4541 = vmatpush1.xpose.msra.mxu0 0.0
        %4542 = vmatprep.mubr.f32.mxu0 0.0
        %4543 = vmatmul.mubr.f32.gmra.mrb[0].mxu0 %v4474
        %v4544 = vpop.f32.mrb[0].mxu0
        %v4545 = vadd.f32 0.0, %v4544
        %v4546 = vpop.f32.mrb[0].mxu0
        %4547 = vdwg.mxu0
        %4548 = vrot.lane.b32.xlu0 %v425, 104
        %v4549 = vpop.permute.xlu0 %4548
        %4550 = vrot.lane.b32.xlu0 %v395, 72
        %v4551 = vpop.permute.xlu0 %4550
        %v4552 = vsel %vm434, %v4549, 0
        %v4554 = vsel %vm434, %v4551, 0
        %4556 = vmatprep.subr.mxu0 0.0
        %4557 = vmatpush1.xpose.msra.mxu0 %v4554
        %4558 = vmatprep.subr.mxu0 0.0
        %4559 = vmatpush1.xpose.msra.mxu0 0.0
        %4560 = vmatprep.subr.mxu0 0.0
        %4561 = vmatpush1.xpose.msra.mxu0 0.0
        %4562 = vmatprep.subr.mxu0 0.0
        %4563 = vmatpush1.xpose.msra.mxu0 0.0
        %4564 = vmatprep.subr.mxu0 0.0
        %4565 = vmatpush1.xpose.msra.mxu0 0.0
        %4566 = vmatprep.subr.mxu0 0.0
        %4567 = vmatpush1.xpose.msra.mxu0 0.0
        %4568 = vmatprep.subr.mxu0 0.0
        %4569 = vmatpush1.xpose.msra.mxu0 0.0
        %4570 = vmatprep.subr.mxu0 0.0
        %4571 = vmatpush1.xpose.msra.mxu0 0.0
        %4572 = vmatprep.subr.mxu0 0.0
        %4573 = vmatpush1.xpose.msra.mxu0 0.0
        %4574 = vmatprep.subr.mxu0 0.0
        %4575 = vmatpush1.xpose.msra.mxu0 0.0
        %4576 = vmatprep.subr.mxu0 0.0
        %4577 = vmatpush1.xpose.msra.mxu0 0.0
        %4578 = vmatprep.subr.mxu0 0.0
        %4579 = vmatpush1.xpose.msra.mxu0 0.0
        %4580 = vmatprep.subr.mxu0 0.0
        %4581 = vmatpush1.xpose.msra.mxu0 0.0
        %4582 = vmatprep.subr.mxu0 0.0
        %4583 = vmatpush1.xpose.msra.mxu0 0.0
        %4584 = vmatprep.subr.mxu0 0.0
        %4585 = vmatpush1.xpose.msra.mxu0 0.0
        %4586 = vmatprep.subr.mxu0 0.0
        %4587 = vmatpush1.xpose.msra.mxu0 0.0
        %4588 = vmatprep.subr.mxu0 0.0
        %4589 = vmatpush1.xpose.msra.mxu0 0.0
        %4590 = vmatprep.subr.mxu0 0.0
        %4591 = vmatpush1.xpose.msra.mxu0 0.0
        %4592 = vmatprep.subr.mxu0 0.0
        %4593 = vmatpush1.xpose.msra.mxu0 0.0
        %4594 = vmatprep.subr.mxu0 0.0
        %4595 = vmatpush1.xpose.msra.mxu0 0.0
        %4596 = vmatprep.subr.mxu0 0.0
        %4597 = vmatpush1.xpose.msra.mxu0 0.0
        %4598 = vmatprep.subr.mxu0 0.0
        %4599 = vmatpush1.xpose.msra.mxu0 0.0
        %4600 = vmatprep.subr.mxu0 0.0
        %4601 = vmatpush1.xpose.msra.mxu0 0.0
        %4602 = vmatprep.subr.mxu0 0.0
        %4603 = vmatpush1.xpose.msra.mxu0 0.0
        %4604 = vmatprep.subr.mxu0 0.0
        %4605 = vmatpush1.xpose.msra.mxu0 0.0
        %4606 = vmatprep.subr.mxu0 0.0
        %4607 = vmatpush1.xpose.msra.mxu0 0.0
        %4608 = vmatprep.subr.mxu0 0.0
        %4609 = vmatpush1.xpose.msra.mxu0 0.0
        %4610 = vmatprep.subr.mxu0 0.0
        %4611 = vmatpush1.xpose.msra.mxu0 0.0
        %4612 = vmatprep.subr.mxu0 0.0
        %4613 = vmatpush1.xpose.msra.mxu0 0.0
        %4614 = vmatprep.subr.mxu0 0.0
        %4615 = vmatpush1.xpose.msra.mxu0 0.0
        %4616 = vmatprep.subr.mxu0 0.0
        %4617 = vmatpush1.xpose.msra.mxu0 0.0
        %4618 = vmatprep.subr.mxu0 0.0
        %4619 = vmatpush1.xpose.msra.mxu0 0.0
        %4620 = vmatprep.mubr.f32.mxu0 0.0
        %4621 = vmatmul.mubr.f32.gmra.mrb[0].mxu0 %v4552
        %v4622 = vpop.f32.mrb[0].mxu0
        %v4623 = vadd.f32 0.0, %v4622
        %v4624 = vpop.f32.mrb[0].mxu0
        %4625 = vdwg.mxu0
        %4626 = vrot.lane.b32.xlu0 %v426, 104
        %v4627 = vpop.permute.xlu0 %4626
        %4628 = vrot.lane.b32.xlu0 %v400, 72
        %v4629 = vpop.permute.xlu0 %4628
        %v4630 = vsel %vm434, %v4627, 0
        %v4632 = vsel %vm434, %v4629, 0
        %4634 = vmatprep.subr.mxu0 0.0
        %4635 = vmatpush1.xpose.msra.mxu0 %v4632
        %4636 = vmatprep.subr.mxu0 0.0
        %4637 = vmatpush1.xpose.msra.mxu0 0.0
        %4638 = vmatprep.subr.mxu0 0.0
        %4639 = vmatpush1.xpose.msra.mxu0 0.0
        %4640 = vmatprep.subr.mxu0 0.0
        %4641 = vmatpush1.xpose.msra.mxu0 0.0
        %4642 = vmatprep.subr.mxu0 0.0
        %4643 = vmatpush1.xpose.msra.mxu0 0.0
        %4644 = vmatprep.subr.mxu0 0.0
        %4645 = vmatpush1.xpose.msra.mxu0 0.0
        %4646 = vmatprep.subr.mxu0 0.0
        %4647 = vmatpush1.xpose.msra.mxu0 0.0
        %4648 = vmatprep.subr.mxu0 0.0
        %4649 = vmatpush1.xpose.msra.mxu0 0.0
        %4650 = vmatprep.subr.mxu0 0.0
        %4651 = vmatpush1.xpose.msra.mxu0 0.0
        %4652 = vmatprep.subr.mxu0 0.0
        %4653 = vmatpush1.xpose.msra.mxu0 0.0
        %4654 = vmatprep.subr.mxu0 0.0
        %4655 = vmatpush1.xpose.msra.mxu0 0.0
        %4656 = vmatprep.subr.mxu0 0.0
        %4657 = vmatpush1.xpose.msra.mxu0 0.0
        %4658 = vmatprep.subr.mxu0 0.0
        %4659 = vmatpush1.xpose.msra.mxu0 0.0
        %4660 = vmatprep.subr.mxu0 0.0
        %4661 = vmatpush1.xpose.msra.mxu0 0.0
        %4662 = vmatprep.subr.mxu0 0.0
        %4663 = vmatpush1.xpose.msra.mxu0 0.0
        %4664 = vmatprep.subr.mxu0 0.0
        %4665 = vmatpush1.xpose.msra.mxu0 0.0
        %4666 = vmatprep.subr.mxu0 0.0
        %4667 = vmatpush1.xpose.msra.mxu0 0.0
        %4668 = vmatprep.subr.mxu0 0.0
        %4669 = vmatpush1.xpose.msra.mxu0 0.0
        %4670 = vmatprep.subr.mxu0 0.0
        %4671 = vmatpush1.xpose.msra.mxu0 0.0
        %4672 = vmatprep.subr.mxu0 0.0
        %4673 = vmatpush1.xpose.msra.mxu0 0.0
        %4674 = vmatprep.subr.mxu0 0.0
        %4675 = vmatpush1.xpose.msra.mxu0 0.0
        %4676 = vmatprep.subr.mxu0 0.0
        %4677 = vmatpush1.xpose.msra.mxu0 0.0
        %4678 = vmatprep.subr.mxu0 0.0
        %4679 = vmatpush1.xpose.msra.mxu0 0.0
        %4680 = vmatprep.subr.mxu0 0.0
        %4681 = vmatpush1.xpose.msra.mxu0 0.0
        %4682 = vmatprep.subr.mxu0 0.0
        %4683 = vmatpush1.xpose.msra.mxu0 0.0
        %4684 = vmatprep.subr.mxu0 0.0
        %4685 = vmatpush1.xpose.msra.mxu0 0.0
        %4686 = vmatprep.subr.mxu0 0.0
        %4687 = vmatpush1.xpose.msra.mxu0 0.0
        %4688 = vmatprep.subr.mxu0 0.0
        %4689 = vmatpush1.xpose.msra.mxu0 0.0
        %4690 = vmatprep.subr.mxu0 0.0
        %4691 = vmatpush1.xpose.msra.mxu0 0.0
        %4692 = vmatprep.subr.mxu0 0.0
        %4693 = vmatpush1.xpose.msra.mxu0 0.0
        %4694 = vmatprep.subr.mxu0 0.0
        %4695 = vmatpush1.xpose.msra.mxu0 0.0
        %4696 = vmatprep.subr.mxu0 0.0
        %4697 = vmatpush1.xpose.msra.mxu0 0.0
        %4698 = vmatprep.mubr.f32.mxu0 0.0
        %4699 = vmatmul.mubr.f32.gmra.mrb[0].mxu0 %v4630
        %v4700 = vpop.f32.mrb[0].mxu0
        %v4701 = vadd.f32 0.0, %v4700
        %v4702 = vpop.f32.mrb[0].mxu0
        %4703 = vdwg.mxu0
        %4704 = vrot.lane.b32.xlu0 %v427, 104
        %v4705 = vpop.permute.xlu0 %4704
        %4706 = vrot.lane.b32.xlu0 %v405, 72
        %v4707 = vpop.permute.xlu0 %4706
        %v4708 = vsel %vm434, %v4705, 0
        %v4710 = vsel %vm434, %v4707, 0
        %4712 = vmatprep.subr.mxu0 0.0
        %4713 = vmatpush1.xpose.msra.mxu0 %v4710
        %4714 = vmatprep.subr.mxu0 0.0
        %4715 = vmatpush1.xpose.msra.mxu0 0.0
        %4716 = vmatprep.subr.mxu0 0.0
        %4717 = vmatpush1.xpose.msra.mxu0 0.0
        %4718 = vmatprep.subr.mxu0 0.0
        %4719 = vmatpush1.xpose.msra.mxu0 0.0
        %4720 = vmatprep.subr.mxu0 0.0
        %4721 = vmatpush1.xpose.msra.mxu0 0.0
        %4722 = vmatprep.subr.mxu0 0.0
        %4723 = vmatpush1.xpose.msra.mxu0 0.0
        %4724 = vmatprep.subr.mxu0 0.0
        %4725 = vmatpush1.xpose.msra.mxu0 0.0
        %4726 = vmatprep.subr.mxu0 0.0
        %4727 = vmatpush1.xpose.msra.mxu0 0.0
        %4728 = vmatprep.subr.mxu0 0.0
        %4729 = vmatpush1.xpose.msra.mxu0 0.0
        %4730 = vmatprep.subr.mxu0 0.0
        %4731 = vmatpush1.xpose.msra.mxu0 0.0
        %4732 = vmatprep.subr.mxu0 0.0
        %4733 = vmatpush1.xpose.msra.mxu0 0.0
        %4734 = vmatprep.subr.mxu0 0.0
        %4735 = vmatpush1.xpose.msra.mxu0 0.0
        %4736 = vmatprep.subr.mxu0 0.0
        %4737 = vmatpush1.xpose.msra.mxu0 0.0
        %4738 = vmatprep.subr.mxu0 0.0
        %4739 = vmatpush1.xpose.msra.mxu0 0.0
        %4740 = vmatprep.subr.mxu0 0.0
        %4741 = vmatpush1.xpose.msra.mxu0 0.0
        %4742 = vmatprep.subr.mxu0 0.0
        %4743 = vmatpush1.xpose.msra.mxu0 0.0
        %4744 = vmatprep.subr.mxu0 0.0
        %4745 = vmatpush1.xpose.msra.mxu0 0.0
        %4746 = vmatprep.subr.mxu0 0.0
        %4747 = vmatpush1.xpose.msra.mxu0 0.0
        %4748 = vmatprep.subr.mxu0 0.0
        %4749 = vmatpush1.xpose.msra.mxu0 0.0
        %4750 = vmatprep.subr.mxu0 0.0
        %4751 = vmatpush1.xpose.msra.mxu0 0.0
        %4752 = vmatprep.subr.mxu0 0.0
        %4753 = vmatpush1.xpose.msra.mxu0 0.0
        %4754 = vmatprep.subr.mxu0 0.0
        %4755 = vmatpush1.xpose.msra.mxu0 0.0
        %4756 = vmatprep.subr.mxu0 0.0
        %4757 = vmatpush1.xpose.msra.mxu0 0.0
        %4758 = vmatprep.subr.mxu0 0.0
        %4759 = vmatpush1.xpose.msra.mxu0 0.0
        %4760 = vmatprep.subr.mxu0 0.0
        %4761 = vmatpush1.xpose.msra.mxu0 0.0
        %4762 = vmatprep.subr.mxu0 0.0
        %4763 = vmatpush1.xpose.msra.mxu0 0.0
        %4764 = vmatprep.subr.mxu0 0.0
        %4765 = vmatpush1.xpose.msra.mxu0 0.0
        %4766 = vmatprep.subr.mxu0 0.0
        %4767 = vmatpush1.xpose.msra.mxu0 0.0
        %4768 = vmatprep.subr.mxu0 0.0
        %4769 = vmatpush1.xpose.msra.mxu0 0.0
        %4770 = vmatprep.subr.mxu0 0.0
        %4771 = vmatpush1.xpose.msra.mxu0 0.0
        %4772 = vmatprep.subr.mxu0 0.0
        %4773 = vmatpush1.xpose.msra.mxu0 0.0
        %4774 = vmatprep.subr.mxu0 0.0
        %4775 = vmatpush1.xpose.msra.mxu0 0.0
        %4776 = vmatprep.mubr.f32.mxu0 0.0
        %4777 = vmatmul.mubr.f32.gmra.mrb[0].mxu0 %v4708
        %v4778 = vpop.f32.mrb[0].mxu0
        %v4779 = vadd.f32 0.0, %v4778
        %v4780 = vpop.f32.mrb[0].mxu0
        %4781 = vdwg.mxu0
        %4782 = vrot.lane.b32.xlu0 %v428, 104
        %v4783 = vpop.permute.xlu0 %4782
        %4784 = vrot.lane.b32.xlu0 %v410, 72
        %v4785 = vpop.permute.xlu0 %4784
        %v4786 = vsel %vm434, %v4783, 0
        %v4788 = vsel %vm434, %v4785, 0
        %4790 = vmatprep.subr.mxu0 0.0
        %4791 = vmatpush1.xpose.msra.mxu0 %v4788
        %4792 = vmatprep.subr.mxu0 0.0
        %4793 = vmatpush1.xpose.msra.mxu0 0.0
        %4794 = vmatprep.subr.mxu0 0.0
        %4795 = vmatpush1.xpose.msra.mxu0 0.0
        %4796 = vmatprep.subr.mxu0 0.0
        %4797 = vmatpush1.xpose.msra.mxu0 0.0
        %4798 = vmatprep.subr.mxu0 0.0
        %4799 = vmatpush1.xpose.msra.mxu0 0.0
        %4800 = vmatprep.subr.mxu0 0.0
        %4801 = vmatpush1.xpose.msra.mxu0 0.0
        %4802 = vmatprep.subr.mxu0 0.0
        %4803 = vmatpush1.xpose.msra.mxu0 0.0
        %4804 = vmatprep.subr.mxu0 0.0
        %4805 = vmatpush1.xpose.msra.mxu0 0.0
        %4806 = vmatprep.subr.mxu0 0.0
        %4807 = vmatpush1.xpose.msra.mxu0 0.0
        %4808 = vmatprep.subr.mxu0 0.0
        %4809 = vmatpush1.xpose.msra.mxu0 0.0
        %4810 = vmatprep.subr.mxu0 0.0
        %4811 = vmatpush1.xpose.msra.mxu0 0.0
        %4812 = vmatprep.subr.mxu0 0.0
        %4813 = vmatpush1.xpose.msra.mxu0 0.0
        %4814 = vmatprep.subr.mxu0 0.0
        %4815 = vmatpush1.xpose.msra.mxu0 0.0
        %4816 = vmatprep.subr.mxu0 0.0
        %4817 = vmatpush1.xpose.msra.mxu0 0.0
        %4818 = vmatprep.subr.mxu0 0.0
        %4819 = vmatpush1.xpose.msra.mxu0 0.0
        %4820 = vmatprep.subr.mxu0 0.0
        %4821 = vmatpush1.xpose.msra.mxu0 0.0
        %4822 = vmatprep.subr.mxu0 0.0
        %4823 = vmatpush1.xpose.msra.mxu0 0.0
        %4824 = vmatprep.subr.mxu0 0.0
        %4825 = vmatpush1.xpose.msra.mxu0 0.0
        %4826 = vmatprep.subr.mxu0 0.0
        %4827 = vmatpush1.xpose.msra.mxu0 0.0
        %4828 = vmatprep.subr.mxu0 0.0
        %4829 = vmatpush1.xpose.msra.mxu0 0.0
        %4830 = vmatprep.subr.mxu0 0.0
        %4831 = vmatpush1.xpose.msra.mxu0 0.0
        %4832 = vmatprep.subr.mxu0 0.0
        %4833 = vmatpush1.xpose.msra.mxu0 0.0
        %4834 = vmatprep.subr.mxu0 0.0
        %4835 = vmatpush1.xpose.msra.mxu0 0.0
        %4836 = vmatprep.subr.mxu0 0.0
        %4837 = vmatpush1.xpose.msra.mxu0 0.0
        %4838 = vmatprep.subr.mxu0 0.0
        %4839 = vmatpush1.xpose.msra.mxu0 0.0
        %4840 = vmatprep.subr.mxu0 0.0
        %4841 = vmatpush1.xpose.msra.mxu0 0.0
        %4842 = vmatprep.subr.mxu0 0.0
        %4843 = vmatpush1.xpose.msra.mxu0 0.0
        %4844 = vmatprep.subr.mxu0 0.0
        %4845 = vmatpush1.xpose.msra.mxu0 0.0
        %4846 = vmatprep.subr.mxu0 0.0
        %4847 = vmatpush1.xpose.msra.mxu0 0.0
        %4848 = vmatprep.subr.mxu0 0.0
        %4849 = vmatpush1.xpose.msra.mxu0 0.0
        %4850 = vmatprep.subr.mxu0 0.0
        %4851 = vmatpush1.xpose.msra.mxu0 0.0
        %4852 = vmatprep.subr.mxu0 0.0
        %4853 = vmatpush1.xpose.msra.mxu0 0.0
        %4854 = vmatprep.mubr.f32.mxu0 0.0
        %4855 = vmatmul.mubr.f32.gmra.mrb[0].mxu0 %v4786
        %v4856 = vpop.f32.mrb[0].mxu0
        %v4857 = vadd.f32 0.0, %v4856
        %v4858 = vpop.f32.mrb[0].mxu0
        %4859 = vdwg.mxu0
        %4860 = vrot.lane.b32.xlu0 %v429, 104
        %v4861 = vpop.permute.xlu0 %4860
        %4862 = vrot.lane.b32.xlu0 %v415, 72
        %v4863 = vpop.permute.xlu0 %4862
        %v4864 = vsel %vm434, %v4861, 0
        %v4866 = vsel %vm434, %v4863, 0
        %4868 = vmatprep.subr.mxu0 0.0
        %4869 = vmatpush1.xpose.msra.mxu0 %v4866
        %4870 = vmatprep.subr.mxu0 0.0
        %4871 = vmatpush1.xpose.msra.mxu0 0.0
        %4872 = vmatprep.subr.mxu0 0.0
        %4873 = vmatpush1.xpose.msra.mxu0 0.0
        %4874 = vmatprep.subr.mxu0 0.0
        %4875 = vmatpush1.xpose.msra.mxu0 0.0
        %4876 = vmatprep.subr.mxu0 0.0
        %4877 = vmatpush1.xpose.msra.mxu0 0.0
        %4878 = vmatprep.subr.mxu0 0.0
        %4879 = vmatpush1.xpose.msra.mxu0 0.0
        %4880 = vmatprep.subr.mxu0 0.0
        %4881 = vmatpush1.xpose.msra.mxu0 0.0
        %4882 = vmatprep.subr.mxu0 0.0
        %4883 = vmatpush1.xpose.msra.mxu0 0.0
        %4884 = vmatprep.subr.mxu0 0.0
        %4885 = vmatpush1.xpose.msra.mxu0 0.0
        %4886 = vmatprep.subr.mxu0 0.0
        %4887 = vmatpush1.xpose.msra.mxu0 0.0
        %4888 = vmatprep.subr.mxu0 0.0
        %4889 = vmatpush1.xpose.msra.mxu0 0.0
        %4890 = vmatprep.subr.mxu0 0.0
        %4891 = vmatpush1.xpose.msra.mxu0 0.0
        %4892 = vmatprep.subr.mxu0 0.0
        %4893 = vmatpush1.xpose.msra.mxu0 0.0
        %4894 = vmatprep.subr.mxu0 0.0
        %4895 = vmatpush1.xpose.msra.mxu0 0.0
        %4896 = vmatprep.subr.mxu0 0.0
        %4897 = vmatpush1.xpose.msra.mxu0 0.0
        %4898 = vmatprep.subr.mxu0 0.0
        %4899 = vmatpush1.xpose.msra.mxu0 0.0
        %4900 = vmatprep.subr.mxu0 0.0
        %4901 = vmatpush1.xpose.msra.mxu0 0.0
        %4902 = vmatprep.subr.mxu0 0.0
        %4903 = vmatpush1.xpose.msra.mxu0 0.0
        %4904 = vmatprep.subr.mxu0 0.0
        %4905 = vmatpush1.xpose.msra.mxu0 0.0
        %4906 = vmatprep.subr.mxu0 0.0
        %4907 = vmatpush1.xpose.msra.mxu0 0.0
        %4908 = vmatprep.subr.mxu0 0.0
        %4909 = vmatpush1.xpose.msra.mxu0 0.0
        %4910 = vmatprep.subr.mxu0 0.0
        %4911 = vmatpush1.xpose.msra.mxu0 0.0
        %4912 = vmatprep.subr.mxu0 0.0
        %4913 = vmatpush1.xpose.msra.mxu0 0.0
        %4914 = vmatprep.subr.mxu0 0.0
        %4915 = vmatpush1.xpose.msra.mxu0 0.0
        %4916 = vmatprep.subr.mxu0 0.0
        %4917 = vmatpush1.xpose.msra.mxu0 0.0
        %4918 = vmatprep.subr.mxu0 0.0
        %4919 = vmatpush1.xpose.msra.mxu0 0.0
        %4920 = vmatprep.subr.mxu0 0.0
        %4921 = vmatpush1.xpose.msra.mxu0 0.0
        %4922 = vmatprep.subr.mxu0 0.0
        %4923 = vmatpush1.xpose.msra.mxu0 0.0
        %4924 = vmatprep.subr.mxu0 0.0
        %4925 = vmatpush1.xpose.msra.mxu0 0.0
        %4926 = vmatprep.subr.mxu0 0.0
        %4927 = vmatpush1.xpose.msra.mxu0 0.0
        %4928 = vmatprep.subr.mxu0 0.0
        %4929 = vmatpush1.xpose.msra.mxu0 0.0
        %4930 = vmatprep.subr.mxu0 0.0
        %4931 = vmatpush1.xpose.msra.mxu0 0.0
        %4932 = vmatprep.mubr.f32.mxu0 0.0
        %4933 = vmatmul.mubr.f32.gmra.mrb[0].mxu0 %v4864
        %v4934 = vpop.f32.mrb[0].mxu0
        %v4935 = vadd.f32 0.0, %v4934
        %v4936 = vpop.f32.mrb[0].mxu0
        %4937 = vdwg.mxu0
        %4938 = vrot.lane.b32.xlu0 %v430, 104
        %v4939 = vpop.permute.xlu0 %4938
        %4940 = vrot.lane.b32.xlu0 %v420, 72
        %v4941 = vpop.permute.xlu0 %4940
        %v4942 = vsel %vm434, %v4939, 0
        %v4944 = vsel %vm434, %v4941, 0
        %4946 = vmatprep.subr.mxu0 0.0
        %4947 = vmatpush1.xpose.msra.mxu0 %v4944
        %4948 = vmatprep.subr.mxu0 0.0
        %4949 = vmatpush1.xpose.msra.mxu0 0.0
        %4950 = vmatprep.subr.mxu0 0.0
        %4951 = vmatpush1.xpose.msra.mxu0 0.0
        %4952 = vmatprep.subr.mxu0 0.0
        %4953 = vmatpush1.xpose.msra.mxu0 0.0
        %4954 = vmatprep.subr.mxu0 0.0
        %4955 = vmatpush1.xpose.msra.mxu0 0.0
        %4956 = vmatprep.subr.mxu0 0.0
        %4957 = vmatpush1.xpose.msra.mxu0 0.0
        %4958 = vmatprep.subr.mxu0 0.0
        %4959 = vmatpush1.xpose.msra.mxu0 0.0
        %4960 = vmatprep.subr.mxu0 0.0
        %4961 = vmatpush1.xpose.msra.mxu0 0.0
        %4962 = vmatprep.subr.mxu0 0.0
        %4963 = vmatpush1.xpose.msra.mxu0 0.0
        %4964 = vmatprep.subr.mxu0 0.0
        %4965 = vmatpush1.xpose.msra.mxu0 0.0
        %4966 = vmatprep.subr.mxu0 0.0
        %4967 = vmatpush1.xpose.msra.mxu0 0.0
        %4968 = vmatprep.subr.mxu0 0.0
        %4969 = vmatpush1.xpose.msra.mxu0 0.0
        %4970 = vmatprep.subr.mxu0 0.0
        %4971 = vmatpush1.xpose.msra.mxu0 0.0
        %4972 = vmatprep.subr.mxu0 0.0
        %4973 = vmatpush1.xpose.msra.mxu0 0.0
        %4974 = vmatprep.subr.mxu0 0.0
        %4975 = vmatpush1.xpose.msra.mxu0 0.0
        %4976 = vmatprep.subr.mxu0 0.0
        %4977 = vmatpush1.xpose.msra.mxu0 0.0
        %4978 = vmatprep.subr.mxu0 0.0
        %4979 = vmatpush1.xpose.msra.mxu0 0.0
        %4980 = vmatprep.subr.mxu0 0.0
        %4981 = vmatpush1.xpose.msra.mxu0 0.0
        %4982 = vmatprep.subr.mxu0 0.0
        %4983 = vmatpush1.xpose.msra.mxu0 0.0
        %4984 = vmatprep.subr.mxu0 0.0
        %4985 = vmatpush1.xpose.msra.mxu0 0.0
        %4986 = vmatprep.subr.mxu0 0.0
        %4987 = vmatpush1.xpose.msra.mxu0 0.0
        %4988 = vmatprep.subr.mxu0 0.0
        %4989 = vmatpush1.xpose.msra.mxu0 0.0
        %4990 = vmatprep.subr.mxu0 0.0
        %4991 = vmatpush1.xpose.msra.mxu0 0.0
        %4992 = vmatprep.subr.mxu0 0.0
        %4993 = vmatpush1.xpose.msra.mxu0 0.0
        %4994 = vmatprep.subr.mxu0 0.0
        %4995 = vmatpush1.xpose.msra.mxu0 0.0
        %4996 = vmatprep.subr.mxu0 0.0
        %4997 = vmatpush1.xpose.msra.mxu0 0.0
        %4998 = vmatprep.subr.mxu0 0.0
        %4999 = vmatpush1.xpose.msra.mxu0 0.0
        %5000 = vmatprep.subr.mxu0 0.0
        %5001 = vmatpush1.xpose.msra.mxu0 0.0
        %5002 = vmatprep.subr.mxu0 0.0
        %5003 = vmatpush1.xpose.msra.mxu0 0.0
        %5004 = vmatprep.subr.mxu0 0.0
        %5005 = vmatpush1.xpose.msra.mxu0 0.0
        %5006 = vmatprep.subr.mxu0 0.0
        %5007 = vmatpush1.xpose.msra.mxu0 0.0
        %5008 = vmatprep.subr.mxu0 0.0
        %5009 = vmatpush1.xpose.msra.mxu0 0.0
        %5010 = vmatprep.mubr.f32.mxu0 0.0
        %5011 = vmatmul.mubr.f32.gmra.mrb[0].mxu0 %v4942
        %v5012 = vpop.f32.mrb[0].mxu0
        %v5013 = vadd.f32 0.0, %v5012
        %v5014 = vpop.f32.mrb[0].mxu0
        %5015 = vdwg.mxu0
        %v5016 = vsel %vm434, %v4467, -inf
        %5017 = vmax.xlane.f32.xlu0 %v5016
        %v5018 = vpop.xlane.xlu0 %5017
        %v5019 = vsel %vm434, %v4545, -inf
        %5020 = vmax.xlane.f32.xlu0 %v5019
        %v5021 = vpop.xlane.xlu0 %5020
        %v5022 = vsel %vm434, %v4623, -inf
        %5023 = vmax.xlane.f32.xlu0 %v5022
        %v5024 = vpop.xlane.xlu0 %5023
        %v5025 = vsel %vm434, %v4701, -inf
        %5026 = vmax.xlane.f32.xlu0 %v5025
        %v5027 = vpop.xlane.xlu0 %5026
        %v5028 = vsel %vm434, %v4779, -inf
        %5029 = vmax.xlane.f32.xlu0 %v5028
        %v5030 = vpop.xlane.xlu0 %5029
        %v5031 = vsel %vm434, %v4857, -inf
        %5032 = vmax.xlane.f32.xlu0 %v5031
        %v5033 = vpop.xlane.xlu0 %5032
        %v5034 = vsel %vm434, %v4935, -inf
        %5035 = vmax.xlane.f32.xlu0 %v5034
        %v5036 = vpop.xlane.xlu0 %5035
        %v5037 = vsel %vm434, %v5013, -inf
        %5038 = vmax.xlane.f32.xlu0 %v5037
        %v5039 = vpop.xlane.xlu0 %5038
        %v5040 = vsub.f32 %v4467, %v5018
        %v5041 = vsub.f32 %v4545, %v5021
        %v5042 = vsub.f32 %v4623, %v5024
        %v5043 = vsub.f32 %v4701, %v5027
        %v5044 = vsub.f32 %v4779, %v5030
        %v5045 = vsub.f32 %v4857, %v5033
        %v5046 = vsub.f32 %v4935, %v5036
        %v5047 = vsub.f32 %v5013, %v5039
        %v5048 = vmul.f32 %v5040, 1.442695
        %v5049 = vpow.pop %v5048
        %v5050 = vmul.f32 %v5041, 1.442695
        %v5051 = vpow.pop %v5050
        %v5052 = vmul.f32 %v5042, 1.442695
        %v5053 = vpow.pop %v5052
        %v5054 = vmul.f32 %v5043, 1.442695
        %v5055 = vpow.pop %v5054
        %v5056 = vmul.f32 %v5044, 1.442695
        %v5057 = vpow.pop %v5056
        %v5058 = vmul.f32 %v5045, 1.442695
        %v5059 = vpow.pop %v5058
        %v5060 = vmul.f32 %v5046, 1.442695
        %v5061 = vpow.pop %v5060
        %v5062 = vmul.f32 %v5047, 1.442695
        %v5063 = vpow.pop %v5062
        %v5064 = vsel %vm434, %v5049, 0.0
        %5065 = vadd.xlane.f32.xlu0 %v5064
        %v5066 = vpop.xlane.xlu0 %5065
        %v5067 = vsel %vm434, %v5051, 0.0
        %5068 = vadd.xlane.f32.xlu0 %v5067
        %v5069 = vpop.xlane.xlu0 %5068
        %v5070 = vsel %vm434, %v5053, 0.0
        %5071 = vadd.xlane.f32.xlu0 %v5070
        %v5072 = vpop.xlane.xlu0 %5071
        %v5073 = vsel %vm434, %v5055, 0.0
        %5074 = vadd.xlane.f32.xlu0 %v5073
        %v5075 = vpop.xlane.xlu0 %5074
        %v5076 = vsel %vm434, %v5057, 0.0
        %5077 = vadd.xlane.f32.xlu0 %v5076
        %v5078 = vpop.xlane.xlu0 %5077
        %v5079 = vsel %vm434, %v5059, 0.0
        %5080 = vadd.xlane.f32.xlu0 %v5079
        %v5081 = vpop.xlane.xlu0 %5080
        %v5082 = vsel %vm434, %v5061, 0.0
        %5083 = vadd.xlane.f32.xlu0 %v5082
        %v5084 = vpop.xlane.xlu0 %5083
        %v5085 = vsel %vm434, %v5063, 0.0
        %5086 = vadd.xlane.f32.xlu0 %v5085
        %v5087 = vpop.xlane.xlu0 %5086
        %v5088 = vrcp.pop %v5066
        %v5089 = vrcp.pop %v5069
        %v5090 = vrcp.pop %v5072
        %v5091 = vrcp.pop %v5075
        %v5092 = vrcp.pop %v5078
        %v5093 = vrcp.pop %v5081
        %v5094 = vrcp.pop %v5084
        %v5095 = vrcp.pop %v5087
        %v5096 = vmul.f32 %v5049, %v5088
        %v5097 = vmul.f32 %v5051, %v5089
        %v5098 = vmul.f32 %v5053, %v5090
        %v5099 = vmul.f32 %v5055, %v5091
        %v5100 = vmul.f32 %v5057, %v5092
        %v5101 = vmul.f32 %v5059, %v5093
        %v5102 = vmul.f32 %v5061, %v5094
        %v5103 = vmul.f32 %v5063, %v5095
        %5104 = vrot.lane.b32.xlu0 %v385, 40
        %v5105 = vpop.permute.xlu0 %5104
        %v5108 = vsel %vm434, %v5096, 0
        %5110 = vmatprep.subr.mxu0 0.0
        %5111 = vmatpush1.msra.mxu0 %v5105
        %5112 = vmatprep.subr.mxu0 0.0
        %5113 = vmatpush1.msra.mxu0 0.0
        %5114 = vmatprep.subr.mxu0 0.0
        %5115 = vmatpush1.msra.mxu0 0.0
        %5116 = vmatprep.subr.mxu0 0.0
        %5117 = vmatpush1.msra.mxu0 0.0
        %5118 = vmatprep.subr.mxu0 0.0
        %5119 = vmatpush1.msra.mxu0 0.0
        %5120 = vmatprep.subr.mxu0 0.0
        %5121 = vmatpush1.msra.mxu0 0.0
        %5122 = vmatprep.subr.mxu0 0.0
        %5123 = vmatpush1.msra.mxu0 0.0
        %5124 = vmatprep.subr.mxu0 0.0
        %5125 = vmatpush1.msra.mxu0 0.0
        %5126 = vmatprep.subr.mxu0 0.0
        %5127 = vmatpush1.msra.mxu0 0.0
        %5128 = vmatprep.subr.mxu0 0.0
        %5129 = vmatpush1.msra.mxu0 0.0
        %5130 = vmatprep.subr.mxu0 0.0
        %5131 = vmatpush1.msra.mxu0 0.0
        %5132 = vmatprep.subr.mxu0 0.0
        %5133 = vmatpush1.msra.mxu0 0.0
        %5134 = vmatprep.subr.mxu0 0.0
        %5135 = vmatpush1.msra.mxu0 0.0
        %5136 = vmatprep.subr.mxu0 0.0
        %5137 = vmatpush1.msra.mxu0 0.0
        %5138 = vmatprep.subr.mxu0 0.0
        %5139 = vmatpush1.msra.mxu0 0.0
        %5140 = vmatprep.subr.mxu0 0.0
        %5141 = vmatpush1.msra.mxu0 0.0
        %5142 = vmatprep.subr.mxu0 0.0
        %5143 = vmatpush1.msra.mxu0 0.0
        %5144 = vmatprep.subr.mxu0 0.0
        %5145 = vmatpush1.msra.mxu0 0.0
        %5146 = vmatprep.subr.mxu0 0.0
        %5147 = vmatpush1.msra.mxu0 0.0
        %5148 = vmatprep.subr.mxu0 0.0
        %5149 = vmatpush1.msra.mxu0 0.0
        %5150 = vmatprep.subr.mxu0 0.0
        %5151 = vmatpush1.msra.mxu0 0.0
        %5152 = vmatprep.subr.mxu0 0.0
        %5153 = vmatpush1.msra.mxu0 0.0
        %5154 = vmatprep.subr.mxu0 0.0
        %5155 = vmatpush1.msra.mxu0 0.0
        %5156 = vmatprep.subr.mxu0 0.0
        %5157 = vmatpush1.msra.mxu0 0.0
        %5158 = vmatprep.subr.mxu0 0.0
        %5159 = vmatpush1.msra.mxu0 0.0
        %5160 = vmatprep.subr.mxu0 0.0
        %5161 = vmatpush1.msra.mxu0 0.0
        %5162 = vmatprep.subr.mxu0 0.0
        %5163 = vmatpush1.msra.mxu0 0.0
        %5164 = vmatprep.subr.mxu0 0.0
        %5165 = vmatpush1.msra.mxu0 0.0
        %5166 = vmatprep.subr.mxu0 0.0
        %5167 = vmatpush1.msra.mxu0 0.0
        %5168 = vmatprep.subr.mxu0 0.0
        %5169 = vmatpush1.msra.mxu0 0.0
        %5170 = vmatprep.subr.mxu0 0.0
        %5171 = vmatpush1.msra.mxu0 0.0
        %5172 = vmatprep.subr.mxu0 0.0
        %5173 = vmatpush1.msra.mxu0 0.0
        %5174 = vmatprep.mubr.f32.mxu0 0.0
        %5175 = vmatmul.mubr.f32.gmra.mrb[0].mxu0 %v5108
        %v5176 = vpop.f32.mrb[0].mxu0
        %v5177 = vadd.f32 0.0, %v5176
        %v5178 = vpop.f32.mrb[0].mxu0
        %5179 = vdwg.mxu0
        %5180 = vrot.lane.b32.xlu0 %v390, 40
        %v5181 = vpop.permute.xlu0 %5180
        %v5184 = vsel %vm434, %v5097, 0
        %5186 = vmatprep.subr.mxu0 0.0
        %5187 = vmatpush1.msra.mxu0 %v5181
        %5188 = vmatprep.subr.mxu0 0.0
        %5189 = vmatpush1.msra.mxu0 0.0
        %5190 = vmatprep.subr.mxu0 0.0
        %5191 = vmatpush1.msra.mxu0 0.0
        %5192 = vmatprep.subr.mxu0 0.0
        %5193 = vmatpush1.msra.mxu0 0.0
        %5194 = vmatprep.subr.mxu0 0.0
        %5195 = vmatpush1.msra.mxu0 0.0
        %5196 = vmatprep.subr.mxu0 0.0
        %5197 = vmatpush1.msra.mxu0 0.0
        %5198 = vmatprep.subr.mxu0 0.0
        %5199 = vmatpush1.msra.mxu0 0.0
        %5200 = vmatprep.subr.mxu0 0.0
        %5201 = vmatpush1.msra.mxu0 0.0
        %5202 = vmatprep.subr.mxu0 0.0
        %5203 = vmatpush1.msra.mxu0 0.0
        %5204 = vmatprep.subr.mxu0 0.0
        %5205 = vmatpush1.msra.mxu0 0.0
        %5206 = vmatprep.subr.mxu0 0.0
        %5207 = vmatpush1.msra.mxu0 0.0
        %5208 = vmatprep.subr.mxu0 0.0
        %5209 = vmatpush1.msra.mxu0 0.0
        %5210 = vmatprep.subr.mxu0 0.0
        %5211 = vmatpush1.msra.mxu0 0.0
        %5212 = vmatprep.subr.mxu0 0.0
        %5213 = vmatpush1.msra.mxu0 0.0
        %5214 = vmatprep.subr.mxu0 0.0
        %5215 = vmatpush1.msra.mxu0 0.0
        %5216 = vmatprep.subr.mxu0 0.0
        %5217 = vmatpush1.msra.mxu0 0.0
        %5218 = vmatprep.subr.mxu0 0.0
        %5219 = vmatpush1.msra.mxu0 0.0
        %5220 = vmatprep.subr.mxu0 0.0
        %5221 = vmatpush1.msra.mxu0 0.0
        %5222 = vmatprep.subr.mxu0 0.0
        %5223 = vmatpush1.msra.mxu0 0.0
        %5224 = vmatprep.subr.mxu0 0.0
        %5225 = vmatpush1.msra.mxu0 0.0
        %5226 = vmatprep.subr.mxu0 0.0
        %5227 = vmatpush1.msra.mxu0 0.0
        %5228 = vmatprep.subr.mxu0 0.0
        %5229 = vmatpush1.msra.mxu0 0.0
        %5230 = vmatprep.subr.mxu0 0.0
        %5231 = vmatpush1.msra.mxu0 0.0
        %5232 = vmatprep.subr.mxu0 0.0
        %5233 = vmatpush1.msra.mxu0 0.0
        %5234 = vmatprep.subr.mxu0 0.0
        %5235 = vmatpush1.msra.mxu0 0.0
        %5236 = vmatprep.subr.mxu0 0.0
        %5237 = vmatpush1.msra.mxu0 0.0
        %5238 = vmatprep.subr.mxu0 0.0
        %5239 = vmatpush1.msra.mxu0 0.0
        %5240 = vmatprep.subr.mxu0 0.0
        %5241 = vmatpush1.msra.mxu0 0.0
        %5242 = vmatprep.subr.mxu0 0.0
        %5243 = vmatpush1.msra.mxu0 0.0
        %5244 = vmatprep.subr.mxu0 0.0
        %5245 = vmatpush1.msra.mxu0 0.0
        %5246 = vmatprep.subr.mxu0 0.0
        %5247 = vmatpush1.msra.mxu0 0.0
        %5248 = vmatprep.subr.mxu0 0.0
        %5249 = vmatpush1.msra.mxu0 0.0
        %5250 = vmatprep.mubr.f32.mxu0 0.0
        %5251 = vmatmul.mubr.f32.gmra.mrb[0].mxu0 %v5184
        %v5252 = vpop.f32.mrb[0].mxu0
        %v5253 = vadd.f32 0.0, %v5252
        %v5254 = vpop.f32.mrb[0].mxu0
        %5255 = vdwg.mxu0
        %5256 = vrot.lane.b32.xlu0 %v395, 40
        %v5257 = vpop.permute.xlu0 %5256
        %v5260 = vsel %vm434, %v5098, 0
        %5262 = vmatprep.subr.mxu0 0.0
        %5263 = vmatpush1.msra.mxu0 %v5257
        %5264 = vmatprep.subr.mxu0 0.0
        %5265 = vmatpush1.msra.mxu0 0.0
        %5266 = vmatprep.subr.mxu0 0.0
        %5267 = vmatpush1.msra.mxu0 0.0
        %5268 = vmatprep.subr.mxu0 0.0
        %5269 = vmatpush1.msra.mxu0 0.0
        %5270 = vmatprep.subr.mxu0 0.0
        %5271 = vmatpush1.msra.mxu0 0.0
        %5272 = vmatprep.subr.mxu0 0.0
        %5273 = vmatpush1.msra.mxu0 0.0
        %5274 = vmatprep.subr.mxu0 0.0
        %5275 = vmatpush1.msra.mxu0 0.0
        %5276 = vmatprep.subr.mxu0 0.0
        %5277 = vmatpush1.msra.mxu0 0.0
        %5278 = vmatprep.subr.mxu0 0.0
        %5279 = vmatpush1.msra.mxu0 0.0
        %5280 = vmatprep.subr.mxu0 0.0
        %5281 = vmatpush1.msra.mxu0 0.0
        %5282 = vmatprep.subr.mxu0 0.0
        %5283 = vmatpush1.msra.mxu0 0.0
        %5284 = vmatprep.subr.mxu0 0.0
        %5285 = vmatpush1.msra.mxu0 0.0
        %5286 = vmatprep.subr.mxu0 0.0
        %5287 = vmatpush1.msra.mxu0 0.0
        %5288 = vmatprep.subr.mxu0 0.0
        %5289 = vmatpush1.msra.mxu0 0.0
        %5290 = vmatprep.subr.mxu0 0.0
        %5291 = vmatpush1.msra.mxu0 0.0
        %5292 = vmatprep.subr.mxu0 0.0
        %5293 = vmatpush1.msra.mxu0 0.0
        %5294 = vmatprep.subr.mxu0 0.0
        %5295 = vmatpush1.msra.mxu0 0.0
        %5296 = vmatprep.subr.mxu0 0.0
        %5297 = vmatpush1.msra.mxu0 0.0
        %5298 = vmatprep.subr.mxu0 0.0
        %5299 = vmatpush1.msra.mxu0 0.0
        %5300 = vmatprep.subr.mxu0 0.0
        %5301 = vmatpush1.msra.mxu0 0.0
        %5302 = vmatprep.subr.mxu0 0.0
        %5303 = vmatpush1.msra.mxu0 0.0
        %5304 = vmatprep.subr.mxu0 0.0
        %5305 = vmatpush1.msra.mxu0 0.0
        %5306 = vmatprep.subr.mxu0 0.0
        %5307 = vmatpush1.msra.mxu0 0.0
        %5308 = vmatprep.subr.mxu0 0.0
        %5309 = vmatpush1.msra.mxu0 0.0
        %5310 = vmatprep.subr.mxu0 0.0
        %5311 = vmatpush1.msra.mxu0 0.0
        %5312 = vmatprep.subr.mxu0 0.0
        %5313 = vmatpush1.msra.mxu0 0.0
        %5314 = vmatprep.subr.mxu0 0.0
        %5315 = vmatpush1.msra.mxu0 0.0
        %5316 = vmatprep.subr.mxu0 0.0
        %5317 = vmatpush1.msra.mxu0 0.0
        %5318 = vmatprep.subr.mxu0 0.0
        %5319 = vmatpush1.msra.mxu0 0.0
        %5320 = vmatprep.subr.mxu0 0.0
        %5321 = vmatpush1.msra.mxu0 0.0
        %5322 = vmatprep.subr.mxu0 0.0
        %5323 = vmatpush1.msra.mxu0 0.0
        %5324 = vmatprep.subr.mxu0 0.0
        %5325 = vmatpush1.msra.mxu0 0.0
        %5326 = vmatprep.mubr.f32.mxu0 0.0
        %5327 = vmatmul.mubr.f32.gmra.mrb[0].mxu0 %v5260
        %v5328 = vpop.f32.mrb[0].mxu0
        %v5329 = vadd.f32 0.0, %v5328
        %v5330 = vpop.f32.mrb[0].mxu0
        %5331 = vdwg.mxu0
        %5332 = vrot.lane.b32.xlu0 %v400, 40
        %v5333 = vpop.permute.xlu0 %5332
        %v5336 = vsel %vm434, %v5099, 0
        %5338 = vmatprep.subr.mxu0 0.0
        %5339 = vmatpush1.msra.mxu0 %v5333
        %5340 = vmatprep.subr.mxu0 0.0
        %5341 = vmatpush1.msra.mxu0 0.0
        %5342 = vmatprep.subr.mxu0 0.0
        %5343 = vmatpush1.msra.mxu0 0.0
        %5344 = vmatprep.subr.mxu0 0.0
        %5345 = vmatpush1.msra.mxu0 0.0
        %5346 = vmatprep.subr.mxu0 0.0
        %5347 = vmatpush1.msra.mxu0 0.0
        %5348 = vmatprep.subr.mxu0 0.0
        %5349 = vmatpush1.msra.mxu0 0.0
        %5350 = vmatprep.subr.mxu0 0.0
        %5351 = vmatpush1.msra.mxu0 0.0
        %5352 = vmatprep.subr.mxu0 0.0
        %5353 = vmatpush1.msra.mxu0 0.0
        %5354 = vmatprep.subr.mxu0 0.0
        %5355 = vmatpush1.msra.mxu0 0.0
        %5356 = vmatprep.subr.mxu0 0.0
        %5357 = vmatpush1.msra.mxu0 0.0
        %5358 = vmatprep.subr.mxu0 0.0
        %5359 = vmatpush1.msra.mxu0 0.0
        %5360 = vmatprep.subr.mxu0 0.0
        %5361 = vmatpush1.msra.mxu0 0.0
        %5362 = vmatprep.subr.mxu0 0.0
        %5363 = vmatpush1.msra.mxu0 0.0
        %5364 = vmatprep.subr.mxu0 0.0
        %5365 = vmatpush1.msra.mxu0 0.0
        %5366 = vmatprep.subr.mxu0 0.0
        %5367 = vmatpush1.msra.mxu0 0.0
        %5368 = vmatprep.subr.mxu0 0.0
        %5369 = vmatpush1.msra.mxu0 0.0
        %5370 = vmatprep.subr.mxu0 0.0
        %5371 = vmatpush1.msra.mxu0 0.0
        %5372 = vmatprep.subr.mxu0 0.0
        %5373 = vmatpush1.msra.mxu0 0.0
        %5374 = vmatprep.subr.mxu0 0.0
        %5375 = vmatpush1.msra.mxu0 0.0
        %5376 = vmatprep.subr.mxu0 0.0
        %5377 = vmatpush1.msra.mxu0 0.0
        %5378 = vmatprep.subr.mxu0 0.0
        %5379 = vmatpush1.msra.mxu0 0.0
        %5380 = vmatprep.subr.mxu0 0.0
        %5381 = vmatpush1.msra.mxu0 0.0
        %5382 = vmatprep.subr.mxu0 0.0
        %5383 = vmatpush1.msra.mxu0 0.0
        %5384 = vmatprep.subr.mxu0 0.0
        %5385 = vmatpush1.msra.mxu0 0.0
        %5386 = vmatprep.subr.mxu0 0.0
        %5387 = vmatpush1.msra.mxu0 0.0
        %5388 = vmatprep.subr.mxu0 0.0
        %5389 = vmatpush1.msra.mxu0 0.0
        %5390 = vmatprep.subr.mxu0 0.0
        %5391 = vmatpush1.msra.mxu0 0.0
        %5392 = vmatprep.subr.mxu0 0.0
        %5393 = vmatpush1.msra.mxu0 0.0
        %5394 = vmatprep.subr.mxu0 0.0
        %5395 = vmatpush1.msra.mxu0 0.0
        %5396 = vmatprep.subr.mxu0 0.0
        %5397 = vmatpush1.msra.mxu0 0.0
        %5398 = vmatprep.subr.mxu0 0.0
        %5399 = vmatpush1.msra.mxu0 0.0
        %5400 = vmatprep.subr.mxu0 0.0
        %5401 = vmatpush1.msra.mxu0 0.0
        %5402 = vmatprep.mubr.f32.mxu0 0.0
        %5403 = vmatmul.mubr.f32.gmra.mrb[0].mxu0 %v5336
        %v5404 = vpop.f32.mrb[0].mxu0
        %v5405 = vadd.f32 0.0, %v5404
        %v5406 = vpop.f32.mrb[0].mxu0
        %5407 = vdwg.mxu0
        %5408 = vrot.lane.b32.xlu0 %v405, 40
        %v5409 = vpop.permute.xlu0 %5408
        %v5412 = vsel %vm434, %v5100, 0
        %5414 = vmatprep.subr.mxu0 0.0
        %5415 = vmatpush1.msra.mxu0 %v5409
        %5416 = vmatprep.subr.mxu0 0.0
        %5417 = vmatpush1.msra.mxu0 0.0
        %5418 = vmatprep.subr.mxu0 0.0
        %5419 = vmatpush1.msra.mxu0 0.0
        %5420 = vmatprep.subr.mxu0 0.0
        %5421 = vmatpush1.msra.mxu0 0.0
        %5422 = vmatprep.subr.mxu0 0.0
        %5423 = vmatpush1.msra.mxu0 0.0
        %5424 = vmatprep.subr.mxu0 0.0
        %5425 = vmatpush1.msra.mxu0 0.0
        %5426 = vmatprep.subr.mxu0 0.0
        %5427 = vmatpush1.msra.mxu0 0.0
        %5428 = vmatprep.subr.mxu0 0.0
        %5429 = vmatpush1.msra.mxu0 0.0
        %5430 = vmatprep.subr.mxu0 0.0
        %5431 = vmatpush1.msra.mxu0 0.0
        %5432 = vmatprep.subr.mxu0 0.0
        %5433 = vmatpush1.msra.mxu0 0.0
        %5434 = vmatprep.subr.mxu0 0.0
        %5435 = vmatpush1.msra.mxu0 0.0
        %5436 = vmatprep.subr.mxu0 0.0
        %5437 = vmatpush1.msra.mxu0 0.0
        %5438 = vmatprep.subr.mxu0 0.0
        %5439 = vmatpush1.msra.mxu0 0.0
        %5440 = vmatprep.subr.mxu0 0.0
        %5441 = vmatpush1.msra.mxu0 0.0
        %5442 = vmatprep.subr.mxu0 0.0
        %5443 = vmatpush1.msra.mxu0 0.0
        %5444 = vmatprep.subr.mxu0 0.0
        %5445 = vmatpush1.msra.mxu0 0.0
        %5446 = vmatprep.subr.mxu0 0.0
        %5447 = vmatpush1.msra.mxu0 0.0
        %5448 = vmatprep.subr.mxu0 0.0
        %5449 = vmatpush1.msra.mxu0 0.0
        %5450 = vmatprep.subr.mxu0 0.0
        %5451 = vmatpush1.msra.mxu0 0.0
        %5452 = vmatprep.subr.mxu0 0.0
        %5453 = vmatpush1.msra.mxu0 0.0
        %5454 = vmatprep.subr.mxu0 0.0
        %5455 = vmatpush1.msra.mxu0 0.0
        %5456 = vmatprep.subr.mxu0 0.0
        %5457 = vmatpush1.msra.mxu0 0.0
        %5458 = vmatprep.subr.mxu0 0.0
        %5459 = vmatpush1.msra.mxu0 0.0
        %5460 = vmatprep.subr.mxu0 0.0
        %5461 = vmatpush1.msra.mxu0 0.0
        %5462 = vmatprep.subr.mxu0 0.0
        %5463 = vmatpush1.msra.mxu0 0.0
        %5464 = vmatprep.subr.mxu0 0.0
        %5465 = vmatpush1.msra.mxu0 0.0
        %5466 = vmatprep.subr.mxu0 0.0
        %5467 = vmatpush1.msra.mxu0 0.0
        %5468 = vmatprep.subr.mxu0 0.0
        %5469 = vmatpush1.msra.mxu0 0.0
        %5470 = vmatprep.subr.mxu0 0.0
        %5471 = vmatpush1.msra.mxu0 0.0
        %5472 = vmatprep.subr.mxu0 0.0
        %5473 = vmatpush1.msra.mxu0 0.0
        %5474 = vmatprep.subr.mxu0 0.0
        %5475 = vmatpush1.msra.mxu0 0.0
        %5476 = vmatprep.subr.mxu0 0.0
        %5477 = vmatpush1.msra.mxu0 0.0
        %5478 = vmatprep.mubr.f32.mxu0 0.0
        %5479 = vmatmul.mubr.f32.gmra.mrb[0].mxu0 %v5412
        %v5480 = vpop.f32.mrb[0].mxu0
        %v5481 = vadd.f32 0.0, %v5480
        %v5482 = vpop.f32.mrb[0].mxu0
        %5483 = vdwg.mxu0
        %5484 = vrot.lane.b32.xlu0 %v410, 40
        %v5485 = vpop.permute.xlu0 %5484
        %v5488 = vsel %vm434, %v5101, 0
        %5490 = vmatprep.subr.mxu0 0.0
        %5491 = vmatpush1.msra.mxu0 %v5485
        %5492 = vmatprep.subr.mxu0 0.0
        %5493 = vmatpush1.msra.mxu0 0.0
        %5494 = vmatprep.subr.mxu0 0.0
        %5495 = vmatpush1.msra.mxu0 0.0
        %5496 = vmatprep.subr.mxu0 0.0
        %5497 = vmatpush1.msra.mxu0 0.0
        %5498 = vmatprep.subr.mxu0 0.0
        %5499 = vmatpush1.msra.mxu0 0.0
        %5500 = vmatprep.subr.mxu0 0.0
        %5501 = vmatpush1.msra.mxu0 0.0
        %5502 = vmatprep.subr.mxu0 0.0
        %5503 = vmatpush1.msra.mxu0 0.0
        %5504 = vmatprep.subr.mxu0 0.0
        %5505 = vmatpush1.msra.mxu0 0.0
        %5506 = vmatprep.subr.mxu0 0.0
        %5507 = vmatpush1.msra.mxu0 0.0
        %5508 = vmatprep.subr.mxu0 0.0
        %5509 = vmatpush1.msra.mxu0 0.0
        %5510 = vmatprep.subr.mxu0 0.0
        %5511 = vmatpush1.msra.mxu0 0.0
        %5512 = vmatprep.subr.mxu0 0.0
        %5513 = vmatpush1.msra.mxu0 0.0
        %5514 = vmatprep.subr.mxu0 0.0
        %5515 = vmatpush1.msra.mxu0 0.0
        %5516 = vmatprep.subr.mxu0 0.0
        %5517 = vmatpush1.msra.mxu0 0.0
        %5518 = vmatprep.subr.mxu0 0.0
        %5519 = vmatpush1.msra.mxu0 0.0
        %5520 = vmatprep.subr.mxu0 0.0
        %5521 = vmatpush1.msra.mxu0 0.0
        %5522 = vmatprep.subr.mxu0 0.0
        %5523 = vmatpush1.msra.mxu0 0.0
        %5524 = vmatprep.subr.mxu0 0.0
        %5525 = vmatpush1.msra.mxu0 0.0
        %5526 = vmatprep.subr.mxu0 0.0
        %5527 = vmatpush1.msra.mxu0 0.0
        %5528 = vmatprep.subr.mxu0 0.0
        %5529 = vmatpush1.msra.mxu0 0.0
        %5530 = vmatprep.subr.mxu0 0.0
        %5531 = vmatpush1.msra.mxu0 0.0
        %5532 = vmatprep.subr.mxu0 0.0
        %5533 = vmatpush1.msra.mxu0 0.0
        %5534 = vmatprep.subr.mxu0 0.0
        %5535 = vmatpush1.msra.mxu0 0.0
        %5536 = vmatprep.subr.mxu0 0.0
        %5537 = vmatpush1.msra.mxu0 0.0
        %5538 = vmatprep.subr.mxu0 0.0
        %5539 = vmatpush1.msra.mxu0 0.0
        %5540 = vmatprep.subr.mxu0 0.0
        %5541 = vmatpush1.msra.mxu0 0.0
        %5542 = vmatprep.subr.mxu0 0.0
        %5543 = vmatpush1.msra.mxu0 0.0
        %5544 = vmatprep.subr.mxu0 0.0
        %5545 = vmatpush1.msra.mxu0 0.0
        %5546 = vmatprep.subr.mxu0 0.0
        %5547 = vmatpush1.msra.mxu0 0.0
        %5548 = vmatprep.subr.mxu0 0.0
        %5549 = vmatpush1.msra.mxu0 0.0
        %5550 = vmatprep.subr.mxu0 0.0
        %5551 = vmatpush1.msra.mxu0 0.0
        %5552 = vmatprep.subr.mxu0 0.0
        %5553 = vmatpush1.msra.mxu0 0.0
        %5554 = vmatprep.mubr.f32.mxu0 0.0
        %5555 = vmatmul.mubr.f32.gmra.mrb[0].mxu0 %v5488
        %v5556 = vpop.f32.mrb[0].mxu0
        %v5557 = vadd.f32 0.0, %v5556
        %v5558 = vpop.f32.mrb[0].mxu0
        %5559 = vdwg.mxu0
        %5560 = vrot.lane.b32.xlu0 %v415, 40
        %v5561 = vpop.permute.xlu0 %5560
        %v5564 = vsel %vm434, %v5102, 0
        %5566 = vmatprep.subr.mxu0 0.0
        %5567 = vmatpush1.msra.mxu0 %v5561
        %5568 = vmatprep.subr.mxu0 0.0
        %5569 = vmatpush1.msra.mxu0 0.0
        %5570 = vmatprep.subr.mxu0 0.0
        %5571 = vmatpush1.msra.mxu0 0.0
        %5572 = vmatprep.subr.mxu0 0.0
        %5573 = vmatpush1.msra.mxu0 0.0
        %5574 = vmatprep.subr.mxu0 0.0
        %5575 = vmatpush1.msra.mxu0 0.0
        %5576 = vmatprep.subr.mxu0 0.0
        %5577 = vmatpush1.msra.mxu0 0.0
        %5578 = vmatprep.subr.mxu0 0.0
        %5579 = vmatpush1.msra.mxu0 0.0
        %5580 = vmatprep.subr.mxu0 0.0
        %5581 = vmatpush1.msra.mxu0 0.0
        %5582 = vmatprep.subr.mxu0 0.0
        %5583 = vmatpush1.msra.mxu0 0.0
        %5584 = vmatprep.subr.mxu0 0.0
        %5585 = vmatpush1.msra.mxu0 0.0
        %5586 = vmatprep.subr.mxu0 0.0
        %5587 = vmatpush1.msra.mxu0 0.0
        %5588 = vmatprep.subr.mxu0 0.0
        %5589 = vmatpush1.msra.mxu0 0.0
        %5590 = vmatprep.subr.mxu0 0.0
        %5591 = vmatpush1.msra.mxu0 0.0
        %5592 = vmatprep.subr.mxu0 0.0
        %5593 = vmatpush1.msra.mxu0 0.0
        %5594 = vmatprep.subr.mxu0 0.0
        %5595 = vmatpush1.msra.mxu0 0.0
        %5596 = vmatprep.subr.mxu0 0.0
        %5597 = vmatpush1.msra.mxu0 0.0
        %5598 = vmatprep.subr.mxu0 0.0
        %5599 = vmatpush1.msra.mxu0 0.0
        %5600 = vmatprep.subr.mxu0 0.0
        %5601 = vmatpush1.msra.mxu0 0.0
        %5602 = vmatprep.subr.mxu0 0.0
        %5603 = vmatpush1.msra.mxu0 0.0
        %5604 = vmatprep.subr.mxu0 0.0
        %5605 = vmatpush1.msra.mxu0 0.0
        %5606 = vmatprep.subr.mxu0 0.0
        %5607 = vmatpush1.msra.mxu0 0.0
        %5608 = vmatprep.subr.mxu0 0.0
        %5609 = vmatpush1.msra.mxu0 0.0
        %5610 = vmatprep.subr.mxu0 0.0
        %5611 = vmatpush1.msra.mxu0 0.0
        %5612 = vmatprep.subr.mxu0 0.0
        %5613 = vmatpush1.msra.mxu0 0.0
        %5614 = vmatprep.subr.mxu0 0.0
        %5615 = vmatpush1.msra.mxu0 0.0
        %5616 = vmatprep.subr.mxu0 0.0
        %5617 = vmatpush1.msra.mxu0 0.0
        %5618 = vmatprep.subr.mxu0 0.0
        %5619 = vmatpush1.msra.mxu0 0.0
        %5620 = vmatprep.subr.mxu0 0.0
        %5621 = vmatpush1.msra.mxu0 0.0
        %5622 = vmatprep.subr.mxu0 0.0
        %5623 = vmatpush1.msra.mxu0 0.0
        %5624 = vmatprep.subr.mxu0 0.0
        %5625 = vmatpush1.msra.mxu0 0.0
        %5626 = vmatprep.subr.mxu0 0.0
        %5627 = vmatpush1.msra.mxu0 0.0
        %5628 = vmatprep.subr.mxu0 0.0
        %5629 = vmatpush1.msra.mxu0 0.0
        %5630 = vmatprep.mubr.f32.mxu0 0.0
        %5631 = vmatmul.mubr.f32.gmra.mrb[0].mxu0 %v5564
        %v5632 = vpop.f32.mrb[0].mxu0
        %v5633 = vadd.f32 0.0, %v5632
        %v5634 = vpop.f32.mrb[0].mxu0
        %5635 = vdwg.mxu0
        %5636 = vrot.lane.b32.xlu0 %v420, 40
        %v5637 = vpop.permute.xlu0 %5636
        %v5640 = vsel %vm434, %v5103, 0
        %5642 = vmatprep.subr.mxu0 0.0
        %5643 = vmatpush1.msra.mxu0 %v5637
        %5644 = vmatprep.subr.mxu0 0.0
        %5645 = vmatpush1.msra.mxu0 0.0
        %5646 = vmatprep.subr.mxu0 0.0
        %5647 = vmatpush1.msra.mxu0 0.0
        %5648 = vmatprep.subr.mxu0 0.0
        %5649 = vmatpush1.msra.mxu0 0.0
        %5650 = vmatprep.subr.mxu0 0.0
        %5651 = vmatpush1.msra.mxu0 0.0
        %5652 = vmatprep.subr.mxu0 0.0
        %5653 = vmatpush1.msra.mxu0 0.0
        %5654 = vmatprep.subr.mxu0 0.0
        %5655 = vmatpush1.msra.mxu0 0.0
        %5656 = vmatprep.subr.mxu0 0.0
        %5657 = vmatpush1.msra.mxu0 0.0
        %5658 = vmatprep.subr.mxu0 0.0
        %5659 = vmatpush1.msra.mxu0 0.0
        %5660 = vmatprep.subr.mxu0 0.0
        %5661 = vmatpush1.msra.mxu0 0.0
        %5662 = vmatprep.subr.mxu0 0.0
        %5663 = vmatpush1.msra.mxu0 0.0
        %5664 = vmatprep.subr.mxu0 0.0
        %5665 = vmatpush1.msra.mxu0 0.0
        %5666 = vmatprep.subr.mxu0 0.0
        %5667 = vmatpush1.msra.mxu0 0.0
        %5668 = vmatprep.subr.mxu0 0.0
        %5669 = vmatpush1.msra.mxu0 0.0
        %5670 = vmatprep.subr.mxu0 0.0
        %5671 = vmatpush1.msra.mxu0 0.0
        %5672 = vmatprep.subr.mxu0 0.0
        %5673 = vmatpush1.msra.mxu0 0.0
        %5674 = vmatprep.subr.mxu0 0.0
        %5675 = vmatpush1.msra.mxu0 0.0
        %5676 = vmatprep.subr.mxu0 0.0
        %5677 = vmatpush1.msra.mxu0 0.0
        %5678 = vmatprep.subr.mxu0 0.0
        %5679 = vmatpush1.msra.mxu0 0.0
        %5680 = vmatprep.subr.mxu0 0.0
        %5681 = vmatpush1.msra.mxu0 0.0
        %5682 = vmatprep.subr.mxu0 0.0
        %5683 = vmatpush1.msra.mxu0 0.0
        %5684 = vmatprep.subr.mxu0 0.0
        %5685 = vmatpush1.msra.mxu0 0.0
        %5686 = vmatprep.subr.mxu0 0.0
        %5687 = vmatpush1.msra.mxu0 0.0
        %5688 = vmatprep.subr.mxu0 0.0
        %5689 = vmatpush1.msra.mxu0 0.0
        %5690 = vmatprep.subr.mxu0 0.0
        %5691 = vmatpush1.msra.mxu0 0.0
        %5692 = vmatprep.subr.mxu0 0.0
        %5693 = vmatpush1.msra.mxu0 0.0
        %5694 = vmatprep.subr.mxu0 0.0
        %5695 = vmatpush1.msra.mxu0 0.0
        %5696 = vmatprep.subr.mxu0 0.0
        %5697 = vmatpush1.msra.mxu0 0.0
        %5698 = vmatprep.subr.mxu0 0.0
        %5699 = vmatpush1.msra.mxu0 0.0
        %5700 = vmatprep.subr.mxu0 0.0
        %5701 = vmatpush1.msra.mxu0 0.0
        %5702 = vmatprep.subr.mxu0 0.0
        %5703 = vmatpush1.msra.mxu0 0.0
        %5704 = vmatprep.subr.mxu0 0.0
        %5705 = vmatpush1.msra.mxu0 0.0
        %5706 = vmatprep.mubr.f32.mxu0 0.0
        %5707 = vmatmul.mubr.f32.gmra.mrb[0].mxu0 %v5640
        %v5708 = vpop.f32.mrb[0].mxu0
        %v5709 = vadd.f32 0.0, %v5708
        %v5710 = vpop.f32.mrb[0].mxu0
        %5711 = vdwg.mxu0
        %5720 = vrot.lane.b32.xlu0 %v2537, 8
        %v5721 = vpop.permute.xlu0 %5720
        %5722 = vrot.lane.b32.xlu0 %v2613, 8
        %v5723 = vpop.permute.xlu0 %5722
        %5724 = vrot.lane.b32.xlu0 %v2689, 8
        %v5725 = vpop.permute.xlu0 %5724
        %5726 = vrot.lane.b32.xlu0 %v2765, 8
        %v5727 = vpop.permute.xlu0 %5726
        %5728 = vrot.lane.b32.xlu0 %v2841, 8
        %v5729 = vpop.permute.xlu0 %5728
        %5730 = vrot.lane.b32.xlu0 %v2917, 8
        %v5731 = vpop.permute.xlu0 %5730
        %5732 = vrot.lane.b32.xlu0 %v2993, 8
        %v5733 = vpop.permute.xlu0 %5732
        %5734 = vrot.lane.b32.xlu0 %v3069, 8
        %v5735 = vpop.permute.xlu0 %5734
        %5752 = vrot.lane.b32.xlu0 %v3857, 16
        %v5753 = vpop.permute.xlu0 %5752
        %5754 = vrot.lane.b32.xlu0 %v3933, 16
        %v5755 = vpop.permute.xlu0 %5754
        %5756 = vrot.lane.b32.xlu0 %v4009, 16
        %v5757 = vpop.permute.xlu0 %5756
        %5758 = vrot.lane.b32.xlu0 %v4085, 16
        %v5759 = vpop.permute.xlu0 %5758
        %5760 = vrot.lane.b32.xlu0 %v4161, 16
        %v5761 = vpop.permute.xlu0 %5760
        %5762 = vrot.lane.b32.xlu0 %v4237, 16
        %v5763 = vpop.permute.xlu0 %5762
        %5764 = vrot.lane.b32.xlu0 %v4313, 16
        %v5765 = vpop.permute.xlu0 %5764
        %5766 = vrot.lane.b32.xlu0 %v4389, 16
        %v5767 = vpop.permute.xlu0 %5766
        %5784 = vrot.lane.b32.xlu0 %v5177, 24
        %v5785 = vpop.permute.xlu0 %5784
        %5786 = vrot.lane.b32.xlu0 %v5253, 24
        %v5787 = vpop.permute.xlu0 %5786
        %5788 = vrot.lane.b32.xlu0 %v5329, 24
        %v5789 = vpop.permute.xlu0 %5788
        %5790 = vrot.lane.b32.xlu0 %v5405, 24
        %v5791 = vpop.permute.xlu0 %5790
        %5792 = vrot.lane.b32.xlu0 %v5481, 24
        %v5793 = vpop.permute.xlu0 %5792
        %5794 = vrot.lane.b32.xlu0 %v5557, 24
        %v5795 = vpop.permute.xlu0 %5794
        %5796 = vrot.lane.b32.xlu0 %v5633, 24
        %v5797 = vpop.permute.xlu0 %5796
        %5798 = vrot.lane.b32.xlu0 %v5709, 24
        %v5799 = vpop.permute.xlu0 %5798
        %v5808 = vsel %vm434, %v1217, %v5721
        %v5809 = vsel %vm434, %v1293, %v5723
        %v5810 = vsel %vm434, %v1369, %v5725
        %v5811 = vsel %vm434, %v1445, %v5727
        %v5812 = vsel %vm434, %v1521, %v5729
        %v5813 = vsel %vm434, %v1597, %v5731
        %v5814 = vsel %vm434, %v1673, %v5733
        %v5815 = vsel %vm434, %v1749, %v5735
        %vm5816 = vcmask 130048
        %v5817 = vsel %vm5816, %v5808, %v5753
        %v5818 = vsel %vm5816, %v5809, %v5755
        %v5819 = vsel %vm5816, %v5810, %v5757
        %v5820 = vsel %vm5816, %v5811, %v5759
        %v5821 = vsel %vm5816, %v5812, %v5761
        %v5822 = vsel %vm5816, %v5813, %v5763
        %v5823 = vsel %vm5816, %v5814, %v5765
        %v5824 = vsel %vm5816, %v5815, %v5767
        %vm5825 = vcmask 195584
        %v5826 = vsel %vm5825, %v5817, %v5785
        %v5827 = vsel %vm5825, %v5818, %v5787
        %v5828 = vsel %vm5825, %v5819, %v5789
        %v5829 = vsel %vm5825, %v5820, %v5791
        %v5830 = vsel %vm5825, %v5821, %v5793
        %v5831 = vsel %vm5825, %v5822, %v5795
        %v5832 = vsel %vm5825, %v5823, %v5797
        %v5833 = vsel %vm5825, %v5824, %v5799
        %v5834 = vld [vmem:[#allocation7] sm:$0xff]
        %v5835 = vld [vmem:[#allocation7 + $0x8] sm:$0xff]
        %v5836 = vld [vmem:[#allocation7 + $0x10] sm:$0xff]
        %v5837 = vld [vmem:[#allocation7 + $0x18] sm:$0xff]
        %v5838 = vld [vmem:[%s4] sm:$0x1]
        %v5840 = vlaneseq
        %v5841 = vshrl.u32 %v5840, 7
        %v5842 = vsub.s32 0, %v5841
        %v5843 = vrot.slane %v5838, %v5842
        %v5846 = vsel %vm293, %v5826, 0
        %v5849 = vsel %vm293, %v5827, 0
        %v5852 = vsel %vm293, %v5828, 0
        %v5855 = vsel %vm293, %v5829, 0
        %v5858 = vsel %vm293, %v5830, 0
        %v5861 = vsel %vm293, %v5831, 0
        %v5864 = vsel %vm293, %v5832, 0
        %v5867 = vsel %vm293, %v5833, 0
        %5869 = vmatprep.subr.mxu0 0.0
        %5870 = vmatpush1.msra.mxu0 %v5834
        %5871 = vmatprep.subr.mxu0 0.0
        %5872 = vmatpush1.msra.mxu0 %v5835
        %5873 = vmatprep.subr.mxu0 0.0
        %5874 = vmatpush1.msra.mxu0 %v5836
        %5875 = vmatprep.subr.mxu0 0.0
        %5876 = vmatpush1.msra.mxu0 %v5837
        %5877 = vmatprep.subr.mxu0 0.0
        %5878 = vmatpush1.msra.mxu0 0.0
        %5879 = vmatprep.subr.mxu0 0.0
        %5880 = vmatpush1.msra.mxu0 0.0
        %5881 = vmatprep.subr.mxu0 0.0
        %5882 = vmatpush1.msra.mxu0 0.0
        %5883 = vmatprep.subr.mxu0 0.0
        %5884 = vmatpush1.msra.mxu0 0.0
        %5885 = vmatprep.subr.mxu0 0.0
        %5886 = vmatpush1.msra.mxu0 0.0
        %5887 = vmatprep.subr.mxu0 0.0
        %5888 = vmatpush1.msra.mxu0 0.0
        %5889 = vmatprep.subr.mxu0 0.0
        %5890 = vmatpush1.msra.mxu0 0.0
        %5891 = vmatprep.subr.mxu0 0.0
        %5892 = vmatpush1.msra.mxu0 0.0
        %5893 = vmatprep.subr.mxu0 0.0
        %5894 = vmatpush1.msra.mxu0 0.0
        %5895 = vmatprep.subr.mxu0 0.0
        %5896 = vmatpush1.msra.mxu0 0.0
        %5897 = vmatprep.subr.mxu0 0.0
        %5898 = vmatpush1.msra.mxu0 0.0
        %5899 = vmatprep.subr.mxu0 0.0
        %5900 = vmatpush1.msra.mxu0 0.0
        %5901 = vmatprep.subr.mxu0 0.0
        %5902 = vmatpush1.msra.mxu0 0.0
        %5903 = vmatprep.subr.mxu0 0.0
        %5904 = vmatpush1.msra.mxu0 0.0
        %5905 = vmatprep.subr.mxu0 0.0
        %5906 = vmatpush1.msra.mxu0 0.0
        %5907 = vmatprep.subr.mxu0 0.0
        %5908 = vmatpush1.msra.mxu0 0.0
        %5909 = vmatprep.subr.mxu0 0.0
        %5910 = vmatpush1.msra.mxu0 0.0
        %5911 = vmatprep.subr.mxu0 0.0
        %5912 = vmatpush1.msra.mxu0 0.0
        %5913 = vmatprep.subr.mxu0 0.0
        %5914 = vmatpush1.msra.mxu0 0.0
        %5915 = vmatprep.subr.mxu0 0.0
        %5916 = vmatpush1.msra.mxu0 0.0
        %5917 = vmatprep.subr.mxu0 0.0
        %5918 = vmatpush1.msra.mxu0 0.0
        %5919 = vmatprep.subr.mxu0 0.0
        %5920 = vmatpush1.msra.mxu0 0.0
        %5921 = vmatprep.subr.mxu0 0.0
        %5922 = vmatpush1.msra.mxu0 0.0
        %5923 = vmatprep.subr.mxu0 0.0
        %5924 = vmatpush1.msra.mxu0 0.0
        %5925 = vmatprep.subr.mxu0 0.0
        %5926 = vmatpush1.msra.mxu0 0.0
        %5927 = vmatprep.subr.mxu0 0.0
        %5928 = vmatpush1.msra.mxu0 0.0
        %5929 = vmatprep.subr.mxu0 0.0
        %5930 = vmatpush1.msra.mxu0 0.0
        %5931 = vmatprep.subr.mxu0 0.0
        %5932 = vmatpush1.msra.mxu0 0.0
        %5933 = vmatprep.mubr.f32.mxu0 0.0
        %5934 = vmatmul.mubr.f32.gmra.mrb[0].mxu0 %v5846
        %v5935 = vpop.f32.mrb[0].mxu0
        %v5936 = vadd.f32 %v5843, %v5935
        %v5937 = vpop.f32.mrb[0].mxu0
        %5938 = vmatprep.mubr.f32.mxu0 0.0
        %5939 = vmatmul.mubr.f32.gmra.mrb[0].mxu0 %v5849
        %v5940 = vpop.f32.mrb[0].mxu0
        %v5941 = vadd.f32 %v5843, %v5940
        %v5942 = vpop.f32.mrb[0].mxu0
        %5943 = vmatprep.mubr.f32.mxu0 0.0
        %5944 = vmatmul.mubr.f32.gmra.mrb[0].mxu0 %v5852
        %v5945 = vpop.f32.mrb[0].mxu0
        %v5946 = vadd.f32 %v5843, %v5945
        %v5947 = vpop.f32.mrb[0].mxu0
        %5948 = vmatprep.mubr.f32.mxu0 0.0
        %5949 = vmatmul.mubr.f32.gmra.mrb[0].mxu0 %v5855
        %v5950 = vpop.f32.mrb[0].mxu0
        %v5951 = vadd.f32 %v5843, %v5950
        %v5952 = vpop.f32.mrb[0].mxu0
        %5953 = vmatprep.mubr.f32.mxu0 0.0
        %5954 = vmatmul.mubr.f32.gmra.mrb[0].mxu0 %v5858
        %v5955 = vpop.f32.mrb[0].mxu0
        %v5956 = vadd.f32 %v5843, %v5955
        %v5957 = vpop.f32.mrb[0].mxu0
        %5958 = vmatprep.mubr.f32.mxu0 0.0
        %5959 = vmatmul.mubr.f32.gmra.mrb[0].mxu0 %v5861
        %v5960 = vpop.f32.mrb[0].mxu0
        %v5961 = vadd.f32 %v5843, %v5960
        %v5962 = vpop.f32.mrb[0].mxu0
        %5963 = vmatprep.mubr.f32.mxu0 0.0
        %5964 = vmatmul.mubr.f32.gmra.mrb[0].mxu0 %v5864
        %v5965 = vpop.f32.mrb[0].mxu0
        %v5966 = vadd.f32 %v5843, %v5965
        %v5967 = vpop.f32.mrb[0].mxu0
        %5968 = vmatprep.mubr.f32.mxu0 0.0
        %5969 = vmatmul.mubr.f32.gmra.mrb[0].mxu0 %v5867
        %v5970 = vpop.f32.mrb[0].mxu0
        %v5971 = vadd.f32 %v5843, %v5970
        %v5972 = vpop.f32.mrb[0].mxu0
        %5973 = vdwg.mxu0
        %5974 = vst.msk [vmem:[%s271] sm:$0xff] %vm293, %v5936
        %5975 = vst.msk [vmem:[%s271 + $0x8] sm:$0xff] %vm293, %v5941
        %5976 = vst.msk [vmem:[%s271 + $0x10] sm:$0xff] %vm293, %v5946
        %5977 = vst.msk [vmem:[%s271 + $0x18] sm:$0xff] %vm293, %v5951
        %5978 = vst.msk [vmem:[%s271 + $0x20] sm:$0xff] %vm293, %v5956
        %5979 = vst.msk [vmem:[%s271 + $0x28] sm:$0xff] %vm293, %v5961
        %5980 = vst.msk [vmem:[%s271 + $0x30] sm:$0xff] %vm293, %v5966
        %5981 = vst.msk [vmem:[%s271 + $0x38] sm:$0xff] %vm293, %v5971
        %s5982 = sand.u32 %s141, 1
        %s5983 = scalar_lea.sflag [#allocation4], %s5982
        %s5984 = sand.u32 %s141, 1
        %s5985 = smul.addr %s5984, 64
        %s5986 = scalar_lea.vmem [#allocation8], %s5985
        // Predicated region
        $region53: #{tpu_custom_call.1} parent=39 // pred_check
          %p5987 = pneg %p151
        $region54: #{tpu_custom_call.1} parent=39 // pred_check_branch
          %5989 = sbr.rel (%p5987) target = $region56
        $region55: #{tpu_custom_call.1} parent=39 // pred_region
          %s5990 = smul.u32 8, %s23
          %s5992 = ssub.s32 1024, 1024
          %5993 = vsyncadd %s5983, %s5992
          %s5994 = smul.addr %s5990, 128
          %s5995 = scalar_lea.hbm %s5, %s5994
          %s5996 = sshll.u32 %s5986, 4
          %s5997 = int_to_ptr.vmem [resolvable:$true] %s5996
          %6002 = dma.vmem_to_hbm [thread:$0]  %s5997, 1024, %s5995, %s5983, 128, 128, 8
        $region56: #{tpu_custom_call.1} parent=39 // pred_fallthru
          _
      $region40: #{tpu_custom_call.1} parent=5 // pred_fallthru
        _
      %p6003 = scmp.le.s32.totalorder 2, %s18
      // Predicated region
      $region57: #{tpu_custom_call.1} parent=5 // pred_check
        %p6004 = pneg %p6003
      $region58: #{tpu_custom_call.1} parent=5 // pred_check_branch
        %6006 = sbr.rel (%p6004) target = $region60
      $region59: #{tpu_custom_call.1} parent=5 // pred_region
        %s6007 = ssub.s32 %s18, 2
        // Predicated region
        $region61: #{tpu_custom_call.1} parent=59 // pred_check
          %p6008 = pneg %p157
        $region62: #{tpu_custom_call.1} parent=59 // pred_check_branch
          %6010 = sbr.rel (%p6008) target = $region64
        $region63: #{tpu_custom_call.1} parent=59 // pred_region
          %s6011 = sand.u32 %s142, 1
          %s6012 = scalar_lea.sflag [#allocation4], %s6011
          %s6013 = sand.u32 %s142, 1
          %s6014 = smul.addr %s6013, 64
          %s6015 = scalar_lea.vmem [#allocation8], %s6014
          %6016 = dma.done %s6012, 1024
        $region64: #{tpu_custom_call.1} parent=59 // pred_fallthru
          _
      $region60: #{tpu_custom_call.1} parent=5 // pred_fallthru
        _
    $region6: #{tpu_custom_call.1} parent=1 // loop_footer
      %s22 = sadd.s32 1, %s18
    $region7: #{tpu_custom_call.1} parent=1 // loop_footer_branch
      %17 = sbr.rel target = $region3
    $region8: #{tpu_custom_call.1} parent=1 // loop_exit
      _
    %6017 = vsyncpa [#allocation3], 1
    %s6018 = scalar_lea.sflag [#allocation3], 1
    %6019 = vsyncpa %s6018, 1
    %6020 = vsyncpa [#allocation6], 1
    %6021 = vsyncpa [#allocation4], 1
    %s6022 = scalar_lea.sflag [#allocation4], 1
    %6023 = vsyncpa %s6022, 1

</llo_original>
